<compile_context>
chip_gen: v6e
topology: v6e:2x2x1
jax: 0.10.0
libtpu: 0.0.40
codegen_flags: <defaults>
</compile_context>

<pallas_src>
import jax
import jax.numpy as jnp
from jax import lax
from jax.experimental import pallas as pl
from jax.experimental.pallas import tpu as pltpu


def _round_up(x, m):
    return ((x + m - 1) // m) * m


# ----------------------------------------------------------------------------
# Fused Pallas kernel: all LSTM layers + FC
# ----------------------------------------------------------------------------
def _fused_lstm_kernel(x_ref, wih_ref, whh_ref, b_ref, wfc_ref, bfc_ref,
                       out_ref, hN_ref, cN_ref,
                       hs_scr, gx_scr):
    """Shapes (all padded, P = padded feature/hidden width, multiple of 128):

      x_ref   : (T, Bp, P)   layer-0 inputs (zero-padded features)
      wih_ref : (L, P, 4P)   input->gate weights (gate blocks padded to P lanes)
      whh_ref : (L, P, 4P)   hidden->gate weights
      b_ref   : (L, 1, 4P)   combined bias (b_ih + b_hh)
      wfc_ref : (P, Cp)      final linear weights
      bfc_ref : (1, Cp)      final linear bias
      out_ref : (Bp, Cp)     logits
      hN_ref  : (L, Bp, P)   final hidden state per layer
      cN_ref  : (L, Bp, P)   final cell state per layer
      hs_scr  : (T, Bp, P)   VMEM: current layer's hidden sequence
      gx_scr  : (T, Bp, 4P)  VMEM: hoisted input projection for current layer
    """
    T, Bp, P = x_ref.shape
    L = wih_ref.shape[0]
    G = 4 * P

    last_h = None
    for l in range(L):                      # num_layers is small & static
        # ---- hoisted input projection: one big (T*Bp, P) @ (P, 4P) matmul ----
        in_slab = x_ref[...] if l == 0 else hs_scr[...]
        gx = jnp.dot(in_slab.reshape(T * Bp, P), wih_ref[l],
                     preferred_element_type=jnp.float32) + b_ref[l]
        gx_scr[...] = gx.reshape(T, Bp, G)

        whh_l = whh_ref.at[l]               # ref view; no load here
        last_layer = (l == L - 1)

        h = jnp.zeros((Bp, P), jnp.float32)
        c = jnp.zeros((Bp, P), jnp.float32)

        # Serial recurrence: only h @ W_hh^T + gates_x[t] per step.
        for t in range(T):                  # T is static -> fully unrolled
            gates = gx_scr[t] + jnp.dot(h, whh_l[...],
                                        preferred_element_type=jnp.float32)
            # Gate slices are exact (Bp, 128k) vreg-aligned views.
            i_g = jax.nn.sigmoid(gates[:, 0 * P:1 * P])
            f_g = jax.nn.sigmoid(gates[:, 1 * P:2 * P])
            g_g = jnp.tanh(gates[:, 2 * P:3 * P])
            o_g = jax.nn.sigmoid(gates[:, 3 * P:4 * P])
            c = f_g * c + i_g * g_g
            h = o_g * jnp.tanh(c)
            if not last_layer:
                hs_scr[t] = h               # only needed to feed the next layer

        hN_ref[l] = h                       # written once per layer
        cN_ref[l] = c
        last_h = h

    # Final linear layer on the last timestep's hidden state (lane-dense out).
    out_ref[...] = (jnp.dot(last_h, wfc_ref[...],
                            preferred_element_type=jnp.float32)
                    + bfc_ref[...])


@jax.jit
def _fused_forward(xp, wih_p, whh_p, b_p, wfc_p, bfc_p):
    T, Bp, P = xp.shape
    L = wih_p.shape[0]
    Cp = wfc_p.shape[1]
    G = 4 * P

    out_shape = (
        jax.ShapeDtypeStruct((Bp, Cp), jnp.float32),   # logits
        jax.ShapeDtypeStruct((L, Bp, P), jnp.float32), # h_N
        jax.ShapeDtypeStruct((L, Bp, P), jnp.float32), # c_N
    )
    return pl.pallas_call(
        _fused_lstm_kernel,
        out_shape=out_shape,
        scratch_shapes=[
            pltpu.VMEM((T, Bp, P), jnp.float32),   # hidden sequence slab
            pltpu.VMEM((T, Bp, G), jnp.float32),   # hoisted x-projection
        ],
        compiler_params=pltpu.CompilerParams(
            vmem_limit_bytes=64 * 1024 * 1024),
    )(xp, wih_p, whh_p, b_p, wfc_p, bfc_p)


# ----------------------------------------------------------------------------
# Weight padding helpers (gate order i, f, g, o preserved; padding is exact)
# ----------------------------------------------------------------------------
def _pad_gate_weights(w_t, P):
    """w_t: (in_real, 4H)  ->  (P, 4P), each gate block padded to P lanes."""
    in_real = w_t.shape[0]
    H = w_t.shape[1] // 4
    out = jnp.zeros((P, 4 * P), jnp.float32)
    for g in range(4):
        out = out.at[:in_real, g * P:g * P + H].set(w_t[:, g * H:(g + 1) * H])
    return out


def _pad_gate_bias(b, P):
    """b: (1, 4H) -> (1, 4P)."""
    H = b.shape[-1] // 4
    out = jnp.zeros((1, 4 * P), jnp.float32)
    for g in range(4):
        out = out.at[:, g * P:g * P + H].set(b[:, g * H:(g + 1) * H])
    return out


# ----------------------------------------------------------------------------
# Model wrapper (matches the PyTorch module's forward semantics)
# ----------------------------------------------------------------------------
class LSTMPallas:
    """JAX/Pallas equivalent of the PyTorch LSTM module's forward pass."""

    def __init__(self, input_size, hidden_size, num_layers, num_classes, a, key):
        self.input_size = input_size
        self.hidden_size = hidden_size
        self.num_layers = num_layers
        self.num_classes = num_classes

        H = hidden_size
        keys = jax.random.split(key, 2 * num_layers + 2)

        # Unpadded parameters (also used by the pure-JAX reference).
        # LSTM weights: uniform(-a, a); biases: 0 (matches the module's init).
        # Stored pre-transposed: (in_dim, 4H) / (H, 4H).
        self.w_ih_t, self.w_hh_t, self.bias = [], [], []
        for l in range(num_layers):
            din = input_size if l == 0 else H
            w_ih = jax.random.uniform(keys[2 * l], (4 * H, din),
                                      minval=-a, maxval=a, dtype=jnp.float32)
            w_hh = jax.random.uniform(keys[2 * l + 1], (4 * H, H),
                                      minval=-a, maxval=a, dtype=jnp.float32)
            self.w_ih_t.append(w_ih.T)
            self.w_hh_t.append(w_hh.T)
            self.bias.append(jnp.zeros((1, 4 * H), jnp.float32))  # b_ih + b_hh

        # fc: PyTorch-default-style uniform(-1/sqrt(H), 1/sqrt(H)).
        bound = 1.0 / (H ** 0.5)
        w_fc = jax.random.uniform(keys[-2], (num_classes, H),
                                  minval=-bound, maxval=bound, dtype=jnp.float32)
        b_fc = jax.random.uniform(keys[-1], (num_classes,),
                                  minval=-bound, maxval=bound, dtype=jnp.float32)
        self.w_fc_t = w_fc.T                       # (H, C)
        self.b_fc = b_fc.reshape(1, num_classes)   # (1, C)

        # Padded / stacked parameters for the fused kernel.
        # One shared padded width P for input features and hidden state so all
        # layers' weights stack into one (L, P, 4P) tensor.
        P = max(_round_up(input_size, 128), _round_up(hidden_size, 128))
        Cp = _round_up(num_classes, 128)
        self.P, self.Cp = P, Cp

        self.wih_p = jnp.stack([_pad_gate_weights(self.w_ih_t[l], P)
                                for l in range(num_layers)])       # (L, P, 4P)
        self.whh_p = jnp.stack([_pad_gate_weights(self.w_hh_t[l], P)
                                for l in range(num_layers)])       # (L, P, 4P)
        self.b_p = jnp.stack([_pad_gate_bias(self.bias[l], P)
                              for l in range(num_layers)])         # (L, 1, 4P)

        wfc_p = jnp.zeros((P, Cp), jnp.float32)
        self.wfc_p = wfc_p.at[:H, :num_classes].set(self.w_fc_t)   # (P, Cp)
        bfc_p = jnp.zeros((1, Cp), jnp.float32)
        self.bfc_p = bfc_p.at[:, :num_classes].set(self.b_fc)      # (1, Cp)

        # TODO(synk): for much larger H on v6e/v7x, cast the stacked weights to
        # bf16 (keep f32 accumulation) and add a parallel batch grid axis so
        # both v7x TensorCores are used; unnecessary at these shapes.

    def __call__(self, x):
        """x: (B, T, input_size) -> (out (B, C), (ht, ct) each (L, B, H))."""
        B, T, Din = x.shape
        Bp = _round_up(B, 8)                                  # f32 sublane count
        xt = jnp.transpose(x, (1, 0, 2)).astype(jnp.float32)  # (T, B, Din)
        xp = jnp.zeros((T, Bp, self.P), jnp.float32)
        xp = xp.at[:, :B, :Din].set(xt)                       # (T, Bp, P)

        out_p, hN_p, cN_p = _fused_forward(xp, self.wih_p, self.whh_p,
                                           self.b_p, self.wfc_p, self.bfc_p)

        out = out_p[:B, :self.num_classes]
        ht = hN_p[:, :B, :self.hidden_size]
        ct = cN_p[:, :B, :self.hidden_size]
        return out, (ht, ct)


# ----------------------------------------------------------------------------
# Pure-JAX reference (correctness check of the Pallas kernel)
# ----------------------------------------------------------------------------
def _reference_forward(model, x):
    xt = jnp.transpose(x, (1, 0, 2)).astype(jnp.float32)
    B = x.shape[0]
    H = model.hidden_size
    cur = xt
    h_finals, c_finals = [], []
    for l in range(model.num_layers):
        w_ih_t, w_hh_t, b = model.w_ih_t[l], model.w_hh_t[l], model.bias[l]

        def step(carry, x_t):
            h, c = carry
            gates = x_t @ w_ih_t + h @ w_hh_t + b
            i_g = jax.nn.sigmoid(gates[:, 0 * H:1 * H])
            f_g = jax.nn.sigmoid(gates[:, 1 * H:2 * H])
            g_g = jnp.tanh(gates[:, 2 * H:3 * H])
            o_g = jax.nn.sigmoid(gates[:, 3 * H:4 * H])
            c_new = f_g * c + i_g * g_g
            h_new = o_g * jnp.tanh(c_new)
            return (h_new, c_new), h_new

        init = (jnp.zeros((B, H), jnp.float32), jnp.zeros((B, H), jnp.float32))
        (h_n, c_n), hs = jax.lax.scan(step, init, cur)
        cur = hs
        h_finals.append(h_n)
        c_finals.append(c_n)
    out = cur[-1] @ model.w_fc_t + model.b_fc
    return out, (jnp.stack(h_finals), jnp.stack(c_finals))


# ----------------------------------------------------------------------------
if __name__ == "__main__":
    # Small shapes consistent with the module's forward (sequential-MNIST style).
    batch, seq_len = 2, 8
    input_size, hidden_size, num_layers, num_classes = 16, 32, 2, 10
    a = 0.1

    key = jax.random.PRNGKey(0)
    k_param, k_x = jax.random.split(key)

    model = LSTMPallas(input_size, hidden_size, num_layers, num_classes, a, k_param)
    x = jax.random.normal(k_x, (batch, seq_len, input_size), dtype=jnp.float32)

    out, (ht, ct) = model(x)
    out = jax.block_until_ready(out)
    ht = jax.block_until_ready(ht)
    ct = jax.block_until_ready(ct)

    # Sanity-check against a pure-JAX reference.
    ref_out, (ref_ht, ref_ct) = _reference_forward(model, x)
    assert out.shape == (batch, num_classes)
    assert ht.shape == (num_layers, batch, hidden_size)
    assert ct.shape == (num_layers, batch, hidden_size)
    assert jnp.allclose(out, ref_out, atol=2e-5), "fc output mismatch"
    assert jnp.allclose(ht, ref_ht, atol=2e-5), "h_n mismatch"
    assert jnp.allclose(ct, ref_ct, atol=2e-5), "c_n mismatch"

    print("KERNEL_OK")
</pallas_src>

<mosaic_0001>
module attributes {stable_mosaic.version = 11 : i64} {
  func.func @_fused_lstm_kernel(%arg0: memref<8x8x128xf32, #tpu.memory_space<vmem>>, %arg1: memref<2x128x512xf32, #tpu.memory_space<vmem>>, %arg2: memref<2x128x512xf32, #tpu.memory_space<vmem>>, %arg3: memref<2x1x512xf32, #tpu.memory_space<vmem>>, %arg4: memref<128x128xf32, #tpu.memory_space<vmem>>, %arg5: memref<1x128xf32, #tpu.memory_space<vmem>>, %arg6: memref<8x128xf32, #tpu.memory_space<vmem>>, %arg7: memref<2x8x128xf32, #tpu.memory_space<vmem>>, %arg8: memref<2x8x128xf32, #tpu.memory_space<vmem>>, %arg9: memref<8x8x128xf32, #tpu.memory_space<vmem>>, %arg10: memref<8x8x512xf32, #tpu.memory_space<vmem>>) attributes {dimension_semantics = [], scalar_prefetch = 0 : i64, scratch_operands = 2 : i64, tpu.core_type = #tpu.core_type<tc>} {
    %c0 = arith.constant 0 : index
    %c0_0 = arith.constant 0 : index
    %c0_1 = arith.constant 0 : index
    %0 = vector.load %arg0[%c0, %c0_0, %c0_1] : memref<8x8x128xf32, #tpu.memory_space<vmem>>, vector<8x8x128xf32>
    %1 = vector.shape_cast %0 : vector<8x8x128xf32> to vector<64x128xf32>
    %c0_2 = arith.constant 0 : index
    %c0_3 = arith.constant 0 : index
    %c0_4 = arith.constant 0 : index
    %2 = vector.load %arg1[%c0_2, %c0_3, %c0_4] : memref<2x128x512xf32, #tpu.memory_space<vmem>>, vector<1x128x512xf32>
    %3 = vector.shape_cast %2 : vector<1x128x512xf32> to vector<128x512xf32>
    %cst = arith.constant dense<0.000000e+00> : vector<64x512xf32>
    %4 = tpu.matmul %1, %3, %cst {dimension_numbers = #tpu.dot_dimension_numbers<[1], [0], [0], [1], [0, 0, 1, 1], [], []>} : vector<64x128xf32>, vector<128x512xf32>, vector<64x512xf32> -> vector<64x512xf32>
    %c0_5 = arith.constant 0 : index
    %c0_6 = arith.constant 0 : index
    %c0_7 = arith.constant 0 : index
    %5 = vector.load %arg3[%c0_5, %c0_6, %c0_7] : memref<2x1x512xf32, #tpu.memory_space<vmem>>, vector<1x1x512xf32>
    %6 = vector.shape_cast %5 : vector<1x1x512xf32> to vector<1x512xf32>
    %7 = vector.broadcast %6 : vector<1x512xf32> to vector<64x512xf32>
    %8 = arith.addf %4, %7 : vector<64x512xf32>
    %9 = vector.shape_cast %8 : vector<64x512xf32> to vector<8x8x512xf32>
    %c0_8 = arith.constant 0 : index
    %c0_9 = arith.constant 0 : index
    %c0_10 = arith.constant 0 : index
    %10 = vector.load %arg10[%c0_8, %c0_9, %c0_10] : memref<8x8x512xf32, #tpu.memory_space<vmem>>, vector<8x8x512xf32>
    tpu.vector_store %arg10[%c0_8, %c0_9, %c0_10], %9 {strides = array<i32>} : memref<8x8x512xf32, #tpu.memory_space<vmem>>, vector<8x8x512xf32>,
    %cst_11 = arith.constant 0.000000e+00 : f32
    %11 = vector.broadcast %cst_11 : f32 to vector<8x128xf32>
    %cst_12 = arith.constant 0.000000e+00 : f32
    %12 = vector.broadcast %cst_12 : f32 to vector<8x128xf32>
    %c0_13 = arith.constant 0 : index
    %c0_14 = arith.constant 0 : index
    %c0_15 = arith.constant 0 : index
    %13 = vector.load %arg10[%c0_13, %c0_14, %c0_15] : memref<8x8x512xf32, #tpu.memory_space<vmem>>, vector<1x8x512xf32>
    %14 = vector.shape_cast %13 : vector<1x8x512xf32> to vector<8x512xf32>
    %c0_16 = arith.constant 0 : index
    %c0_17 = arith.constant 0 : index
    %c0_18 = arith.constant 0 : index
    %15 = vector.load %arg2[%c0_16, %c0_17, %c0_18] : memref<2x128x512xf32, #tpu.memory_space<vmem>>, vector<1x128x512xf32>
    %16 = vector.shape_cast %15 : vector<1x128x512xf32> to vector<128x512xf32>
    %cst_19 = arith.constant dense<0.000000e+00> : vector<8x512xf32>
    %17 = tpu.matmul %11, %16, %cst_19 {dimension_numbers = #tpu.dot_dimension_numbers<[1], [0], [0], [1], [0, 0, 1, 1], [], []>} : vector<8x128xf32>, vector<128x512xf32>, vector<8x512xf32> -> vector<8x512xf32>
    %18 = arith.addf %14, %17 : vector<8x512xf32>
    %19 = vector.extract_strided_slice %18 {offsets = [0, 0], sizes = [8, 128], strides = [1, 1]} : vector<8x512xf32> to vector<8x128xf32>
    %20 = arith.negf %19 : vector<8x128xf32>
    %21 = math.exp %20 : vector<8x128xf32>
    %cst_20 = arith.constant 1.000000e+00 : f32
    %22 = vector.broadcast %cst_20 : f32 to vector<8x128xf32>
    %23 = arith.addf %22, %21 : vector<8x128xf32>
    %24 = arith.divf %22, %23 : vector<8x128xf32>
    %25 = vector.extract_strided_slice %18 {offsets = [0, 128], sizes = [8, 128], strides = [1, 1]} : vector<8x512xf32> to vector<8x128xf32>
    %26 = arith.negf %25 : vector<8x128xf32>
    %27 = math.exp %26 : vector<8x128xf32>
    %cst_21 = arith.constant 1.000000e+00 : f32
    %28 = vector.broadcast %cst_21 : f32 to vector<8x128xf32>
    %29 = arith.addf %28, %27 : vector<8x128xf32>
    %30 = arith.divf %28, %29 : vector<8x128xf32>
    %31 = vector.extract_strided_slice %18 {offsets = [0, 256], sizes = [8, 128], strides = [1, 1]} : vector<8x512xf32> to vector<8x128xf32>
    %32 = math.tanh %31 : vector<8x128xf32>
    %33 = vector.extract_strided_slice %18 {offsets = [0, 384], sizes = [8, 128], strides = [1, 1]} : vector<8x512xf32> to vector<8x128xf32>
    %34 = arith.negf %33 : vector<8x128xf32>
    %35 = math.exp %34 : vector<8x128xf32>
    %cst_22 = arith.constant 1.000000e+00 : f32
    %36 = vector.broadcast %cst_22 : f32 to vector<8x128xf32>
    %37 = arith.addf %36, %35 : vector<8x128xf32>
    %38 = arith.divf %36, %37 : vector<8x128xf32>
    %39 = arith.mulf %30, %12 : vector<8x128xf32>
    %40 = arith.mulf %24, %32 : vector<8x128xf32>
    %41 = arith.addf %39, %40 : vector<8x128xf32>
    %42 = math.tanh %41 : vector<8x128xf32>
    %43 = arith.mulf %38, %42 : vector<8x128xf32>
    %c0_23 = arith.constant 0 : index
    %c0_24 = arith.constant 0 : index
    %c0_25 = arith.constant 0 : index
    %44 = vector.load %arg9[%c0_23, %c0_24, %c0_25] : memref<8x8x128xf32, #tpu.memory_space<vmem>>, vector<1x8x128xf32>
    %45 = vector.shape_cast %44 : vector<1x8x128xf32> to vector<8x128xf32>
    %46 = vector.shape_cast %43 : vector<8x128xf32> to vector<1x8x128xf32>
    tpu.vector_store %arg9[%c0_23, %c0_24, %c0_25], %46 {strides = array<i32>} : memref<8x8x128xf32, #tpu.memory_space<vmem>>, vector<1x8x128xf32>,
    %c1 = arith.constant 1 : index
    %c0_26 = arith.constant 0 : index
    %c0_27 = arith.constant 0 : index
    %47 = vector.load %arg10[%c1, %c0_26, %c0_27] : memref<8x8x512xf32, #tpu.memory_space<vmem>>, vector<1x8x512xf32>
    %48 = vector.shape_cast %47 : vector<1x8x512xf32> to vector<8x512xf32>
    %c0_28 = arith.constant 0 : index
    %c0_29 = arith.constant 0 : index
    %c0_30 = arith.constant 0 : index
    %49 = vector.load %arg2[%c0_28, %c0_29, %c0_30] : memref<2x128x512xf32, #tpu.memory_space<vmem>>, vector<1x128x512xf32>
    %50 = vector.shape_cast %49 : vector<1x128x512xf32> to vector<128x512xf32>
    %cst_31 = arith.constant dense<0.000000e+00> : vector<8x512xf32>
    %51 = tpu.matmul %43, %50, %cst_31 {dimension_numbers = #tpu.dot_dimension_numbers<[1], [0], [0], [1], [0, 0, 1, 1], [], []>} : vector<8x128xf32>, vector<128x512xf32>, vector<8x512xf32> -> vector<8x512xf32>
    %52 = arith.addf %48, %51 : vector<8x512xf32>
    %53 = vector.extract_strided_slice %52 {offsets = [0, 0], sizes = [8, 128], strides = [1, 1]} : vector<8x512xf32> to vector<8x128xf32>
    %54 = arith.negf %53 : vector<8x128xf32>
    %55 = math.exp %54 : vector<8x128xf32>
    %cst_32 = arith.constant 1.000000e+00 : f32
    %56 = vector.broadcast %cst_32 : f32 to vector<8x128xf32>
    %57 = arith.addf %56, %55 : vector<8x128xf32>
    %58 = arith.divf %56, %57 : vector<8x128xf32>
    %59 = vector.extract_strided_slice %52 {offsets = [0, 128], sizes = [8, 128], strides = [1, 1]} : vector<8x512xf32> to vector<8x128xf32>
    %60 = arith.negf %59 : vector<8x128xf32>
    %61 = math.exp %60 : vector<8x128xf32>
    %cst_33 = arith.constant 1.000000e+00 : f32
    %62 = vector.broadcast %cst_33 : f32 to vector<8x128xf32>
    %63 = arith.addf %62, %61 : vector<8x128xf32>
    %64 = arith.divf %62, %63 : vector<8x128xf32>
    %65 = vector.extract_strided_slice %52 {offsets = [0, 256], sizes = [8, 128], strides = [1, 1]} : vector<8x512xf32> to vector<8x128xf32>
    %66 = math.tanh %65 : vector<8x128xf32>
    %67 = vector.extract_strided_slice %52 {offsets = [0, 384], sizes = [8, 128], strides = [1, 1]} : vector<8x512xf32> to vector<8x128xf32>
    %68 = arith.negf %67 : vector<8x128xf32>
    %69 = math.exp %68 : vector<8x128xf32>
    %cst_34 = arith.constant 1.000000e+00 : f32
    %70 = vector.broadcast %cst_34 : f32 to vector<8x128xf32>
    %71 = arith.addf %70, %69 : vector<8x128xf32>
    %72 = arith.divf %70, %71 : vector<8x128xf32>
    %73 = arith.mulf %64, %41 : vector<8x128xf32>
    %74 = arith.mulf %58, %66 : vector<8x128xf32>
    %75 = arith.addf %73, %74 : vector<8x128xf32>
    %76 = math.tanh %75 : vector<8x128xf32>
    %77 = arith.mulf %72, %76 : vector<8x128xf32>
    %c1_35 = arith.constant 1 : index
    %c0_36 = arith.constant 0 : index
    %c0_37 = arith.constant 0 : index
    %78 = vector.load %arg9[%c1_35, %c0_36, %c0_37] : memref<8x8x128xf32, #tpu.memory_space<vmem>>, vector<1x8x128xf32>
    %79 = vector.shape_cast %78 : vector<1x8x128xf32> to vector<8x128xf32>
    %80 = vector.shape_cast %77 : vector<8x128xf32> to vector<1x8x128xf32>
    tpu.vector_store %arg9[%c1_35, %c0_36, %c0_37], %80 {strides = array<i32>} : memref<8x8x128xf32, #tpu.memory_space<vmem>>, vector<1x8x128xf32>,
    %c2 = arith.constant 2 : index
    %c0_38 = arith.constant 0 : index
    %c0_39 = arith.constant 0 : index
    %81 = vector.load %arg10[%c2, %c0_38, %c0_39] : memref<8x8x512xf32, #tpu.memory_space<vmem>>, vector<1x8x512xf32>
    %82 = vector.shape_cast %81 : vector<1x8x512xf32> to vector<8x512xf32>
    %c0_40 = arith.constant 0 : index
    %c0_41 = arith.constant 0 : index
    %c0_42 = arith.constant 0 : index
    %83 = vector.load %arg2[%c0_40, %c0_41, %c0_42] : memref<2x128x512xf32, #tpu.memory_space<vmem>>, vector<1x128x512xf32>
    %84 = vector.shape_cast %83 : vector<1x128x512xf32> to vector<128x512xf32>
    %cst_43 = arith.constant dense<0.000000e+00> : vector<8x512xf32>
    %85 = tpu.matmul %77, %84, %cst_43 {dimension_numbers = #tpu.dot_dimension_numbers<[1], [0], [0], [1], [0, 0, 1, 1], [], []>} : vector<8x128xf32>, vector<128x512xf32>, vector<8x512xf32> -> vector<8x512xf32>
    %86 = arith.addf %82, %85 : vector<8x512xf32>
    %87 = vector.extract_strided_slice %86 {offsets = [0, 0], sizes = [8, 128], strides = [1, 1]} : vector<8x512xf32> to vector<8x128xf32>
    %88 = arith.negf %87 : vector<8x128xf32>
    %89 = math.exp %88 : vector<8x128xf32>
    %cst_44 = arith.constant 1.000000e+00 : f32
    %90 = vector.broadcast %cst_44 : f32 to vector<8x128xf32>
    %91 = arith.addf %90, %89 : vector<8x128xf32>
    %92 = arith.divf %90, %91 : vector<8x128xf32>
    %93 = vector.extract_strided_slice %86 {offsets = [0, 128], sizes = [8, 128], strides = [1, 1]} : vector<8x512xf32> to vector<8x128xf32>
    %94 = arith.negf %93 : vector<8x128xf32>
    %95 = math.exp %94 : vector<8x128xf32>
    %cst_45 = arith.constant 1.000000e+00 : f32
    %96 = vector.broadcast %cst_45 : f32 to vector<8x128xf32>
    %97 = arith.addf %96, %95 : vector<8x128xf32>
    %98 = arith.divf %96, %97 : vector<8x128xf32>
    %99 = vector.extract_strided_slice %86 {offsets = [0, 256], sizes = [8, 128], strides = [1, 1]} : vector<8x512xf32> to vector<8x128xf32>
    %100 = math.tanh %99 : vector<8x128xf32>
    %101 = vector.extract_strided_slice %86 {offsets = [0, 384], sizes = [8, 128], strides = [1, 1]} : vector<8x512xf32> to vector<8x128xf32>
    %102 = arith.negf %101 : vector<8x128xf32>
    %103 = math.exp %102 : vector<8x128xf32>
    %cst_46 = arith.constant 1.000000e+00 : f32
    %104 = vector.broadcast %cst_46 : f32 to vector<8x128xf32>
    %105 = arith.addf %104, %103 : vector<8x128xf32>
    %106 = arith.divf %104, %105 : vector<8x128xf32>
    %107 = arith.mulf %98, %75 : vector<8x128xf32>
    %108 = arith.mulf %92, %100 : vector<8x128xf32>
    %109 = arith.addf %107, %108 : vector<8x128xf32>
    %110 = math.tanh %109 : vector<8x128xf32>
    %111 = arith.mulf %106, %110 : vector<8x128xf32>
    %c2_47 = arith.constant 2 : index
    %c0_48 = arith.constant 0 : index
    %c0_49 = arith.constant 0 : index
    %112 = vector.load %arg9[%c2_47, %c0_48, %c0_49] : memref<8x8x128xf32, #tpu.memory_space<vmem>>, vector<1x8x128xf32>
    %113 = vector.shape_cast %112 : vector<1x8x128xf32> to vector<8x128xf32>
    %114 = vector.shape_cast %111 : vector<8x128xf32> to vector<1x8x128xf32>
    tpu.vector_store %arg9[%c2_47, %c0_48, %c0_49], %114 {strides = array<i32>} : memref<8x8x128xf32, #tpu.memory_space<vmem>>, vector<1x8x128xf32>,
    %c3 = arith.constant 3 : index
    %c0_50 = arith.constant 0 : index
    %c0_51 = arith.constant 0 : index
    %115 = vector.load %arg10[%c3, %c0_50, %c0_51] : memref<8x8x512xf32, #tpu.memory_space<vmem>>, vector<1x8x512xf32>
    %116 = vector.shape_cast %115 : vector<1x8x512xf32> to vector<8x512xf32>
    %c0_52 = arith.constant 0 : index
    %c0_53 = arith.constant 0 : index
    %c0_54 = arith.constant 0 : index
    %117 = vector.load %arg2[%c0_52, %c0_53, %c0_54] : memref<2x128x512xf32, #tpu.memory_space<vmem>>, vector<1x128x512xf32>
    %118 = vector.shape_cast %117 : vector<1x128x512xf32> to vector<128x512xf32>
    %cst_55 = arith.constant dense<0.000000e+00> : vector<8x512xf32>
    %119 = tpu.matmul %111, %118, %cst_55 {dimension_numbers = #tpu.dot_dimension_numbers<[1], [0], [0], [1], [0, 0, 1, 1], [], []>} : vector<8x128xf32>, vector<128x512xf32>, vector<8x512xf32> -> vector<8x512xf32>
    %120 = arith.addf %116, %119 : vector<8x512xf32>
    %121 = vector.extract_strided_slice %120 {offsets = [0, 0], sizes = [8, 128], strides = [1, 1]} : vector<8x512xf32> to vector<8x128xf32>
    %122 = arith.negf %121 : vector<8x128xf32>
    %123 = math.exp %122 : vector<8x128xf32>
    %cst_56 = arith.constant 1.000000e+00 : f32
    %124 = vector.broadcast %cst_56 : f32 to vector<8x128xf32>
    %125 = arith.addf %124, %123 : vector<8x128xf32>
    %126 = arith.divf %124, %125 : vector<8x128xf32>
    %127 = vector.extract_strided_slice %120 {offsets = [0, 128], sizes = [8, 128], strides = [1, 1]} : vector<8x512xf32> to vector<8x128xf32>
    %128 = arith.negf %127 : vector<8x128xf32>
    %129 = math.exp %128 : vector<8x128xf32>
    %cst_57 = arith.constant 1.000000e+00 : f32
    %130 = vector.broadcast %cst_57 : f32 to vector<8x128xf32>
    %131 = arith.addf %130, %129 : vector<8x128xf32>
    %132 = arith.divf %130, %131 : vector<8x128xf32>
    %133 = vector.extract_strided_slice %120 {offsets = [0, 256], sizes = [8, 128], strides = [1, 1]} : vector<8x512xf32> to vector<8x128xf32>
    %134 = math.tanh %133 : vector<8x128xf32>
    %135 = vector.extract_strided_slice %120 {offsets = [0, 384], sizes = [8, 128], strides = [1, 1]} : vector<8x512xf32> to vector<8x128xf32>
    %136 = arith.negf %135 : vector<8x128xf32>
    %137 = math.exp %136 : vector<8x128xf32>
    %cst_58 = arith.constant 1.000000e+00 : f32
    %138 = vector.broadcast %cst_58 : f32 to vector<8x128xf32>
    %139 = arith.addf %138, %137 : vector<8x128xf32>
    %140 = arith.divf %138, %139 : vector<8x128xf32>
    %141 = arith.mulf %132, %109 : vector<8x128xf32>
    %142 = arith.mulf %126, %134 : vector<8x128xf32>
    %143 = arith.addf %141, %142 : vector<8x128xf32>
    %144 = math.tanh %143 : vector<8x128xf32>
    %145 = arith.mulf %140, %144 : vector<8x128xf32>
    %c3_59 = arith.constant 3 : index
    %c0_60 = arith.constant 0 : index
    %c0_61 = arith.constant 0 : index
    %146 = vector.load %arg9[%c3_59, %c0_60, %c0_61] : memref<8x8x128xf32, #tpu.memory_space<vmem>>, vector<1x8x128xf32>
    %147 = vector.shape_cast %146 : vector<1x8x128xf32> to vector<8x128xf32>
    %148 = vector.shape_cast %145 : vector<8x128xf32> to vector<1x8x128xf32>
    tpu.vector_store %arg9[%c3_59, %c0_60, %c0_61], %148 {strides = array<i32>} : memref<8x8x128xf32, #tpu.memory_space<vmem>>, vector<1x8x128xf32>,
    %c4 = arith.constant 4 : index
    %c0_62 = arith.constant 0 : index
    %c0_63 = arith.constant 0 : index
    %149 = vector.load %arg10[%c4, %c0_62, %c0_63] : memref<8x8x512xf32, #tpu.memory_space<vmem>>, vector<1x8x512xf32>
    %150 = vector.shape_cast %149 : vector<1x8x512xf32> to vector<8x512xf32>
    %c0_64 = arith.constant 0 : index
    %c0_65 = arith.constant 0 : index
    %c0_66 = arith.constant 0 : index
    %151 = vector.load %arg2[%c0_64, %c0_65, %c0_66] : memref<2x128x512xf32, #tpu.memory_space<vmem>>, vector<1x128x512xf32>
    %152 = vector.shape_cast %151 : vector<1x128x512xf32> to vector<128x512xf32>
    %cst_67 = arith.constant dense<0.000000e+00> : vector<8x512xf32>
    %153 = tpu.matmul %145, %152, %cst_67 {dimension_numbers = #tpu.dot_dimension_numbers<[1], [0], [0], [1], [0, 0, 1, 1], [], []>} : vector<8x128xf32>, vector<128x512xf32>, vector<8x512xf32> -> vector<8x512xf32>
    %154 = arith.addf %150, %153 : vector<8x512xf32>
    %155 = vector.extract_strided_slice %154 {offsets = [0, 0], sizes = [8, 128], strides = [1, 1]} : vector<8x512xf32> to vector<8x128xf32>
    %156 = arith.negf %155 : vector<8x128xf32>
    %157 = math.exp %156 : vector<8x128xf32>
    %cst_68 = arith.constant 1.000000e+00 : f32
    %158 = vector.broadcast %cst_68 : f32 to vector<8x128xf32>
    %159 = arith.addf %158, %157 : vector<8x128xf32>
    %160 = arith.divf %158, %159 : vector<8x128xf32>
    %161 = vector.extract_strided_slice %154 {offsets = [0, 128], sizes = [8, 128], strides = [1, 1]} : vector<8x512xf32> to vector<8x128xf32>
    %162 = arith.negf %161 : vector<8x128xf32>
    %163 = math.exp %162 : vector<8x128xf32>
    %cst_69 = arith.constant 1.000000e+00 : f32
    %164 = vector.broadcast %cst_69 : f32 to vector<8x128xf32>
    %165 = arith.addf %164, %163 : vector<8x128xf32>
    %166 = arith.divf %164, %165 : vector<8x128xf32>
    %167 = vector.extract_strided_slice %154 {offsets = [0, 256], sizes = [8, 128], strides = [1, 1]} : vector<8x512xf32> to vector<8x128xf32>
    %168 = math.tanh %167 : vector<8x128xf32>
    %169 = vector.extract_strided_slice %154 {offsets = [0, 384], sizes = [8, 128], strides = [1, 1]} : vector<8x512xf32> to vector<8x128xf32>
    %170 = arith.negf %169 : vector<8x128xf32>
    %171 = math.exp %170 : vector<8x128xf32>
    %cst_70 = arith.constant 1.000000e+00 : f32
    %172 = vector.broadcast %cst_70 : f32 to vector<8x128xf32>
    %173 = arith.addf %172, %171 : vector<8x128xf32>
    %174 = arith.divf %172, %173 : vector<8x128xf32>
    %175 = arith.mulf %166, %143 : vector<8x128xf32>
    %176 = arith.mulf %160, %168 : vector<8x128xf32>
    %177 = arith.addf %175, %176 : vector<8x128xf32>
    %178 = math.tanh %177 : vector<8x128xf32>
    %179 = arith.mulf %174, %178 : vector<8x128xf32>
    %c4_71 = arith.constant 4 : index
    %c0_72 = arith.constant 0 : index
    %c0_73 = arith.constant 0 : index
    %180 = vector.load %arg9[%c4_71, %c0_72, %c0_73] : memref<8x8x128xf32, #tpu.memory_space<vmem>>, vector<1x8x128xf32>
    %181 = vector.shape_cast %180 : vector<1x8x128xf32> to vector<8x128xf32>
    %182 = vector.shape_cast %179 : vector<8x128xf32> to vector<1x8x128xf32>
    tpu.vector_store %arg9[%c4_71, %c0_72, %c0_73], %182 {strides = array<i32>} : memref<8x8x128xf32, #tpu.memory_space<vmem>>, vector<1x8x128xf32>,
    %c5 = arith.constant 5 : index
    %c0_74 = arith.constant 0 : index
    %c0_75 = arith.constant 0 : index
    %183 = vector.load %arg10[%c5, %c0_74, %c0_75] : memref<8x8x512xf32, #tpu.memory_space<vmem>>, vector<1x8x512xf32>
    %184 = vector.shape_cast %183 : vector<1x8x512xf32> to vector<8x512xf32>
    %c0_76 = arith.constant 0 : index
    %c0_77 = arith.constant 0 : index
    %c0_78 = arith.constant 0 : index
    %185 = vector.load %arg2[%c0_76, %c0_77, %c0_78] : memref<2x128x512xf32, #tpu.memory_space<vmem>>, vector<1x128x512xf32>
    %186 = vector.shape_cast %185 : vector<1x128x512xf32> to vector<128x512xf32>
    %cst_79 = arith.constant dense<0.000000e+00> : vector<8x512xf32>
    %187 = tpu.matmul %179, %186, %cst_79 {dimension_numbers = #tpu.dot_dimension_numbers<[1], [0], [0], [1], [0, 0, 1, 1], [], []>} : vector<8x128xf32>, vector<128x512xf32>, vector<8x512xf32> -> vector<8x512xf32>
    %188 = arith.addf %184, %187 : vector<8x512xf32>
    %189 = vector.extract_strided_slice %188 {offsets = [0, 0], sizes = [8, 128], strides = [1, 1]} : vector<8x512xf32> to vector<8x128xf32>
    %190 = arith.negf %189 : vector<8x128xf32>
    %191 = math.exp %190 : vector<8x128xf32>
    %cst_80 = arith.constant 1.000000e+00 : f32
    %192 = vector.broadcast %cst_80 : f32 to vector<8x128xf32>
    %193 = arith.addf %192, %191 : vector<8x128xf32>
    %194 = arith.divf %192, %193 : vector<8x128xf32>
    %195 = vector.extract_strided_slice %188 {offsets = [0, 128], sizes = [8, 128], strides = [1, 1]} : vector<8x512xf32> to vector<8x128xf32>
    %196 = arith.negf %195 : vector<8x128xf32>
    %197 = math.exp %196 : vector<8x128xf32>
    %cst_81 = arith.constant 1.000000e+00 : f32
    %198 = vector.broadcast %cst_81 : f32 to vector<8x128xf32>
    %199 = arith.addf %198, %197 : vector<8x128xf32>
    %200 = arith.divf %198, %199 : vector<8x128xf32>
    %201 = vector.extract_strided_slice %188 {offsets = [0, 256], sizes = [8, 128], strides = [1, 1]} : vector<8x512xf32> to vector<8x128xf32>
    %202 = math.tanh %201 : vector<8x128xf32>
    %203 = vector.extract_strided_slice %188 {offsets = [0, 384], sizes = [8, 128], strides = [1, 1]} : vector<8x512xf32> to vector<8x128xf32>
    %204 = arith.negf %203 : vector<8x128xf32>
    %205 = math.exp %204 : vector<8x128xf32>
    %cst_82 = arith.constant 1.000000e+00 : f32
    %206 = vector.broadcast %cst_82 : f32 to vector<8x128xf32>
    %207 = arith.addf %206, %205 : vector<8x128xf32>
    %208 = arith.divf %206, %207 : vector<8x128xf32>
    %209 = arith.mulf %200, %177 : vector<8x128xf32>
    %210 = arith.mulf %194, %202 : vector<8x128xf32>
    %211 = arith.addf %209, %210 : vector<8x128xf32>
    %212 = math.tanh %211 : vector<8x128xf32>
    %213 = arith.mulf %208, %212 : vector<8x128xf32>
    %c5_83 = arith.constant 5 : index
    %c0_84 = arith.constant 0 : index
    %c0_85 = arith.constant 0 : index
    %214 = vector.load %arg9[%c5_83, %c0_84, %c0_85] : memref<8x8x128xf32, #tpu.memory_space<vmem>>, vector<1x8x128xf32>
    %215 = vector.shape_cast %214 : vector<1x8x128xf32> to vector<8x128xf32>
    %216 = vector.shape_cast %213 : vector<8x128xf32> to vector<1x8x128xf32>
    tpu.vector_store %arg9[%c5_83, %c0_84, %c0_85], %216 {strides = array<i32>} : memref<8x8x128xf32, #tpu.memory_space<vmem>>, vector<1x8x128xf32>,
    %c6 = arith.constant 6 : index
    %c0_86 = arith.constant 0 : index
    %c0_87 = arith.constant 0 : index
    %217 = vector.load %arg10[%c6, %c0_86, %c0_87] : memref<8x8x512xf32, #tpu.memory_space<vmem>>, vector<1x8x512xf32>
    %218 = vector.shape_cast %217 : vector<1x8x512xf32> to vector<8x512xf32>
    %c0_88 = arith.constant 0 : index
    %c0_89 = arith.constant 0 : index
    %c0_90 = arith.constant 0 : index
    %219 = vector.load %arg2[%c0_88, %c0_89, %c0_90] : memref<2x128x512xf32, #tpu.memory_space<vmem>>, vector<1x128x512xf32>
    %220 = vector.shape_cast %219 : vector<1x128x512xf32> to vector<128x512xf32>
    %cst_91 = arith.constant dense<0.000000e+00> : vector<8x512xf32>
    %221 = tpu.matmul %213, %220, %cst_91 {dimension_numbers = #tpu.dot_dimension_numbers<[1], [0], [0], [1], [0, 0, 1, 1], [], []>} : vector<8x128xf32>, vector<128x512xf32>, vector<8x512xf32> -> vector<8x512xf32>
    %222 = arith.addf %218, %221 : vector<8x512xf32>
    %223 = vector.extract_strided_slice %222 {offsets = [0, 0], sizes = [8, 128], strides = [1, 1]} : vector<8x512xf32> to vector<8x128xf32>
    %224 = arith.negf %223 : vector<8x128xf32>
    %225 = math.exp %224 : vector<8x128xf32>
    %cst_92 = arith.constant 1.000000e+00 : f32
    %226 = vector.broadcast %cst_92 : f32 to vector<8x128xf32>
    %227 = arith.addf %226, %225 : vector<8x128xf32>
    %228 = arith.divf %226, %227 : vector<8x128xf32>
    %229 = vector.extract_strided_slice %222 {offsets = [0, 128], sizes = [8, 128], strides = [1, 1]} : vector<8x512xf32> to vector<8x128xf32>
    %230 = arith.negf %229 : vector<8x128xf32>
    %231 = math.exp %230 : vector<8x128xf32>
    %cst_93 = arith.constant 1.000000e+00 : f32
    %232 = vector.broadcast %cst_93 : f32 to vector<8x128xf32>
    %233 = arith.addf %232, %231 : vector<8x128xf32>
    %234 = arith.divf %232, %233 : vector<8x128xf32>
    %235 = vector.extract_strided_slice %222 {offsets = [0, 256], sizes = [8, 128], strides = [1, 1]} : vector<8x512xf32> to vector<8x128xf32>
    %236 = math.tanh %235 : vector<8x128xf32>
    %237 = vector.extract_strided_slice %222 {offsets = [0, 384], sizes = [8, 128], strides = [1, 1]} : vector<8x512xf32> to vector<8x128xf32>
    %238 = arith.negf %237 : vector<8x128xf32>
    %239 = math.exp %238 : vector<8x128xf32>
    %cst_94 = arith.constant 1.000000e+00 : f32
    %240 = vector.broadcast %cst_94 : f32 to vector<8x128xf32>
    %241 = arith.addf %240, %239 : vector<8x128xf32>
    %242 = arith.divf %240, %241 : vector<8x128xf32>
    %243 = arith.mulf %234, %211 : vector<8x128xf32>
    %244 = arith.mulf %228, %236 : vector<8x128xf32>
    %245 = arith.addf %243, %244 : vector<8x128xf32>
    %246 = math.tanh %245 : vector<8x128xf32>
    %247 = arith.mulf %242, %246 : vector<8x128xf32>
    %c6_95 = arith.constant 6 : index
    %c0_96 = arith.constant 0 : index
    %c0_97 = arith.constant 0 : index
    %248 = vector.load %arg9[%c6_95, %c0_96, %c0_97] : memref<8x8x128xf32, #tpu.memory_space<vmem>>, vector<1x8x128xf32>
    %249 = vector.shape_cast %248 : vector<1x8x128xf32> to vector<8x128xf32>
    %250 = vector.shape_cast %247 : vector<8x128xf32> to vector<1x8x128xf32>
    tpu.vector_store %arg9[%c6_95, %c0_96, %c0_97], %250 {strides = array<i32>} : memref<8x8x128xf32, #tpu.memory_space<vmem>>, vector<1x8x128xf32>,
    %c7 = arith.constant 7 : index
    %c0_98 = arith.constant 0 : index
    %c0_99 = arith.constant 0 : index
    %251 = vector.load %arg10[%c7, %c0_98, %c0_99] : memref<8x8x512xf32, #tpu.memory_space<vmem>>, vector<1x8x512xf32>
    %252 = vector.shape_cast %251 : vector<1x8x512xf32> to vector<8x512xf32>
    %c0_100 = arith.constant 0 : index
    %c0_101 = arith.constant 0 : index
    %c0_102 = arith.constant 0 : index
    %253 = vector.load %arg2[%c0_100, %c0_101, %c0_102] : memref<2x128x512xf32, #tpu.memory_space<vmem>>, vector<1x128x512xf32>
    %254 = vector.shape_cast %253 : vector<1x128x512xf32> to vector<128x512xf32>
    %cst_103 = arith.constant dense<0.000000e+00> : vector<8x512xf32>
    %255 = tpu.matmul %247, %254, %cst_103 {dimension_numbers = #tpu.dot_dimension_numbers<[1], [0], [0], [1], [0, 0, 1, 1], [], []>} : vector<8x128xf32>, vector<128x512xf32>, vector<8x512xf32> -> vector<8x512xf32>
    %256 = arith.addf %252, %255 : vector<8x512xf32>
    %257 = vector.extract_strided_slice %256 {offsets = [0, 0], sizes = [8, 128], strides = [1, 1]} : vector<8x512xf32> to vector<8x128xf32>
    %258 = arith.negf %257 : vector<8x128xf32>
    %259 = math.exp %258 : vector<8x128xf32>
    %cst_104 = arith.constant 1.000000e+00 : f32
    %260 = vector.broadcast %cst_104 : f32 to vector<8x128xf32>
    %261 = arith.addf %260, %259 : vector<8x128xf32>
    %262 = arith.divf %260, %261 : vector<8x128xf32>
    %263 = vector.extract_strided_slice %256 {offsets = [0, 128], sizes = [8, 128], strides = [1, 1]} : vector<8x512xf32> to vector<8x128xf32>
    %264 = arith.negf %263 : vector<8x128xf32>
    %265 = math.exp %264 : vector<8x128xf32>
    %cst_105 = arith.constant 1.000000e+00 : f32
    %266 = vector.broadcast %cst_105 : f32 to vector<8x128xf32>
    %267 = arith.addf %266, %265 : vector<8x128xf32>
    %268 = arith.divf %266, %267 : vector<8x128xf32>
    %269 = vector.extract_strided_slice %256 {offsets = [0, 256], sizes = [8, 128], strides = [1, 1]} : vector<8x512xf32> to vector<8x128xf32>
    %270 = math.tanh %269 : vector<8x128xf32>
    %271 = vector.extract_strided_slice %256 {offsets = [0, 384], sizes = [8, 128], strides = [1, 1]} : vector<8x512xf32> to vector<8x128xf32>
    %272 = arith.negf %271 : vector<8x128xf32>
    %273 = math.exp %272 : vector<8x128xf32>
    %cst_106 = arith.constant 1.000000e+00 : f32
    %274 = vector.broadcast %cst_106 : f32 to vector<8x128xf32>
    %275 = arith.addf %274, %273 : vector<8x128xf32>
    %276 = arith.divf %274, %275 : vector<8x128xf32>
    %277 = arith.mulf %268, %245 : vector<8x128xf32>
    %278 = arith.mulf %262, %270 : vector<8x128xf32>
    %279 = arith.addf %277, %278 : vector<8x128xf32>
    %280 = math.tanh %279 : vector<8x128xf32>
    %281 = arith.mulf %276, %280 : vector<8x128xf32>
    %c7_107 = arith.constant 7 : index
    %c0_108 = arith.constant 0 : index
    %c0_109 = arith.constant 0 : index
    %282 = vector.load %arg9[%c7_107, %c0_108, %c0_109] : memref<8x8x128xf32, #tpu.memory_space<vmem>>, vector<1x8x128xf32>
    %283 = vector.shape_cast %282 : vector<1x8x128xf32> to vector<8x128xf32>
    %284 = vector.shape_cast %281 : vector<8x128xf32> to vector<1x8x128xf32>
    tpu.vector_store %arg9[%c7_107, %c0_108, %c0_109], %284 {strides = array<i32>} : memref<8x8x128xf32, #tpu.memory_space<vmem>>, vector<1x8x128xf32>,
    %c0_110 = arith.constant 0 : index
    %c0_111 = arith.constant 0 : index
    %c0_112 = arith.constant 0 : index
    %285 = vector.load %arg7[%c0_110, %c0_111, %c0_112] : memref<2x8x128xf32, #tpu.memory_space<vmem>>, vector<1x8x128xf32>
    %286 = vector.shape_cast %285 : vector<1x8x128xf32> to vector<8x128xf32>
    %287 = vector.shape_cast %281 : vector<8x128xf32> to vector<1x8x128xf32>
    tpu.vector_store %arg7[%c0_110, %c0_111, %c0_112], %287 {strides = array<i32>} : memref<2x8x128xf32, #tpu.memory_space<vmem>>, vector<1x8x128xf32>,
    %c0_113 = arith.constant 0 : index
    %c0_114 = arith.constant 0 : index
    %c0_115 = arith.constant 0 : index
    %288 = vector.load %arg8[%c0_113, %c0_114, %c0_115] : memref<2x8x128xf32, #tpu.memory_space<vmem>>, vector<1x8x128xf32>
    %289 = vector.shape_cast %288 : vector<1x8x128xf32> to vector<8x128xf32>
    %290 = vector.shape_cast %279 : vector<8x128xf32> to vector<1x8x128xf32>
    tpu.vector_store %arg8[%c0_113, %c0_114, %c0_115], %290 {strides = array<i32>} : memref<2x8x128xf32, #tpu.memory_space<vmem>>, vector<1x8x128xf32>,
    %c0_116 = arith.constant 0 : index
    %c0_117 = arith.constant 0 : index
    %c0_118 = arith.constant 0 : index
    %291 = vector.load %arg9[%c0_116, %c0_117, %c0_118] : memref<8x8x128xf32, #tpu.memory_space<vmem>>, vector<8x8x128xf32>
    %292 = vector.shape_cast %291 : vector<8x8x128xf32> to vector<64x128xf32>
    %c1_119 = arith.constant 1 : index
    %c0_120 = arith.constant 0 : index
    %c0_121 = arith.constant 0 : index
    %293 = vector.load %arg1[%c1_119, %c0_120, %c0_121] : memref<2x128x512xf32, #tpu.memory_space<vmem>>, vector<1x128x512xf32>
    %294 = vector.shape_cast %293 : vector<1x128x512xf32> to vector<128x512xf32>
    %cst_122 = arith.constant dense<0.000000e+00> : vector<64x512xf32>
    %295 = tpu.matmul %292, %294, %cst_122 {dimension_numbers = #tpu.dot_dimension_numbers<[1], [0], [0], [1], [0, 0, 1, 1], [], []>} : vector<64x128xf32>, vector<128x512xf32>, vector<64x512xf32> -> vector<64x512xf32>
    %c1_123 = arith.constant 1 : index
    %c0_124 = arith.constant 0 : index
    %c0_125 = arith.constant 0 : index
    %296 = vector.load %arg3[%c1_123, %c0_124, %c0_125] : memref<2x1x512xf32, #tpu.memory_space<vmem>>, vector<1x1x512xf32>
    %297 = vector.shape_cast %296 : vector<1x1x512xf32> to vector<1x512xf32>
    %298 = vector.broadcast %297 : vector<1x512xf32> to vector<64x512xf32>
    %299 = arith.addf %295, %298 : vector<64x512xf32>
    %300 = vector.shape_cast %299 : vector<64x512xf32> to vector<8x8x512xf32>
    %c0_126 = arith.constant 0 : index
    %c0_127 = arith.constant 0 : index
    %c0_128 = arith.constant 0 : index
    %301 = vector.load %arg10[%c0_126, %c0_127, %c0_128] : memref<8x8x512xf32, #tpu.memory_space<vmem>>, vector<8x8x512xf32>
    tpu.vector_store %arg10[%c0_126, %c0_127, %c0_128], %300 {strides = array<i32>} : memref<8x8x512xf32, #tpu.memory_space<vmem>>, vector<8x8x512xf32>,
    %cst_129 = arith.constant 0.000000e+00 : f32
    %302 = vector.broadcast %cst_129 : f32 to vector<8x128xf32>
    %cst_130 = arith.constant 0.000000e+00 : f32
    %303 = vector.broadcast %cst_130 : f32 to vector<8x128xf32>
    %c0_131 = arith.constant 0 : index
    %c0_132 = arith.constant 0 : index
    %c0_133 = arith.constant 0 : index
    %304 = vector.load %arg10[%c0_131, %c0_132, %c0_133] : memref<8x8x512xf32, #tpu.memory_space<vmem>>, vector<1x8x512xf32>
    %305 = vector.shape_cast %304 : vector<1x8x512xf32> to vector<8x512xf32>
    %c1_134 = arith.constant 1 : index
    %c0_135 = arith.constant 0 : index
    %c0_136 = arith.constant 0 : index
    %306 = vector.load %arg2[%c1_134, %c0_135, %c0_136] : memref<2x128x512xf32, #tpu.memory_space<vmem>>, vector<1x128x512xf32>
    %307 = vector.shape_cast %306 : vector<1x128x512xf32> to vector<128x512xf32>
    %cst_137 = arith.constant dense<0.000000e+00> : vector<8x512xf32>
    %308 = tpu.matmul %302, %307, %cst_137 {dimension_numbers = #tpu.dot_dimension_numbers<[1], [0], [0], [1], [0, 0, 1, 1], [], []>} : vector<8x128xf32>, vector<128x512xf32>, vector<8x512xf32> -> vector<8x512xf32>
    %309 = arith.addf %305, %308 : vector<8x512xf32>
    %310 = vector.extract_strided_slice %309 {offsets = [0, 0], sizes = [8, 128], strides = [1, 1]} : vector<8x512xf32> to vector<8x128xf32>
    %311 = arith.negf %310 : vector<8x128xf32>
    %312 = math.exp %311 : vector<8x128xf32>
    %cst_138 = arith.constant 1.000000e+00 : f32
    %313 = vector.broadcast %cst_138 : f32 to vector<8x128xf32>
    %314 = arith.addf %313, %312 : vector<8x128xf32>
    %315 = arith.divf %313, %314 : vector<8x128xf32>
    %316 = vector.extract_strided_slice %309 {offsets = [0, 128], sizes = [8, 128], strides = [1, 1]} : vector<8x512xf32> to vector<8x128xf32>
    %317 = arith.negf %316 : vector<8x128xf32>
    %318 = math.exp %317 : vector<8x128xf32>
    %cst_139 = arith.constant 1.000000e+00 : f32
    %319 = vector.broadcast %cst_139 : f32 to vector<8x128xf32>
    %320 = arith.addf %319, %318 : vector<8x128xf32>
    %321 = arith.divf %319, %320 : vector<8x128xf32>
    %322 = vector.extract_strided_slice %309 {offsets = [0, 256], sizes = [8, 128], strides = [1, 1]} : vector<8x512xf32> to vector<8x128xf32>
    %323 = math.tanh %322 : vector<8x128xf32>
    %324 = vector.extract_strided_slice %309 {offsets = [0, 384], sizes = [8, 128], strides = [1, 1]} : vector<8x512xf32> to vector<8x128xf32>
    %325 = arith.negf %324 : vector<8x128xf32>
    %326 = math.exp %325 : vector<8x128xf32>
    %cst_140 = arith.constant 1.000000e+00 : f32
    %327 = vector.broadcast %cst_140 : f32 to vector<8x128xf32>
    %328 = arith.addf %327, %326 : vector<8x128xf32>
    %329 = arith.divf %327, %328 : vector<8x128xf32>
    %330 = arith.mulf %321, %303 : vector<8x128xf32>
    %331 = arith.mulf %315, %323 : vector<8x128xf32>
    %332 = arith.addf %330, %331 : vector<8x128xf32>
    %333 = math.tanh %332 : vector<8x128xf32>
    %334 = arith.mulf %329, %333 : vector<8x128xf32>
    %c1_141 = arith.constant 1 : index
    %c0_142 = arith.constant 0 : index
    %c0_143 = arith.constant 0 : index
    %335 = vector.load %arg10[%c1_141, %c0_142, %c0_143] : memref<8x8x512xf32, #tpu.memory_space<vmem>>, vector<1x8x512xf32>
    %336 = vector.shape_cast %335 : vector<1x8x512xf32> to vector<8x512xf32>
    %c1_144 = arith.constant 1 : index
    %c0_145 = arith.constant 0 : index
    %c0_146 = arith.constant 0 : index
    %337 = vector.load %arg2[%c1_144, %c0_145, %c0_146] : memref<2x128x512xf32, #tpu.memory_space<vmem>>, vector<1x128x512xf32>
    %338 = vector.shape_cast %337 : vector<1x128x512xf32> to vector<128x512xf32>
    %cst_147 = arith.constant dense<0.000000e+00> : vector<8x512xf32>
    %339 = tpu.matmul %334, %338, %cst_147 {dimension_numbers = #tpu.dot_dimension_numbers<[1], [0], [0], [1], [0, 0, 1, 1], [], []>} : vector<8x128xf32>, vector<128x512xf32>, vector<8x512xf32> -> vector<8x512xf32>
    %340 = arith.addf %336, %339 : vector<8x512xf32>
    %341 = vector.extract_strided_slice %340 {offsets = [0, 0], sizes = [8, 128], strides = [1, 1]} : vector<8x512xf32> to vector<8x128xf32>
    %342 = arith.negf %341 : vector<8x128xf32>
    %343 = math.exp %342 : vector<8x128xf32>
    %cst_148 = arith.constant 1.000000e+00 : f32
    %344 = vector.broadcast %cst_148 : f32 to vector<8x128xf32>
    %345 = arith.addf %344, %343 : vector<8x128xf32>
    %346 = arith.divf %344, %345 : vector<8x128xf32>
    %347 = vector.extract_strided_slice %340 {offsets = [0, 128], sizes = [8, 128], strides = [1, 1]} : vector<8x512xf32> to vector<8x128xf32>
    %348 = arith.negf %347 : vector<8x128xf32>
    %349 = math.exp %348 : vector<8x128xf32>
    %cst_149 = arith.constant 1.000000e+00 : f32
    %350 = vector.broadcast %cst_149 : f32 to vector<8x128xf32>
    %351 = arith.addf %350, %349 : vector<8x128xf32>
    %352 = arith.divf %350, %351 : vector<8x128xf32>
    %353 = vector.extract_strided_slice %340 {offsets = [0, 256], sizes = [8, 128], strides = [1, 1]} : vector<8x512xf32> to vector<8x128xf32>
    %354 = math.tanh %353 : vector<8x128xf32>
    %355 = vector.extract_strided_slice %340 {offsets = [0, 384], sizes = [8, 128], strides = [1, 1]} : vector<8x512xf32> to vector<8x128xf32>
    %356 = arith.negf %355 : vector<8x128xf32>
    %357 = math.exp %356 : vector<8x128xf32>
    %cst_150 = arith.constant 1.000000e+00 : f32
    %358 = vector.broadcast %cst_150 : f32 to vector<8x128xf32>
    %359 = arith.addf %358, %357 : vector<8x128xf32>
    %360 = arith.divf %358, %359 : vector<8x128xf32>
    %361 = arith.mulf %352, %332 : vector<8x128xf32>
    %362 = arith.mulf %346, %354 : vector<8x128xf32>
    %363 = arith.addf %361, %362 : vector<8x128xf32>
    %364 = math.tanh %363 : vector<8x128xf32>
    %365 = arith.mulf %360, %364 : vector<8x128xf32>
    %c2_151 = arith.constant 2 : index
    %c0_152 = arith.constant 0 : index
    %c0_153 = arith.constant 0 : index
    %366 = vector.load %arg10[%c2_151, %c0_152, %c0_153] : memref<8x8x512xf32, #tpu.memory_space<vmem>>, vector<1x8x512xf32>
    %367 = vector.shape_cast %366 : vector<1x8x512xf32> to vector<8x512xf32>
    %c1_154 = arith.constant 1 : index
    %c0_155 = arith.constant 0 : index
    %c0_156 = arith.constant 0 : index
    %368 = vector.load %arg2[%c1_154, %c0_155, %c0_156] : memref<2x128x512xf32, #tpu.memory_space<vmem>>, vector<1x128x512xf32>
    %369 = vector.shape_cast %368 : vector<1x128x512xf32> to vector<128x512xf32>
    %cst_157 = arith.constant dense<0.000000e+00> : vector<8x512xf32>
    %370 = tpu.matmul %365, %369, %cst_157 {dimension_numbers = #tpu.dot_dimension_numbers<[1], [0], [0], [1], [0, 0, 1, 1], [], []>} : vector<8x128xf32>, vector<128x512xf32>, vector<8x512xf32> -> vector<8x512xf32>
    %371 = arith.addf %367, %370 : vector<8x512xf32>
    %372 = vector.extract_strided_slice %371 {offsets = [0, 0], sizes = [8, 128], strides = [1, 1]} : vector<8x512xf32> to vector<8x128xf32>
    %373 = arith.negf %372 : vector<8x128xf32>
    %374 = math.exp %373 : vector<8x128xf32>
    %cst_158 = arith.constant 1.000000e+00 : f32
    %375 = vector.broadcast %cst_158 : f32 to vector<8x128xf32>
    %376 = arith.addf %375, %374 : vector<8x128xf32>
    %377 = arith.divf %375, %376 : vector<8x128xf32>
    %378 = vector.extract_strided_slice %371 {offsets = [0, 128], sizes = [8, 128], strides = [1, 1]} : vector<8x512xf32> to vector<8x128xf32>
    %379 = arith.negf %378 : vector<8x128xf32>
    %380 = math.exp %379 : vector<8x128xf32>
    %cst_159 = arith.constant 1.000000e+00 : f32
    %381 = vector.broadcast %cst_159 : f32 to vector<8x128xf32>
    %382 = arith.addf %381, %380 : vector<8x128xf32>
    %383 = arith.divf %381, %382 : vector<8x128xf32>
    %384 = vector.extract_strided_slice %371 {offsets = [0, 256], sizes = [8, 128], strides = [1, 1]} : vector<8x512xf32> to vector<8x128xf32>
    %385 = math.tanh %384 : vector<8x128xf32>
    %386 = vector.extract_strided_slice %371 {offsets = [0, 384], sizes = [8, 128], strides = [1, 1]} : vector<8x512xf32> to vector<8x128xf32>
    %387 = arith.negf %386 : vector<8x128xf32>
    %388 = math.exp %387 : vector<8x128xf32>
    %cst_160 = arith.constant 1.000000e+00 : f32
    %389 = vector.broadcast %cst_160 : f32 to vector<8x128xf32>
    %390 = arith.addf %389, %388 : vector<8x128xf32>
    %391 = arith.divf %389, %390 : vector<8x128xf32>
    %392 = arith.mulf %383, %363 : vector<8x128xf32>
    %393 = arith.mulf %377, %385 : vector<8x128xf32>
    %394 = arith.addf %392, %393 : vector<8x128xf32>
    %395 = math.tanh %394 : vector<8x128xf32>
    %396 = arith.mulf %391, %395 : vector<8x128xf32>
    %c3_161 = arith.constant 3 : index
    %c0_162 = arith.constant 0 : index
    %c0_163 = arith.constant 0 : index
    %397 = vector.load %arg10[%c3_161, %c0_162, %c0_163] : memref<8x8x512xf32, #tpu.memory_space<vmem>>, vector<1x8x512xf32>
    %398 = vector.shape_cast %397 : vector<1x8x512xf32> to vector<8x512xf32>
    %c1_164 = arith.constant 1 : index
    %c0_165 = arith.constant 0 : index
    %c0_166 = arith.constant 0 : index
    %399 = vector.load %arg2[%c1_164, %c0_165, %c0_166] : memref<2x128x512xf32, #tpu.memory_space<vmem>>, vector<1x128x512xf32>
    %400 = vector.shape_cast %399 : vector<1x128x512xf32> to vector<128x512xf32>
    %cst_167 = arith.constant dense<0.000000e+00> : vector<8x512xf32>
    %401 = tpu.matmul %396, %400, %cst_167 {dimension_numbers = #tpu.dot_dimension_numbers<[1], [0], [0], [1], [0, 0, 1, 1], [], []>} : vector<8x128xf32>, vector<128x512xf32>, vector<8x512xf32> -> vector<8x512xf32>
    %402 = arith.addf %398, %401 : vector<8x512xf32>
    %403 = vector.extract_strided_slice %402 {offsets = [0, 0], sizes = [8, 128], strides = [1, 1]} : vector<8x512xf32> to vector<8x128xf32>
    %404 = arith.negf %403 : vector<8x128xf32>
    %405 = math.exp %404 : vector<8x128xf32>
    %cst_168 = arith.constant 1.000000e+00 : f32
    %406 = vector.broadcast %cst_168 : f32 to vector<8x128xf32>
    %407 = arith.addf %406, %405 : vector<8x128xf32>
    %408 = arith.divf %406, %407 : vector<8x128xf32>
    %409 = vector.extract_strided_slice %402 {offsets = [0, 128], sizes = [8, 128], strides = [1, 1]} : vector<8x512xf32> to vector<8x128xf32>
    %410 = arith.negf %409 : vector<8x128xf32>
    %411 = math.exp %410 : vector<8x128xf32>
    %cst_169 = arith.constant 1.000000e+00 : f32
    %412 = vector.broadcast %cst_169 : f32 to vector<8x128xf32>
    %413 = arith.addf %412, %411 : vector<8x128xf32>
    %414 = arith.divf %412, %413 : vector<8x128xf32>
    %415 = vector.extract_strided_slice %402 {offsets = [0, 256], sizes = [8, 128], strides = [1, 1]} : vector<8x512xf32> to vector<8x128xf32>
    %416 = math.tanh %415 : vector<8x128xf32>
    %417 = vector.extract_strided_slice %402 {offsets = [0, 384], sizes = [8, 128], strides = [1, 1]} : vector<8x512xf32> to vector<8x128xf32>
    %418 = arith.negf %417 : vector<8x128xf32>
    %419 = math.exp %418 : vector<8x128xf32>
    %cst_170 = arith.constant 1.000000e+00 : f32
    %420 = vector.broadcast %cst_170 : f32 to vector<8x128xf32>
    %421 = arith.addf %420, %419 : vector<8x128xf32>
    %422 = arith.divf %420, %421 : vector<8x128xf32>
    %423 = arith.mulf %414, %394 : vector<8x128xf32>
    %424 = arith.mulf %408, %416 : vector<8x128xf32>
    %425 = arith.addf %423, %424 : vector<8x128xf32>
    %426 = math.tanh %425 : vector<8x128xf32>
    %427 = arith.mulf %422, %426 : vector<8x128xf32>
    %c4_171 = arith.constant 4 : index
    %c0_172 = arith.constant 0 : index
    %c0_173 = arith.constant 0 : index
    %428 = vector.load %arg10[%c4_171, %c0_172, %c0_173] : memref<8x8x512xf32, #tpu.memory_space<vmem>>, vector<1x8x512xf32>
    %429 = vector.shape_cast %428 : vector<1x8x512xf32> to vector<8x512xf32>
    %c1_174 = arith.constant 1 : index
    %c0_175 = arith.constant 0 : index
    %c0_176 = arith.constant 0 : index
    %430 = vector.load %arg2[%c1_174, %c0_175, %c0_176] : memref<2x128x512xf32, #tpu.memory_space<vmem>>, vector<1x128x512xf32>
    %431 = vector.shape_cast %430 : vector<1x128x512xf32> to vector<128x512xf32>
    %cst_177 = arith.constant dense<0.000000e+00> : vector<8x512xf32>
    %432 = tpu.matmul %427, %431, %cst_177 {dimension_numbers = #tpu.dot_dimension_numbers<[1], [0], [0], [1], [0, 0, 1, 1], [], []>} : vector<8x128xf32>, vector<128x512xf32>, vector<8x512xf32> -> vector<8x512xf32>
    %433 = arith.addf %429, %432 : vector<8x512xf32>
    %434 = vector.extract_strided_slice %433 {offsets = [0, 0], sizes = [8, 128], strides = [1, 1]} : vector<8x512xf32> to vector<8x128xf32>
    %435 = arith.negf %434 : vector<8x128xf32>
    %436 = math.exp %435 : vector<8x128xf32>
    %cst_178 = arith.constant 1.000000e+00 : f32
    %437 = vector.broadcast %cst_178 : f32 to vector<8x128xf32>
    %438 = arith.addf %437, %436 : vector<8x128xf32>
    %439 = arith.divf %437, %438 : vector<8x128xf32>
    %440 = vector.extract_strided_slice %433 {offsets = [0, 128], sizes = [8, 128], strides = [1, 1]} : vector<8x512xf32> to vector<8x128xf32>
    %441 = arith.negf %440 : vector<8x128xf32>
    %442 = math.exp %441 : vector<8x128xf32>
    %cst_179 = arith.constant 1.000000e+00 : f32
    %443 = vector.broadcast %cst_179 : f32 to vector<8x128xf32>
    %444 = arith.addf %443, %442 : vector<8x128xf32>
    %445 = arith.divf %443, %444 : vector<8x128xf32>
    %446 = vector.extract_strided_slice %433 {offsets = [0, 256], sizes = [8, 128], strides = [1, 1]} : vector<8x512xf32> to vector<8x128xf32>
    %447 = math.tanh %446 : vector<8x128xf32>
    %448 = vector.extract_strided_slice %433 {offsets = [0, 384], sizes = [8, 128], strides = [1, 1]} : vector<8x512xf32> to vector<8x128xf32>
    %449 = arith.negf %448 : vector<8x128xf32>
    %450 = math.exp %449 : vector<8x128xf32>
    %cst_180 = arith.constant 1.000000e+00 : f32
    %451 = vector.broadcast %cst_180 : f32 to vector<8x128xf32>
    %452 = arith.addf %451, %450 : vector<8x128xf32>
    %453 = arith.divf %451, %452 : vector<8x128xf32>
    %454 = arith.mulf %445, %425 : vector<8x128xf32>
    %455 = arith.mulf %439, %447 : vector<8x128xf32>
    %456 = arith.addf %454, %455 : vector<8x128xf32>
    %457 = math.tanh %456 : vector<8x128xf32>
    %458 = arith.mulf %453, %457 : vector<8x128xf32>
    %c5_181 = arith.constant 5 : index
    %c0_182 = arith.constant 0 : index
    %c0_183 = arith.constant 0 : index
    %459 = vector.load %arg10[%c5_181, %c0_182, %c0_183] : memref<8x8x512xf32, #tpu.memory_space<vmem>>, vector<1x8x512xf32>
    %460 = vector.shape_cast %459 : vector<1x8x512xf32> to vector<8x512xf32>
    %c1_184 = arith.constant 1 : index
    %c0_185 = arith.constant 0 : index
    %c0_186 = arith.constant 0 : index
    %461 = vector.load %arg2[%c1_184, %c0_185, %c0_186] : memref<2x128x512xf32, #tpu.memory_space<vmem>>, vector<1x128x512xf32>
    %462 = vector.shape_cast %461 : vector<1x128x512xf32> to vector<128x512xf32>
    %cst_187 = arith.constant dense<0.000000e+00> : vector<8x512xf32>
    %463 = tpu.matmul %458, %462, %cst_187 {dimension_numbers = #tpu.dot_dimension_numbers<[1], [0], [0], [1], [0, 0, 1, 1], [], []>} : vector<8x128xf32>, vector<128x512xf32>, vector<8x512xf32> -> vector<8x512xf32>
    %464 = arith.addf %460, %463 : vector<8x512xf32>
    %465 = vector.extract_strided_slice %464 {offsets = [0, 0], sizes = [8, 128], strides = [1, 1]} : vector<8x512xf32> to vector<8x128xf32>
    %466 = arith.negf %465 : vector<8x128xf32>
    %467 = math.exp %466 : vector<8x128xf32>
    %cst_188 = arith.constant 1.000000e+00 : f32
    %468 = vector.broadcast %cst_188 : f32 to vector<8x128xf32>
    %469 = arith.addf %468, %467 : vector<8x128xf32>
    %470 = arith.divf %468, %469 : vector<8x128xf32>
    %471 = vector.extract_strided_slice %464 {offsets = [0, 128], sizes = [8, 128], strides = [1, 1]} : vector<8x512xf32> to vector<8x128xf32>
    %472 = arith.negf %471 : vector<8x128xf32>
    %473 = math.exp %472 : vector<8x128xf32>
    %cst_189 = arith.constant 1.000000e+00 : f32
    %474 = vector.broadcast %cst_189 : f32 to vector<8x128xf32>
    %475 = arith.addf %474, %473 : vector<8x128xf32>
    %476 = arith.divf %474, %475 : vector<8x128xf32>
    %477 = vector.extract_strided_slice %464 {offsets = [0, 256], sizes = [8, 128], strides = [1, 1]} : vector<8x512xf32> to vector<8x128xf32>
    %478 = math.tanh %477 : vector<8x128xf32>
    %479 = vector.extract_strided_slice %464 {offsets = [0, 384], sizes = [8, 128], strides = [1, 1]} : vector<8x512xf32> to vector<8x128xf32>
    %480 = arith.negf %479 : vector<8x128xf32>
    %481 = math.exp %480 : vector<8x128xf32>
    %cst_190 = arith.constant 1.000000e+00 : f32
    %482 = vector.broadcast %cst_190 : f32 to vector<8x128xf32>
    %483 = arith.addf %482, %481 : vector<8x128xf32>
    %484 = arith.divf %482, %483 : vector<8x128xf32>
    %485 = arith.mulf %476, %456 : vector<8x128xf32>
    %486 = arith.mulf %470, %478 : vector<8x128xf32>
    %487 = arith.addf %485, %486 : vector<8x128xf32>
    %488 = math.tanh %487 : vector<8x128xf32>
    %489 = arith.mulf %484, %488 : vector<8x128xf32>
    %c6_191 = arith.constant 6 : index
    %c0_192 = arith.constant 0 : index
    %c0_193 = arith.constant 0 : index
    %490 = vector.load %arg10[%c6_191, %c0_192, %c0_193] : memref<8x8x512xf32, #tpu.memory_space<vmem>>, vector<1x8x512xf32>
    %491 = vector.shape_cast %490 : vector<1x8x512xf32> to vector<8x512xf32>
    %c1_194 = arith.constant 1 : index
    %c0_195 = arith.constant 0 : index
    %c0_196 = arith.constant 0 : index
    %492 = vector.load %arg2[%c1_194, %c0_195, %c0_196] : memref<2x128x512xf32, #tpu.memory_space<vmem>>, vector<1x128x512xf32>
    %493 = vector.shape_cast %492 : vector<1x128x512xf32> to vector<128x512xf32>
    %cst_197 = arith.constant dense<0.000000e+00> : vector<8x512xf32>
    %494 = tpu.matmul %489, %493, %cst_197 {dimension_numbers = #tpu.dot_dimension_numbers<[1], [0], [0], [1], [0, 0, 1, 1], [], []>} : vector<8x128xf32>, vector<128x512xf32>, vector<8x512xf32> -> vector<8x512xf32>
    %495 = arith.addf %491, %494 : vector<8x512xf32>
    %496 = vector.extract_strided_slice %495 {offsets = [0, 0], sizes = [8, 128], strides = [1, 1]} : vector<8x512xf32> to vector<8x128xf32>
    %497 = arith.negf %496 : vector<8x128xf32>
    %498 = math.exp %497 : vector<8x128xf32>
    %cst_198 = arith.constant 1.000000e+00 : f32
    %499 = vector.broadcast %cst_198 : f32 to vector<8x128xf32>
    %500 = arith.addf %499, %498 : vector<8x128xf32>
    %501 = arith.divf %499, %500 : vector<8x128xf32>
    %502 = vector.extract_strided_slice %495 {offsets = [0, 128], sizes = [8, 128], strides = [1, 1]} : vector<8x512xf32> to vector<8x128xf32>
    %503 = arith.negf %502 : vector<8x128xf32>
    %504 = math.exp %503 : vector<8x128xf32>
    %cst_199 = arith.constant 1.000000e+00 : f32
    %505 = vector.broadcast %cst_199 : f32 to vector<8x128xf32>
    %506 = arith.addf %505, %504 : vector<8x128xf32>
    %507 = arith.divf %505, %506 : vector<8x128xf32>
    %508 = vector.extract_strided_slice %495 {offsets = [0, 256], sizes = [8, 128], strides = [1, 1]} : vector<8x512xf32> to vector<8x128xf32>
    %509 = math.tanh %508 : vector<8x128xf32>
    %510 = vector.extract_strided_slice %495 {offsets = [0, 384], sizes = [8, 128], strides = [1, 1]} : vector<8x512xf32> to vector<8x128xf32>
    %511 = arith.negf %510 : vector<8x128xf32>
    %512 = math.exp %511 : vector<8x128xf32>
    %cst_200 = arith.constant 1.000000e+00 : f32
    %513 = vector.broadcast %cst_200 : f32 to vector<8x128xf32>
    %514 = arith.addf %513, %512 : vector<8x128xf32>
    %515 = arith.divf %513, %514 : vector<8x128xf32>
    %516 = arith.mulf %507, %487 : vector<8x128xf32>
    %517 = arith.mulf %501, %509 : vector<8x128xf32>
    %518 = arith.addf %516, %517 : vector<8x128xf32>
    %519 = math.tanh %518 : vector<8x128xf32>
    %520 = arith.mulf %515, %519 : vector<8x128xf32>
    %c7_201 = arith.constant 7 : index
    %c0_202 = arith.constant 0 : index
    %c0_203 = arith.constant 0 : index
    %521 = vector.load %arg10[%c7_201, %c0_202, %c0_203] : memref<8x8x512xf32, #tpu.memory_space<vmem>>, vector<1x8x512xf32>
    %522 = vector.shape_cast %521 : vector<1x8x512xf32> to vector<8x512xf32>
    %c1_204 = arith.constant 1 : index
    %c0_205 = arith.constant 0 : index
    %c0_206 = arith.constant 0 : index
    %523 = vector.load %arg2[%c1_204, %c0_205, %c0_206] : memref<2x128x512xf32, #tpu.memory_space<vmem>>, vector<1x128x512xf32>
    %524 = vector.shape_cast %523 : vector<1x128x512xf32> to vector<128x512xf32>
    %cst_207 = arith.constant dense<0.000000e+00> : vector<8x512xf32>
    %525 = tpu.matmul %520, %524, %cst_207 {dimension_numbers = #tpu.dot_dimension_numbers<[1], [0], [0], [1], [0, 0, 1, 1], [], []>} : vector<8x128xf32>, vector<128x512xf32>, vector<8x512xf32> -> vector<8x512xf32>
    %526 = arith.addf %522, %525 : vector<8x512xf32>
    %527 = vector.extract_strided_slice %526 {offsets = [0, 0], sizes = [8, 128], strides = [1, 1]} : vector<8x512xf32> to vector<8x128xf32>
    %528 = arith.negf %527 : vector<8x128xf32>
    %529 = math.exp %528 : vector<8x128xf32>
    %cst_208 = arith.constant 1.000000e+00 : f32
    %530 = vector.broadcast %cst_208 : f32 to vector<8x128xf32>
    %531 = arith.addf %530, %529 : vector<8x128xf32>
    %532 = arith.divf %530, %531 : vector<8x128xf32>
    %533 = vector.extract_strided_slice %526 {offsets = [0, 128], sizes = [8, 128], strides = [1, 1]} : vector<8x512xf32> to vector<8x128xf32>
    %534 = arith.negf %533 : vector<8x128xf32>
    %535 = math.exp %534 : vector<8x128xf32>
    %cst_209 = arith.constant 1.000000e+00 : f32
    %536 = vector.broadcast %cst_209 : f32 to vector<8x128xf32>
    %537 = arith.addf %536, %535 : vector<8x128xf32>
    %538 = arith.divf %536, %537 : vector<8x128xf32>
    %539 = vector.extract_strided_slice %526 {offsets = [0, 256], sizes = [8, 128], strides = [1, 1]} : vector<8x512xf32> to vector<8x128xf32>
    %540 = math.tanh %539 : vector<8x128xf32>
    %541 = vector.extract_strided_slice %526 {offsets = [0, 384], sizes = [8, 128], strides = [1, 1]} : vector<8x512xf32> to vector<8x128xf32>
    %542 = arith.negf %541 : vector<8x128xf32>
    %543 = math.exp %542 : vector<8x128xf32>
    %cst_210 = arith.constant 1.000000e+00 : f32
    %544 = vector.broadcast %cst_210 : f32 to vector<8x128xf32>
    %545 = arith.addf %544, %543 : vector<8x128xf32>
    %546 = arith.divf %544, %545 : vector<8x128xf32>
    %547 = arith.mulf %538, %518 : vector<8x128xf32>
    %548 = arith.mulf %532, %540 : vector<8x128xf32>
    %549 = arith.addf %547, %548 : vector<8x128xf32>
    %550 = math.tanh %549 : vector<8x128xf32>
    %551 = arith.mulf %546, %550 : vector<8x128xf32>
    %c1_211 = arith.constant 1 : index
    %c0_212 = arith.constant 0 : index
    %c0_213 = arith.constant 0 : index
    %552 = vector.load %arg7[%c1_211, %c0_212, %c0_213] : memref<2x8x128xf32, #tpu.memory_space<vmem>>, vector<1x8x128xf32>
    %553 = vector.shape_cast %552 : vector<1x8x128xf32> to vector<8x128xf32>
    %554 = vector.shape_cast %551 : vector<8x128xf32> to vector<1x8x128xf32>
    tpu.vector_store %arg7[%c1_211, %c0_212, %c0_213], %554 {strides = array<i32>} : memref<2x8x128xf32, #tpu.memory_space<vmem>>, vector<1x8x128xf32>,
    %c1_214 = arith.constant 1 : index
    %c0_215 = arith.constant 0 : index
    %c0_216 = arith.constant 0 : index
    %555 = vector.load %arg8[%c1_214, %c0_215, %c0_216] : memref<2x8x128xf32, #tpu.memory_space<vmem>>, vector<1x8x128xf32>
    %556 = vector.shape_cast %555 : vector<1x8x128xf32> to vector<8x128xf32>
    %557 = vector.shape_cast %549 : vector<8x128xf32> to vector<1x8x128xf32>
    tpu.vector_store %arg8[%c1_214, %c0_215, %c0_216], %557 {strides = array<i32>} : memref<2x8x128xf32, #tpu.memory_space<vmem>>, vector<1x8x128xf32>,
    %c0_217 = arith.constant 0 : index
    %c0_218 = arith.constant 0 : index
    %558 = vector.load %arg4[%c0_217, %c0_218] : memref<128x128xf32, #tpu.memory_space<vmem>>, vector<128x128xf32>
    %cst_219 = arith.constant dense<0.000000e+00> : vector<8x128xf32>
    %559 = tpu.matmul %551, %558, %cst_219 {dimension_numbers = #tpu.dot_dimension_numbers<[1], [0], [0], [1], [0, 0, 1, 1], [], []>} : vector<8x128xf32>, vector<128x128xf32>, vector<8x128xf32> -> vector<8x128xf32>
    %c0_220 = arith.constant 0 : index
    %c0_221 = arith.constant 0 : index
    %560 = vector.load %arg5[%c0_220, %c0_221] : memref<1x128xf32, #tpu.memory_space<vmem>>, vector<1x128xf32>
    %561 = vector.broadcast %560 : vector<1x128xf32> to vector<8x128xf32>
    %562 = arith.addf %559, %561 : vector<8x128xf32>
    %c0_222 = arith.constant 0 : index
    %c0_223 = arith.constant 0 : index
    %563 = vector.load %arg6[%c0_222, %c0_223] : memref<8x128xf32, #tpu.memory_space<vmem>>, vector<8x128xf32>
    tpu.vector_store %arg6[%c0_222, %c0_223], %562 {strides = array<i32>} : memref<8x128xf32, #tpu.memory_space<vmem>>, vector<8x128xf32>,
    return
  }
}

</mosaic_0001>

<llo_original>
// kernel: _fused_forward.1
$region0: #{_fused_forward.1}
  #allocation0 [shape = 'u32[]', space=smem, size = 0x4, offset = 0x4, fixed_abs, tag = 'smem constant byte address 0x4 - core index']
  #allocation1 [shape = 'u32[144,128]{1,0:T(1,128)}', space=vmem, size = 0x12000, scoped, tag = 'internal scratch']
  #allocation2 [shape = 'f32[8,8,128]{2,1,0:T(8,128)}', space=vmem, size = 0x8000, scoped, tag = 'scratch operand']
  #allocation3 [shape = 'f32[8,8,512]{2,1,0:T(8,128)}', space=vmem, size = 0x20000, scoped, tag = 'scratch operand']
  %s0 = inlined_call_operand.hbm [shape: f32[8,8,128], index: 0, kind: input, shape index: {}]
  %s1 = inlined_call_operand.hbm [shape: f32[2,128,512], index: 1, kind: input, shape index: {}]
  %s2 = inlined_call_operand.hbm [shape: f32[2,128,512], index: 2, kind: input, shape index: {}]
  %s3 = inlined_call_operand.hbm [shape: f32[2,1,512], index: 3, kind: input, shape index: {}]
  %s4 = inlined_call_operand.hbm [shape: f32[128,128], index: 4, kind: input, shape index: {}]
  %s5 = inlined_call_operand.vmem [shape: f32[1,128], index: 5, kind: input, shape index: {}]
  %s6 = inlined_call_operand.hbm [shape: f32[8,128], index: 6, kind: output, shape index: {0}]
  %s7 = inlined_call_operand.hbm [shape: f32[2,8,128], index: 7, kind: output, shape index: {1}]
  %s8 = inlined_call_operand.hbm [shape: f32[2,8,128], index: 8, kind: output, shape index: {2}]
  %9 = xla_tuple %s6, %s7, %s8
  %s10 = sld [smem:[#allocation0]]
  $region70: #{_fused_forward.1} parent=0
    _
  %s12 = ssub.s32 1, %s10
  %s13 = scalar_select 0, %s12, %s10
  $region1: #{_fused_forward.1} parent=0
    #allocation4 [shape = 'u8[32768]{0}', space=vmem, size = 0x8000, scoped, tag = 'input window, operand 0, single buffered']
    #allocation5 [shape = 's32[1]{0}', space=sflag, size = 0x4, scoped, tag = 'scoped memory for _fused_forward.1']
    #allocation6 [shape = 's32[1]{0}', space=sflag, size = 0x4, scoped, tag = 'scoped memory for _fused_forward.1']
    #allocation7 [shape = 'u8[524288]{0}', space=vmem, size = 0x80000, scoped, tag = 'input window, operand 1, single buffered']
    #allocation8 [shape = 's32[1]{0}', space=sflag, size = 0x4, scoped, tag = 'scoped memory for _fused_forward.1']
    #allocation9 [shape = 'u8[524288]{0}', space=vmem, size = 0x80000, scoped, tag = 'input window, operand 2, single buffered']
    #allocation10 [shape = 'u8[4096]{0}', space=vmem, size = 0x1000, scoped, tag = 'input window, operand 3, single buffered']
    #allocation11 [shape = 's32[1]{0}', space=sflag, size = 0x4, scoped, tag = 'scoped memory for _fused_forward.1']
    #allocation12 [shape = 'u8[65536]{0}', space=vmem, size = 0x10000, scoped, tag = 'input window, operand 4, single buffered']
    #allocation13 [shape = 'u8[4096]{0}', space=vmem, size = 0x1000, scoped, tag = 'output window, operand 0, single buffered']
    #allocation14 [shape = 'u8[8192]{0}', space=vmem, size = 0x2000, scoped, tag = 'output window, operand 1, single buffered']
    #allocation15 [shape = 's32[1]{0}', space=sflag, size = 0x4, scoped, tag = 'scoped memory for _fused_forward.1']
    #allocation16 [shape = 'u8[8192]{0}', space=vmem, size = 0x2000, scoped, tag = 'output window, operand 2, single buffered']
    %14 = vsyncpa [#allocation5], 0
    %15 = vsyncpa [#allocation8], 0
    %16 = vsyncpa [#allocation11], 0
    %17 = vsyncpa [#allocation6], 0
    %18 = vsyncpa [#allocation15], 0
    // Predicated region
    $region2: #{_fused_forward.1} parent=1 // pred_check
      _
    $region3: #{_fused_forward.1} parent=1 // pred_check_branch
      %20 = sbr.rel (0) target = $region5
    $region4: #{_fused_forward.1} parent=1 // pred_region
      %s22 = ssub.s32 1024, 1024
      %23 = vsyncadd [#allocation5], %s22
      %s24 = sshll.u32 [#allocation4], 4
      %s25 = int_to_ptr.vmem [resolvable:$true] %s24
      %30 = dma.hbm_to_vmem [thread:$0]  %s0, 1024, %s25, [#allocation5], 128, 128, 8
    $region5: #{_fused_forward.1} parent=1 // pred_fallthru
      _
    // Predicated region
    $region6: #{_fused_forward.1} parent=1 // pred_check
      _
    $region7: #{_fused_forward.1} parent=1 // pred_check_branch
      %32 = sbr.rel (0) target = $region9
    $region8: #{_fused_forward.1} parent=1 // pred_region
      %s34 = ssub.s32 16384, 16384
      %35 = vsyncadd [#allocation8], %s34
      %s36 = sshll.u32 [#allocation7], 4
      %s37 = int_to_ptr.vmem [resolvable:$true] %s36
      %42 = dma.hbm_to_vmem [thread:$0]  %s1, 16384, %s37, [#allocation8], 512, 512, 32
    $region9: #{_fused_forward.1} parent=1 // pred_fallthru
      _
    // Predicated region
    $region10: #{_fused_forward.1} parent=1 // pred_check
      _
    $region11: #{_fused_forward.1} parent=1 // pred_check_branch
      %44 = sbr.rel (0) target = $region13
    $region12: #{_fused_forward.1} parent=1 // pred_region
      %s46 = ssub.s32 16384, 16384
      %47 = vsyncadd [#allocation8], %s46
      %s48 = sshll.u32 [#allocation9], 4
      %s49 = int_to_ptr.vmem [resolvable:$true] %s48
      %54 = dma.hbm_to_vmem [thread:$0]  %s2, 16384, %s49, [#allocation8], 512, 512, 32
    $region13: #{_fused_forward.1} parent=1 // pred_fallthru
      _
    // Predicated region
    $region14: #{_fused_forward.1} parent=1 // pred_check
      _
    $region15: #{_fused_forward.1} parent=1 // pred_check_branch
      %56 = sbr.rel (0) target = $region17
    $region16: #{_fused_forward.1} parent=1 // pred_region
      %s58 = ssub.s32 128, 128
      %59 = vsyncadd [#allocation11], %s58
      %s60 = sshll.u32 [#allocation10], 4
      %s61 = int_to_ptr.vmem [resolvable:$true] %s60
      %66 = dma.hbm_to_vmem [thread:$0]  %s3, 128, %s61, [#allocation11], 64, 64, 4
    $region17: #{_fused_forward.1} parent=1 // pred_fallthru
      _
    // Predicated region
    $region18: #{_fused_forward.1} parent=1 // pred_check
      _
    $region19: #{_fused_forward.1} parent=1 // pred_check_branch
      %68 = sbr.rel (0) target = $region21
    $region20: #{_fused_forward.1} parent=1 // pred_region
      %s70 = ssub.s32 2048, 2048
      %71 = vsyncadd [#allocation11], %s70
      %s72 = sshll.u32 [#allocation12], 4
      %s73 = int_to_ptr.vmem [resolvable:$true] %s72
      %78 = dma.hbm_to_vmem [thread:$0]  %s4, 2048, %s73, [#allocation11], 128, 128, 8
    $region21: #{_fused_forward.1} parent=1 // pred_fallthru
      _
    // Predicated region
    $region22: #{_fused_forward.1} parent=1 // pred_check
      _
    $region23: #{_fused_forward.1} parent=1 // pred_check_branch
      %80 = sbr.rel (0) target = $region25
    $region24: #{_fused_forward.1} parent=1 // pred_region
      _
    $region25: #{_fused_forward.1} parent=1 // pred_fallthru
      _
    // Predicated region
    $region26: #{_fused_forward.1} parent=1 // pred_check
      _
    $region27: #{_fused_forward.1} parent=1 // pred_check_branch
      %82 = sbr.rel (0) target = $region29
    $region28: #{_fused_forward.1} parent=1 // pred_region
      %83 = dma.done [#allocation5], 1024
    $region29: #{_fused_forward.1} parent=1 // pred_fallthru
      _
    // Predicated region
    $region30: #{_fused_forward.1} parent=1 // pred_check
      _
    $region31: #{_fused_forward.1} parent=1 // pred_check_branch
      %85 = sbr.rel (0) target = $region33
    $region32: #{_fused_forward.1} parent=1 // pred_region
      %86 = dma.done [#allocation8], 16384
    $region33: #{_fused_forward.1} parent=1 // pred_fallthru
      _
    // Predicated region
    $region34: #{_fused_forward.1} parent=1 // pred_check
      _
    $region35: #{_fused_forward.1} parent=1 // pred_check_branch
      %88 = sbr.rel (0) target = $region37
    $region36: #{_fused_forward.1} parent=1 // pred_region
      %89 = dma.done [#allocation8], 16384
    $region37: #{_fused_forward.1} parent=1 // pred_fallthru
      _
    // Predicated region
    $region38: #{_fused_forward.1} parent=1 // pred_check
      _
    $region39: #{_fused_forward.1} parent=1 // pred_check_branch
      %91 = sbr.rel (0) target = $region41
    $region40: #{_fused_forward.1} parent=1 // pred_region
      %92 = dma.done [#allocation11], 128
    $region41: #{_fused_forward.1} parent=1 // pred_fallthru
      _
    // Predicated region
    $region42: #{_fused_forward.1} parent=1 // pred_check
      _
    $region43: #{_fused_forward.1} parent=1 // pred_check_branch
      %94 = sbr.rel (0) target = $region45
    $region44: #{_fused_forward.1} parent=1 // pred_region
      %95 = dma.done [#allocation11], 2048
    $region45: #{_fused_forward.1} parent=1 // pred_fallthru
      _
    %v96 = vld [vmem:[#allocation4] sm:$0xff]
    %v97 = vld [vmem:[#allocation4 + $0x8] sm:$0xff]
    %v98 = vld [vmem:[#allocation4 + $0x10] sm:$0xff]
    %v99 = vld [vmem:[#allocation4 + $0x18] sm:$0xff]
    %v100 = vld [vmem:[#allocation4 + $0x20] sm:$0xff]
    %v101 = vld [vmem:[#allocation4 + $0x28] sm:$0xff]
    %v102 = vld [vmem:[#allocation4 + $0x30] sm:$0xff]
    %v103 = vld [vmem:[#allocation4 + $0x38] sm:$0xff]
    %v104 = vld [vmem:[#allocation7] sm:$0xff]
    %v105 = vld [vmem:[#allocation7 + $0x8] sm:$0xff]
    %v106 = vld [vmem:[#allocation7 + $0x10] sm:$0xff]
    %v107 = vld [vmem:[#allocation7 + $0x18] sm:$0xff]
    %v108 = vld [vmem:[#allocation7 + $0x20] sm:$0xff]
    %v109 = vld [vmem:[#allocation7 + $0x28] sm:$0xff]
    %v110 = vld [vmem:[#allocation7 + $0x30] sm:$0xff]
    %v111 = vld [vmem:[#allocation7 + $0x38] sm:$0xff]
    %v112 = vld [vmem:[#allocation7 + $0x40] sm:$0xff]
    %v113 = vld [vmem:[#allocation7 + $0x48] sm:$0xff]
    %v114 = vld [vmem:[#allocation7 + $0x50] sm:$0xff]
    %v115 = vld [vmem:[#allocation7 + $0x58] sm:$0xff]
    %v116 = vld [vmem:[#allocation7 + $0x60] sm:$0xff]
    %v117 = vld [vmem:[#allocation7 + $0x68] sm:$0xff]
    %v118 = vld [vmem:[#allocation7 + $0x70] sm:$0xff]
    %v119 = vld [vmem:[#allocation7 + $0x78] sm:$0xff]
    %v120 = vld [vmem:[#allocation7 + $0x80] sm:$0xff]
    %v121 = vld [vmem:[#allocation7 + $0x88] sm:$0xff]
    %v122 = vld [vmem:[#allocation7 + $0x90] sm:$0xff]
    %v123 = vld [vmem:[#allocation7 + $0x98] sm:$0xff]
    %v124 = vld [vmem:[#allocation7 + $0xa0] sm:$0xff]
    %v125 = vld [vmem:[#allocation7 + $0xa8] sm:$0xff]
    %v126 = vld [vmem:[#allocation7 + $0xb0] sm:$0xff]
    %v127 = vld [vmem:[#allocation7 + $0xb8] sm:$0xff]
    %v128 = vld [vmem:[#allocation7 + $0xc0] sm:$0xff]
    %v129 = vld [vmem:[#allocation7 + $0xc8] sm:$0xff]
    %v130 = vld [vmem:[#allocation7 + $0xd0] sm:$0xff]
    %v131 = vld [vmem:[#allocation7 + $0xd8] sm:$0xff]
    %v132 = vld [vmem:[#allocation7 + $0xe0] sm:$0xff]
    %v133 = vld [vmem:[#allocation7 + $0xe8] sm:$0xff]
    %v134 = vld [vmem:[#allocation7 + $0xf0] sm:$0xff]
    %v135 = vld [vmem:[#allocation7 + $0xf8] sm:$0xff]
    %v136 = vld [vmem:[#allocation7 + $0x100] sm:$0xff]
    %v137 = vld [vmem:[#allocation7 + $0x108] sm:$0xff]
    %v138 = vld [vmem:[#allocation7 + $0x110] sm:$0xff]
    %v139 = vld [vmem:[#allocation7 + $0x118] sm:$0xff]
    %v140 = vld [vmem:[#allocation7 + $0x120] sm:$0xff]
    %v141 = vld [vmem:[#allocation7 + $0x128] sm:$0xff]
    %v142 = vld [vmem:[#allocation7 + $0x130] sm:$0xff]
    %v143 = vld [vmem:[#allocation7 + $0x138] sm:$0xff]
    %v144 = vld [vmem:[#allocation7 + $0x140] sm:$0xff]
    %v145 = vld [vmem:[#allocation7 + $0x148] sm:$0xff]
    %v146 = vld [vmem:[#allocation7 + $0x150] sm:$0xff]
    %v147 = vld [vmem:[#allocation7 + $0x158] sm:$0xff]
    %v148 = vld [vmem:[#allocation7 + $0x160] sm:$0xff]
    %v149 = vld [vmem:[#allocation7 + $0x168] sm:$0xff]
    %v150 = vld [vmem:[#allocation7 + $0x170] sm:$0xff]
    %v151 = vld [vmem:[#allocation7 + $0x178] sm:$0xff]
    %v152 = vld [vmem:[#allocation7 + $0x180] sm:$0xff]
    %v153 = vld [vmem:[#allocation7 + $0x188] sm:$0xff]
    %v154 = vld [vmem:[#allocation7 + $0x190] sm:$0xff]
    %v155 = vld [vmem:[#allocation7 + $0x198] sm:$0xff]
    %v156 = vld [vmem:[#allocation7 + $0x1a0] sm:$0xff]
    %v157 = vld [vmem:[#allocation7 + $0x1a8] sm:$0xff]
    %v158 = vld [vmem:[#allocation7 + $0x1b0] sm:$0xff]
    %v159 = vld [vmem:[#allocation7 + $0x1b8] sm:$0xff]
    %v160 = vld [vmem:[#allocation7 + $0x1c0] sm:$0xff]
    %v161 = vld [vmem:[#allocation7 + $0x1c8] sm:$0xff]
    %v162 = vld [vmem:[#allocation7 + $0x1d0] sm:$0xff]
    %v163 = vld [vmem:[#allocation7 + $0x1d8] sm:$0xff]
    %v164 = vld [vmem:[#allocation7 + $0x1e0] sm:$0xff]
    %v165 = vld [vmem:[#allocation7 + $0x1e8] sm:$0xff]
    %v166 = vld [vmem:[#allocation7 + $0x1f0] sm:$0xff]
    %v167 = vld [vmem:[#allocation7 + $0x1f8] sm:$0xff]
    %v168 = vld [vmem:[#allocation10] sm:$0xf]
    %v170 = vlaneseq
    %v171 = vshrl.u32 %v170, 7
    %v172 = vsub.s32 0, %v171
    %v173 = vrot.slane %v168, %v172
    %v174 = vlaneseq
    %v175 = vshrl.u32 %v174, 7
    %v176 = vsub.s32 1, %v175
    %v177 = vrot.slane %v168, %v176
    %v178 = vlaneseq
    %v179 = vshrl.u32 %v178, 7
    %v180 = vsub.s32 2, %v179
    %v181 = vrot.slane %v168, %v180
    %v182 = vlaneseq
    %v183 = vshrl.u32 %v182, 7
    %v184 = vsub.s32 3, %v183
    %v185 = vrot.slane %v168, %v184
    %190 = vmatprep.subr.mxu0 %v165
    %191 = vmatpush1.msra.mxu0 %v164
    %192 = vmatprep.subr.mxu0 %v161
    %193 = vmatpush1.msra.mxu0 %v160
    %194 = vmatprep.subr.mxu0 %v157
    %195 = vmatpush1.msra.mxu0 %v156
    %196 = vmatprep.subr.mxu0 %v153
    %197 = vmatpush1.msra.mxu0 %v152
    %198 = vmatprep.subr.mxu0 %v149
    %199 = vmatpush1.msra.mxu0 %v148
    %200 = vmatprep.subr.mxu0 %v145
    %201 = vmatpush1.msra.mxu0 %v144
    %202 = vmatprep.subr.mxu0 %v141
    %203 = vmatpush1.msra.mxu0 %v140
    %204 = vmatprep.subr.mxu0 %v137
    %205 = vmatpush1.msra.mxu0 %v136
    %206 = vmatprep.subr.mxu0 %v133
    %207 = vmatpush1.msra.mxu0 %v132
    %208 = vmatprep.subr.mxu0 %v129
    %209 = vmatpush1.msra.mxu0 %v128
    %210 = vmatprep.subr.mxu0 %v125
    %211 = vmatpush1.msra.mxu0 %v124
    %212 = vmatprep.subr.mxu0 %v121
    %213 = vmatpush1.msra.mxu0 %v120
    %214 = vmatprep.subr.mxu0 %v117
    %215 = vmatpush1.msra.mxu0 %v116
    %216 = vmatprep.subr.mxu0 %v113
    %217 = vmatpush1.msra.mxu0 %v112
    %218 = vmatprep.subr.mxu0 %v109
    %219 = vmatpush1.msra.mxu0 %v108
    %220 = vmatprep.subr.mxu0 %v105
    %221 = vmatpush1.msra.mxu0 %v104
    %222 = vmatprep.subr.mxu0 0.0
    %223 = vmatpush2.msra.mxu0 0.0
    %224 = vmatprep.subr.mxu0 0.0
    %225 = vmatpush2.msra.mxu0 0.0
    %226 = vmatprep.subr.mxu0 0.0
    %227 = vmatpush2.msra.mxu0 0.0
    %228 = vmatprep.subr.mxu0 0.0
    %229 = vmatpush2.msra.mxu0 0.0
    %230 = vmatprep.subr.mxu0 0.0
    %231 = vmatpush2.msra.mxu0 0.0
    %232 = vmatprep.subr.mxu0 0.0
    %233 = vmatpush2.msra.mxu0 0.0
    %234 = vmatprep.subr.mxu0 0.0
    %235 = vmatpush2.msra.mxu0 0.0
    %236 = vmatprep.subr.mxu0 0.0
    %237 = vmatpush2.msra.mxu0 0.0
    %238 = vmatprep.subr.mxu0 0.0
    %239 = vmatpush2.msra.mxu0 0.0
    %240 = vmatprep.subr.mxu0 0.0
    %241 = vmatpush2.msra.mxu0 0.0
    %242 = vmatprep.subr.mxu0 0.0
    %243 = vmatpush2.msra.mxu0 0.0
    %244 = vmatprep.subr.mxu0 0.0
    %245 = vmatpush2.msra.mxu0 0.0
    %246 = vmatprep.subr.mxu0 0.0
    %247 = vmatpush2.msra.mxu0 0.0
    %248 = vmatprep.subr.mxu0 0.0
    %249 = vmatpush2.msra.mxu0 0.0
    %250 = vmatprep.subr.mxu0 0.0
    %251 = vmatpush2.msra.mxu0 0.0
    %252 = vmatprep.subr.mxu0 0.0
    %253 = vmatpush2.msra.mxu0 0.0
    %254 = vmatprep.mubr.f32.mxu0 0.0
    %255 = vmatmul.mubr.f32.gmra.mxu0 %v96
    %v256 = vpop.f32.mrf.mxu0
    %v257 = vadd.f32 %v173, %v256
    %v258 = vpop.f32.mrf.mxu0
    %v259 = vadd.f32 %v177, %v258
    %260 = vmatprep.mubr.f32.mxu0 0.0
    %261 = vmatmul.mubr.f32.gmra.mxu0 %v97
    %v262 = vpop.f32.mrf.mxu0
    %v263 = vadd.f32 %v173, %v262
    %v264 = vpop.f32.mrf.mxu0
    %v265 = vadd.f32 %v177, %v264
    %266 = vmatprep.mubr.f32.mxu0 0.0
    %267 = vmatmul.mubr.f32.gmra.mxu0 %v98
    %v268 = vpop.f32.mrf.mxu0
    %v269 = vadd.f32 %v173, %v268
    %v270 = vpop.f32.mrf.mxu0
    %v271 = vadd.f32 %v177, %v270
    %272 = vmatprep.mubr.f32.mxu0 0.0
    %273 = vmatmul.mubr.f32.gmra.mxu0 %v99
    %v274 = vpop.f32.mrf.mxu0
    %v275 = vadd.f32 %v173, %v274
    %v276 = vpop.f32.mrf.mxu0
    %v277 = vadd.f32 %v177, %v276
    %278 = vmatprep.mubr.f32.mxu0 0.0
    %279 = vmatmul.mubr.f32.gmra.mxu0 %v100
    %v280 = vpop.f32.mrf.mxu0
    %v281 = vadd.f32 %v173, %v280
    %v282 = vpop.f32.mrf.mxu0
    %v283 = vadd.f32 %v177, %v282
    %284 = vmatprep.mubr.f32.mxu0 0.0
    %285 = vmatmul.mubr.f32.gmra.mxu0 %v101
    %v286 = vpop.f32.mrf.mxu0
    %v287 = vadd.f32 %v173, %v286
    %v288 = vpop.f32.mrf.mxu0
    %v289 = vadd.f32 %v177, %v288
    %290 = vmatprep.mubr.f32.mxu0 0.0
    %291 = vmatmul.mubr.f32.gmra.mxu0 %v102
    %v292 = vpop.f32.mrf.mxu0
    %v293 = vadd.f32 %v173, %v292
    %v294 = vpop.f32.mrf.mxu0
    %v295 = vadd.f32 %v177, %v294
    %296 = vmatprep.mubr.f32.mxu0 0.0
    %297 = vmatmul.mubr.f32.gmra.mxu0 %v103
    %v298 = vpop.f32.mrf.mxu0
    %v299 = vadd.f32 %v173, %v298
    %v300 = vpop.f32.mrf.mxu0
    %v301 = vadd.f32 %v177, %v300
    %302 = vdwg.mxu0
    %303 = vmatprep.subr.mxu0 %v167
    %304 = vmatpush1.msra.mxu0 %v166
    %305 = vmatprep.subr.mxu0 %v163
    %306 = vmatpush1.msra.mxu0 %v162
    %307 = vmatprep.subr.mxu0 %v159
    %308 = vmatpush1.msra.mxu0 %v158
    %309 = vmatprep.subr.mxu0 %v155
    %310 = vmatpush1.msra.mxu0 %v154
    %311 = vmatprep.subr.mxu0 %v151
    %312 = vmatpush1.msra.mxu0 %v150
    %313 = vmatprep.subr.mxu0 %v147
    %314 = vmatpush1.msra.mxu0 %v146
    %315 = vmatprep.subr.mxu0 %v143
    %316 = vmatpush1.msra.mxu0 %v142
    %317 = vmatprep.subr.mxu0 %v139
    %318 = vmatpush1.msra.mxu0 %v138
    %319 = vmatprep.subr.mxu0 %v135
    %320 = vmatpush1.msra.mxu0 %v134
    %321 = vmatprep.subr.mxu0 %v131
    %322 = vmatpush1.msra.mxu0 %v130
    %323 = vmatprep.subr.mxu0 %v127
    %324 = vmatpush1.msra.mxu0 %v126
    %325 = vmatprep.subr.mxu0 %v123
    %326 = vmatpush1.msra.mxu0 %v122
    %327 = vmatprep.subr.mxu0 %v119
    %328 = vmatpush1.msra.mxu0 %v118
    %329 = vmatprep.subr.mxu0 %v115
    %330 = vmatpush1.msra.mxu0 %v114
    %331 = vmatprep.subr.mxu0 %v111
    %332 = vmatpush1.msra.mxu0 %v110
    %333 = vmatprep.subr.mxu0 %v107
    %334 = vmatpush1.msra.mxu0 %v106
    %335 = vmatprep.subr.mxu0 0.0
    %336 = vmatpush2.msra.mxu0 0.0
    %337 = vmatprep.subr.mxu0 0.0
    %338 = vmatpush2.msra.mxu0 0.0
    %339 = vmatprep.subr.mxu0 0.0
    %340 = vmatpush2.msra.mxu0 0.0
    %341 = vmatprep.subr.mxu0 0.0
    %342 = vmatpush2.msra.mxu0 0.0
    %343 = vmatprep.subr.mxu0 0.0
    %344 = vmatpush2.msra.mxu0 0.0
    %345 = vmatprep.subr.mxu0 0.0
    %346 = vmatpush2.msra.mxu0 0.0
    %347 = vmatprep.subr.mxu0 0.0
    %348 = vmatpush2.msra.mxu0 0.0
    %349 = vmatprep.subr.mxu0 0.0
    %350 = vmatpush2.msra.mxu0 0.0
    %351 = vmatprep.subr.mxu0 0.0
    %352 = vmatpush2.msra.mxu0 0.0
    %353 = vmatprep.subr.mxu0 0.0
    %354 = vmatpush2.msra.mxu0 0.0
    %355 = vmatprep.subr.mxu0 0.0
    %356 = vmatpush2.msra.mxu0 0.0
    %357 = vmatprep.subr.mxu0 0.0
    %358 = vmatpush2.msra.mxu0 0.0
    %359 = vmatprep.subr.mxu0 0.0
    %360 = vmatpush2.msra.mxu0 0.0
    %361 = vmatprep.subr.mxu0 0.0
    %362 = vmatpush2.msra.mxu0 0.0
    %363 = vmatprep.subr.mxu0 0.0
    %364 = vmatpush2.msra.mxu0 0.0
    %365 = vmatprep.subr.mxu0 0.0
    %366 = vmatpush2.msra.mxu0 0.0
    %367 = vmatprep.mubr.f32.mxu0 0.0
    %368 = vmatmul.mubr.f32.gmra.mxu0 %v96
    %v369 = vpop.f32.mrf.mxu0
    %v370 = vadd.f32 %v181, %v369
    %v371 = vpop.f32.mrf.mxu0
    %v372 = vadd.f32 %v185, %v371
    %373 = vmatprep.mubr.f32.mxu0 0.0
    %374 = vmatmul.mubr.f32.gmra.mxu0 %v97
    %v375 = vpop.f32.mrf.mxu0
    %v376 = vadd.f32 %v181, %v375
    %v377 = vpop.f32.mrf.mxu0
    %v378 = vadd.f32 %v185, %v377
    %379 = vmatprep.mubr.f32.mxu0 0.0
    %380 = vmatmul.mubr.f32.gmra.mxu0 %v98
    %v381 = vpop.f32.mrf.mxu0
    %v382 = vadd.f32 %v181, %v381
    %v383 = vpop.f32.mrf.mxu0
    %v384 = vadd.f32 %v185, %v383
    %385 = vmatprep.mubr.f32.mxu0 0.0
    %386 = vmatmul.mubr.f32.gmra.mxu0 %v99
    %v387 = vpop.f32.mrf.mxu0
    %v388 = vadd.f32 %v181, %v387
    %v389 = vpop.f32.mrf.mxu0
    %v390 = vadd.f32 %v185, %v389
    %391 = vmatprep.mubr.f32.mxu0 0.0
    %392 = vmatmul.mubr.f32.gmra.mxu0 %v100
    %v393 = vpop.f32.mrf.mxu0
    %v394 = vadd.f32 %v181, %v393
    %v395 = vpop.f32.mrf.mxu0
    %v396 = vadd.f32 %v185, %v395
    %397 = vmatprep.mubr.f32.mxu0 0.0
    %398 = vmatmul.mubr.f32.gmra.mxu0 %v101
    %v399 = vpop.f32.mrf.mxu0
    %v400 = vadd.f32 %v181, %v399
    %v401 = vpop.f32.mrf.mxu0
    %v402 = vadd.f32 %v185, %v401
    %403 = vmatprep.mubr.f32.mxu0 0.0
    %404 = vmatmul.mubr.f32.gmra.mxu0 %v102
    %v405 = vpop.f32.mrf.mxu0
    %v406 = vadd.f32 %v181, %v405
    %v407 = vpop.f32.mrf.mxu0
    %v408 = vadd.f32 %v185, %v407
    %409 = vmatprep.mubr.f32.mxu0 0.0
    %410 = vmatmul.mubr.f32.gmra.mxu0 %v103
    %v411 = vpop.f32.mrf.mxu0
    %v412 = vadd.f32 %v181, %v411
    %v413 = vpop.f32.mrf.mxu0
    %v414 = vadd.f32 %v185, %v413
    %415 = vdwg.mxu0
    %416 = vst [vmem:[#allocation3] sm:$0xff] %v257
    %417 = vst [vmem:[#allocation3 + $0x8] sm:$0xff] %v259
    %418 = vst [vmem:[#allocation3 + $0x10] sm:$0xff] %v370
    %419 = vst [vmem:[#allocation3 + $0x18] sm:$0xff] %v372
    %420 = vst [vmem:[#allocation3 + $0x20] sm:$0xff] %v263
    %421 = vst [vmem:[#allocation3 + $0x28] sm:$0xff] %v265
    %422 = vst [vmem:[#allocation3 + $0x30] sm:$0xff] %v376
    %423 = vst [vmem:[#allocation3 + $0x38] sm:$0xff] %v378
    %424 = vst [vmem:[#allocation3 + $0x40] sm:$0xff] %v269
    %425 = vst [vmem:[#allocation3 + $0x48] sm:$0xff] %v271
    %426 = vst [vmem:[#allocation3 + $0x50] sm:$0xff] %v382
    %427 = vst [vmem:[#allocation3 + $0x58] sm:$0xff] %v384
    %428 = vst [vmem:[#allocation3 + $0x60] sm:$0xff] %v275
    %429 = vst [vmem:[#allocation3 + $0x68] sm:$0xff] %v277
    %430 = vst [vmem:[#allocation3 + $0x70] sm:$0xff] %v388
    %431 = vst [vmem:[#allocation3 + $0x78] sm:$0xff] %v390
    %432 = vst [vmem:[#allocation3 + $0x80] sm:$0xff] %v281
    %433 = vst [vmem:[#allocation3 + $0x88] sm:$0xff] %v283
    %434 = vst [vmem:[#allocation3 + $0x90] sm:$0xff] %v394
    %435 = vst [vmem:[#allocation3 + $0x98] sm:$0xff] %v396
    %436 = vst [vmem:[#allocation3 + $0xa0] sm:$0xff] %v287
    %437 = vst [vmem:[#allocation3 + $0xa8] sm:$0xff] %v289
    %438 = vst [vmem:[#allocation3 + $0xb0] sm:$0xff] %v400
    %439 = vst [vmem:[#allocation3 + $0xb8] sm:$0xff] %v402
    %440 = vst [vmem:[#allocation3 + $0xc0] sm:$0xff] %v293
    %441 = vst [vmem:[#allocation3 + $0xc8] sm:$0xff] %v295
    %442 = vst [vmem:[#allocation3 + $0xd0] sm:$0xff] %v406
    %443 = vst [vmem:[#allocation3 + $0xd8] sm:$0xff] %v408
    %444 = vst [vmem:[#allocation3 + $0xe0] sm:$0xff] %v299
    %445 = vst [vmem:[#allocation3 + $0xe8] sm:$0xff] %v301
    %446 = vst [vmem:[#allocation3 + $0xf0] sm:$0xff] %v412
    %447 = vst [vmem:[#allocation3 + $0xf8] sm:$0xff] %v414
    %v448 = vld [vmem:[#allocation3] sm:$0xff]
    %v449 = vld [vmem:[#allocation3 + $0x8] sm:$0xff]
    %v450 = vld [vmem:[#allocation3 + $0x10] sm:$0xff]
    %v451 = vld [vmem:[#allocation3 + $0x18] sm:$0xff]
    %v452 = vld [vmem:[#allocation9] sm:$0xff]
    %v453 = vld [vmem:[#allocation9 + $0x8] sm:$0xff]
    %v454 = vld [vmem:[#allocation9 + $0x10] sm:$0xff]
    %v455 = vld [vmem:[#allocation9 + $0x18] sm:$0xff]
    %v456 = vld [vmem:[#allocation9 + $0x20] sm:$0xff]
    %v457 = vld [vmem:[#allocation9 + $0x28] sm:$0xff]
    %v458 = vld [vmem:[#allocation9 + $0x30] sm:$0xff]
    %v459 = vld [vmem:[#allocation9 + $0x38] sm:$0xff]
    %v460 = vld [vmem:[#allocation9 + $0x40] sm:$0xff]
    %v461 = vld [vmem:[#allocation9 + $0x48] sm:$0xff]
    %v462 = vld [vmem:[#allocation9 + $0x50] sm:$0xff]
    %v463 = vld [vmem:[#allocation9 + $0x58] sm:$0xff]
    %v464 = vld [vmem:[#allocation9 + $0x60] sm:$0xff]
    %v465 = vld [vmem:[#allocation9 + $0x68] sm:$0xff]
    %v466 = vld [vmem:[#allocation9 + $0x70] sm:$0xff]
    %v467 = vld [vmem:[#allocation9 + $0x78] sm:$0xff]
    %v468 = vld [vmem:[#allocation9 + $0x80] sm:$0xff]
    %v469 = vld [vmem:[#allocation9 + $0x88] sm:$0xff]
    %v470 = vld [vmem:[#allocation9 + $0x90] sm:$0xff]
    %v471 = vld [vmem:[#allocation9 + $0x98] sm:$0xff]
    %v472 = vld [vmem:[#allocation9 + $0xa0] sm:$0xff]
    %v473 = vld [vmem:[#allocation9 + $0xa8] sm:$0xff]
    %v474 = vld [vmem:[#allocation9 + $0xb0] sm:$0xff]
    %v475 = vld [vmem:[#allocation9 + $0xb8] sm:$0xff]
    %v476 = vld [vmem:[#allocation9 + $0xc0] sm:$0xff]
    %v477 = vld [vmem:[#allocation9 + $0xc8] sm:$0xff]
    %v478 = vld [vmem:[#allocation9 + $0xd0] sm:$0xff]
    %v479 = vld [vmem:[#allocation9 + $0xd8] sm:$0xff]
    %v480 = vld [vmem:[#allocation9 + $0xe0] sm:$0xff]
    %v481 = vld [vmem:[#allocation9 + $0xe8] sm:$0xff]
    %v482 = vld [vmem:[#allocation9 + $0xf0] sm:$0xff]
    %v483 = vld [vmem:[#allocation9 + $0xf8] sm:$0xff]
    %v484 = vld [vmem:[#allocation9 + $0x100] sm:$0xff]
    %v485 = vld [vmem:[#allocation9 + $0x108] sm:$0xff]
    %v486 = vld [vmem:[#allocation9 + $0x110] sm:$0xff]
    %v487 = vld [vmem:[#allocation9 + $0x118] sm:$0xff]
    %v488 = vld [vmem:[#allocation9 + $0x120] sm:$0xff]
    %v489 = vld [vmem:[#allocation9 + $0x128] sm:$0xff]
    %v490 = vld [vmem:[#allocation9 + $0x130] sm:$0xff]
    %v491 = vld [vmem:[#allocation9 + $0x138] sm:$0xff]
    %v492 = vld [vmem:[#allocation9 + $0x140] sm:$0xff]
    %v493 = vld [vmem:[#allocation9 + $0x148] sm:$0xff]
    %v494 = vld [vmem:[#allocation9 + $0x150] sm:$0xff]
    %v495 = vld [vmem:[#allocation9 + $0x158] sm:$0xff]
    %v496 = vld [vmem:[#allocation9 + $0x160] sm:$0xff]
    %v497 = vld [vmem:[#allocation9 + $0x168] sm:$0xff]
    %v498 = vld [vmem:[#allocation9 + $0x170] sm:$0xff]
    %v499 = vld [vmem:[#allocation9 + $0x178] sm:$0xff]
    %v500 = vld [vmem:[#allocation9 + $0x180] sm:$0xff]
    %v501 = vld [vmem:[#allocation9 + $0x188] sm:$0xff]
    %v502 = vld [vmem:[#allocation9 + $0x190] sm:$0xff]
    %v503 = vld [vmem:[#allocation9 + $0x198] sm:$0xff]
    %v504 = vld [vmem:[#allocation9 + $0x1a0] sm:$0xff]
    %v505 = vld [vmem:[#allocation9 + $0x1a8] sm:$0xff]
    %v506 = vld [vmem:[#allocation9 + $0x1b0] sm:$0xff]
    %v507 = vld [vmem:[#allocation9 + $0x1b8] sm:$0xff]
    %v508 = vld [vmem:[#allocation9 + $0x1c0] sm:$0xff]
    %v509 = vld [vmem:[#allocation9 + $0x1c8] sm:$0xff]
    %v510 = vld [vmem:[#allocation9 + $0x1d0] sm:$0xff]
    %v511 = vld [vmem:[#allocation9 + $0x1d8] sm:$0xff]
    %v512 = vld [vmem:[#allocation9 + $0x1e0] sm:$0xff]
    %v513 = vld [vmem:[#allocation9 + $0x1e8] sm:$0xff]
    %v514 = vld [vmem:[#allocation9 + $0x1f0] sm:$0xff]
    %v515 = vld [vmem:[#allocation9 + $0x1f8] sm:$0xff]
    %516 = vmatprep.subr.mxu0 %v513
    %517 = vmatpush1.msra.mxu0 %v512
    %518 = vmatprep.subr.mxu0 %v509
    %519 = vmatpush1.msra.mxu0 %v508
    %520 = vmatprep.subr.mxu0 %v505
    %521 = vmatpush1.msra.mxu0 %v504
    %522 = vmatprep.subr.mxu0 %v501
    %523 = vmatpush1.msra.mxu0 %v500
    %524 = vmatprep.subr.mxu0 %v497
    %525 = vmatpush1.msra.mxu0 %v496
    %526 = vmatprep.subr.mxu0 %v493
    %527 = vmatpush1.msra.mxu0 %v492
    %528 = vmatprep.subr.mxu0 %v489
    %529 = vmatpush1.msra.mxu0 %v488
    %530 = vmatprep.subr.mxu0 %v485
    %531 = vmatpush1.msra.mxu0 %v484
    %532 = vmatprep.subr.mxu0 %v481
    %533 = vmatpush1.msra.mxu0 %v480
    %534 = vmatprep.subr.mxu0 %v477
    %535 = vmatpush1.msra.mxu0 %v476
    %536 = vmatprep.subr.mxu0 %v473
    %537 = vmatpush1.msra.mxu0 %v472
    %538 = vmatprep.subr.mxu0 %v469
    %539 = vmatpush1.msra.mxu0 %v468
    %540 = vmatprep.subr.mxu0 %v465
    %541 = vmatpush1.msra.mxu0 %v464
    %542 = vmatprep.subr.mxu0 %v461
    %543 = vmatpush1.msra.mxu0 %v460
    %544 = vmatprep.subr.mxu0 %v457
    %545 = vmatpush1.msra.mxu0 %v456
    %546 = vmatprep.subr.mxu0 %v453
    %547 = vmatpush1.msra.mxu0 %v452
    %548 = vmatprep.subr.mxu0 0.0
    %549 = vmatpush2.msra.mxu0 0.0
    %550 = vmatprep.subr.mxu0 0.0
    %551 = vmatpush2.msra.mxu0 0.0
    %552 = vmatprep.subr.mxu0 0.0
    %553 = vmatpush2.msra.mxu0 0.0
    %554 = vmatprep.subr.mxu0 0.0
    %555 = vmatpush2.msra.mxu0 0.0
    %556 = vmatprep.subr.mxu0 0.0
    %557 = vmatpush2.msra.mxu0 0.0
    %558 = vmatprep.subr.mxu0 0.0
    %559 = vmatpush2.msra.mxu0 0.0
    %560 = vmatprep.subr.mxu0 0.0
    %561 = vmatpush2.msra.mxu0 0.0
    %562 = vmatprep.subr.mxu0 0.0
    %563 = vmatpush2.msra.mxu0 0.0
    %564 = vmatprep.subr.mxu0 0.0
    %565 = vmatpush2.msra.mxu0 0.0
    %566 = vmatprep.subr.mxu0 0.0
    %567 = vmatpush2.msra.mxu0 0.0
    %568 = vmatprep.subr.mxu0 0.0
    %569 = vmatpush2.msra.mxu0 0.0
    %570 = vmatprep.subr.mxu0 0.0
    %571 = vmatpush2.msra.mxu0 0.0
    %572 = vmatprep.subr.mxu0 0.0
    %573 = vmatpush2.msra.mxu0 0.0
    %574 = vmatprep.subr.mxu0 0.0
    %575 = vmatpush2.msra.mxu0 0.0
    %576 = vmatprep.subr.mxu0 0.0
    %577 = vmatpush2.msra.mxu0 0.0
    %578 = vmatprep.subr.mxu0 0.0
    %579 = vmatpush2.msra.mxu0 0.0
    %580 = vmatprep.mubr.f32.mxu0 0.0
    %581 = vmatmul.mubr.f32.gmra.mxu0 0.0
    %v582 = vpop.f32.mrf.mxu0
    %v583 = vadd.f32 0.0, %v582
    %v584 = vpop.f32.mrf.mxu0
    %v585 = vadd.f32 0.0, %v584
    %586 = vdwg.mxu0
    %587 = vmatprep.subr.mxu0 %v515
    %588 = vmatpush1.msra.mxu0 %v514
    %589 = vmatprep.subr.mxu0 %v511
    %590 = vmatpush1.msra.mxu0 %v510
    %591 = vmatprep.subr.mxu0 %v507
    %592 = vmatpush1.msra.mxu0 %v506
    %593 = vmatprep.subr.mxu0 %v503
    %594 = vmatpush1.msra.mxu0 %v502
    %595 = vmatprep.subr.mxu0 %v499
    %596 = vmatpush1.msra.mxu0 %v498
    %597 = vmatprep.subr.mxu0 %v495
    %598 = vmatpush1.msra.mxu0 %v494
    %599 = vmatprep.subr.mxu0 %v491
    %600 = vmatpush1.msra.mxu0 %v490
    %601 = vmatprep.subr.mxu0 %v487
    %602 = vmatpush1.msra.mxu0 %v486
    %603 = vmatprep.subr.mxu0 %v483
    %604 = vmatpush1.msra.mxu0 %v482
    %605 = vmatprep.subr.mxu0 %v479
    %606 = vmatpush1.msra.mxu0 %v478
    %607 = vmatprep.subr.mxu0 %v475
    %608 = vmatpush1.msra.mxu0 %v474
    %609 = vmatprep.subr.mxu0 %v471
    %610 = vmatpush1.msra.mxu0 %v470
    %611 = vmatprep.subr.mxu0 %v467
    %612 = vmatpush1.msra.mxu0 %v466
    %613 = vmatprep.subr.mxu0 %v463
    %614 = vmatpush1.msra.mxu0 %v462
    %615 = vmatprep.subr.mxu0 %v459
    %616 = vmatpush1.msra.mxu0 %v458
    %617 = vmatprep.subr.mxu0 %v455
    %618 = vmatpush1.msra.mxu0 %v454
    %619 = vmatprep.subr.mxu0 0.0
    %620 = vmatpush2.msra.mxu0 0.0
    %621 = vmatprep.subr.mxu0 0.0
    %622 = vmatpush2.msra.mxu0 0.0
    %623 = vmatprep.subr.mxu0 0.0
    %624 = vmatpush2.msra.mxu0 0.0
    %625 = vmatprep.subr.mxu0 0.0
    %626 = vmatpush2.msra.mxu0 0.0
    %627 = vmatprep.subr.mxu0 0.0
    %628 = vmatpush2.msra.mxu0 0.0
    %629 = vmatprep.subr.mxu0 0.0
    %630 = vmatpush2.msra.mxu0 0.0
    %631 = vmatprep.subr.mxu0 0.0
    %632 = vmatpush2.msra.mxu0 0.0
    %633 = vmatprep.subr.mxu0 0.0
    %634 = vmatpush2.msra.mxu0 0.0
    %635 = vmatprep.subr.mxu0 0.0
    %636 = vmatpush2.msra.mxu0 0.0
    %637 = vmatprep.subr.mxu0 0.0
    %638 = vmatpush2.msra.mxu0 0.0
    %639 = vmatprep.subr.mxu0 0.0
    %640 = vmatpush2.msra.mxu0 0.0
    %641 = vmatprep.subr.mxu0 0.0
    %642 = vmatpush2.msra.mxu0 0.0
    %643 = vmatprep.subr.mxu0 0.0
    %644 = vmatpush2.msra.mxu0 0.0
    %645 = vmatprep.subr.mxu0 0.0
    %646 = vmatpush2.msra.mxu0 0.0
    %647 = vmatprep.subr.mxu0 0.0
    %648 = vmatpush2.msra.mxu0 0.0
    %649 = vmatprep.subr.mxu0 0.0
    %650 = vmatpush2.msra.mxu0 0.0
    %651 = vmatprep.mubr.f32.mxu0 0.0
    %652 = vmatmul.mubr.f32.gmra.mxu0 0.0
    %v653 = vpop.f32.mrf.mxu0
    %v654 = vadd.f32 0.0, %v653
    %v655 = vpop.f32.mrf.mxu0
    %v656 = vadd.f32 0.0, %v655
    %657 = vdwg.mxu0
    %v658 = vadd.f32 %v448, %v583
    %v659 = vadd.f32 %v449, %v585
    %v660 = vadd.f32 %v450, %v654
    %v661 = vadd.f32 %v451, %v656
    %v662 = vxor.u32 %v658, 2147483648
    %v663 = vmul.f32 %v662, 1.442695
    %v664 = vpow.pop %v663
    %v665 = vadd.f32 %v664, 1.0
    %v666 = vrcp.pop %v665
    %v667 = vmul.f32 1.0, %v666
    %v668 = vxor.u32 %v659, 2147483648
    %v669 = vmul.f32 %v668, 1.442695
    %v670 = vpow.pop %v669
    %v671 = vadd.f32 %v670, 1.0
    %v672 = vrcp.pop %v671
    %v673 = vmul.f32 1.0, %v672
    %v674 = vtanh.pop %v660
    %v675 = vxor.u32 %v661, 2147483648
    %v676 = vmul.f32 %v675, 1.442695
    %v677 = vpow.pop %v676
    %v678 = vadd.f32 %v677, 1.0
    %v679 = vrcp.pop %v678
    %v680 = vmul.f32 1.0, %v679
    %v681 = vmul.f32 %v673, 0.0
    %v682 = vmul.f32 %v667, %v674
    %v683 = vadd.f32 %v681, %v682
    %v684 = vtanh.pop %v683
    %v685 = vmul.f32 %v680, %v684
    %686 = vst [vmem:[#allocation2] sm:$0xff] %v685
    %s687 = scalar_lea.vmem [#allocation3], 32
    %v688 = vld [vmem:[%s687] sm:$0xff]
    %v689 = vld [vmem:[%s687 + $0x8] sm:$0xff]
    %v690 = vld [vmem:[%s687 + $0x10] sm:$0xff]
    %v691 = vld [vmem:[%s687 + $0x18] sm:$0xff]
    %v692 = vld [vmem:[#allocation9] sm:$0xff]
    %v693 = vld [vmem:[#allocation9 + $0x8] sm:$0xff]
    %v694 = vld [vmem:[#allocation9 + $0x10] sm:$0xff]
    %v695 = vld [vmem:[#allocation9 + $0x18] sm:$0xff]
    %v696 = vld [vmem:[#allocation9 + $0x20] sm:$0xff]
    %v697 = vld [vmem:[#allocation9 + $0x28] sm:$0xff]
    %v698 = vld [vmem:[#allocation9 + $0x30] sm:$0xff]
    %v699 = vld [vmem:[#allocation9 + $0x38] sm:$0xff]
    %v700 = vld [vmem:[#allocation9 + $0x40] sm:$0xff]
    %v701 = vld [vmem:[#allocation9 + $0x48] sm:$0xff]
    %v702 = vld [vmem:[#allocation9 + $0x50] sm:$0xff]
    %v703 = vld [vmem:[#allocation9 + $0x58] sm:$0xff]
    %v704 = vld [vmem:[#allocation9 + $0x60] sm:$0xff]
    %v705 = vld [vmem:[#allocation9 + $0x68] sm:$0xff]
    %v706 = vld [vmem:[#allocation9 + $0x70] sm:$0xff]
    %v707 = vld [vmem:[#allocation9 + $0x78] sm:$0xff]
    %v708 = vld [vmem:[#allocation9 + $0x80] sm:$0xff]
    %v709 = vld [vmem:[#allocation9 + $0x88] sm:$0xff]
    %v710 = vld [vmem:[#allocation9 + $0x90] sm:$0xff]
    %v711 = vld [vmem:[#allocation9 + $0x98] sm:$0xff]
    %v712 = vld [vmem:[#allocation9 + $0xa0] sm:$0xff]
    %v713 = vld [vmem:[#allocation9 + $0xa8] sm:$0xff]
    %v714 = vld [vmem:[#allocation9 + $0xb0] sm:$0xff]
    %v715 = vld [vmem:[#allocation9 + $0xb8] sm:$0xff]
    %v716 = vld [vmem:[#allocation9 + $0xc0] sm:$0xff]
    %v717 = vld [vmem:[#allocation9 + $0xc8] sm:$0xff]
    %v718 = vld [vmem:[#allocation9 + $0xd0] sm:$0xff]
    %v719 = vld [vmem:[#allocation9 + $0xd8] sm:$0xff]
    %v720 = vld [vmem:[#allocation9 + $0xe0] sm:$0xff]
    %v721 = vld [vmem:[#allocation9 + $0xe8] sm:$0xff]
    %v722 = vld [vmem:[#allocation9 + $0xf0] sm:$0xff]
    %v723 = vld [vmem:[#allocation9 + $0xf8] sm:$0xff]
    %v724 = vld [vmem:[#allocation9 + $0x100] sm:$0xff]
    %v725 = vld [vmem:[#allocation9 + $0x108] sm:$0xff]
    %v726 = vld [vmem:[#allocation9 + $0x110] sm:$0xff]
    %v727 = vld [vmem:[#allocation9 + $0x118] sm:$0xff]
    %v728 = vld [vmem:[#allocation9 + $0x120] sm:$0xff]
    %v729 = vld [vmem:[#allocation9 + $0x128] sm:$0xff]
    %v730 = vld [vmem:[#allocation9 + $0x130] sm:$0xff]
    %v731 = vld [vmem:[#allocation9 + $0x138] sm:$0xff]
    %v732 = vld [vmem:[#allocation9 + $0x140] sm:$0xff]
    %v733 = vld [vmem:[#allocation9 + $0x148] sm:$0xff]
    %v734 = vld [vmem:[#allocation9 + $0x150] sm:$0xff]
    %v735 = vld [vmem:[#allocation9 + $0x158] sm:$0xff]
    %v736 = vld [vmem:[#allocation9 + $0x160] sm:$0xff]
    %v737 = vld [vmem:[#allocation9 + $0x168] sm:$0xff]
    %v738 = vld [vmem:[#allocation9 + $0x170] sm:$0xff]
    %v739 = vld [vmem:[#allocation9 + $0x178] sm:$0xff]
    %v740 = vld [vmem:[#allocation9 + $0x180] sm:$0xff]
    %v741 = vld [vmem:[#allocation9 + $0x188] sm:$0xff]
    %v742 = vld [vmem:[#allocation9 + $0x190] sm:$0xff]
    %v743 = vld [vmem:[#allocation9 + $0x198] sm:$0xff]
    %v744 = vld [vmem:[#allocation9 + $0x1a0] sm:$0xff]
    %v745 = vld [vmem:[#allocation9 + $0x1a8] sm:$0xff]
    %v746 = vld [vmem:[#allocation9 + $0x1b0] sm:$0xff]
    %v747 = vld [vmem:[#allocation9 + $0x1b8] sm:$0xff]
    %v748 = vld [vmem:[#allocation9 + $0x1c0] sm:$0xff]
    %v749 = vld [vmem:[#allocation9 + $0x1c8] sm:$0xff]
    %v750 = vld [vmem:[#allocation9 + $0x1d0] sm:$0xff]
    %v751 = vld [vmem:[#allocation9 + $0x1d8] sm:$0xff]
    %v752 = vld [vmem:[#allocation9 + $0x1e0] sm:$0xff]
    %v753 = vld [vmem:[#allocation9 + $0x1e8] sm:$0xff]
    %v754 = vld [vmem:[#allocation9 + $0x1f0] sm:$0xff]
    %v755 = vld [vmem:[#allocation9 + $0x1f8] sm:$0xff]
    %756 = vmatprep.subr.mxu0 %v753
    %757 = vmatpush1.msra.mxu0 %v752
    %758 = vmatprep.subr.mxu0 %v749
    %759 = vmatpush1.msra.mxu0 %v748
    %760 = vmatprep.subr.mxu0 %v745
    %761 = vmatpush1.msra.mxu0 %v744
    %762 = vmatprep.subr.mxu0 %v741
    %763 = vmatpush1.msra.mxu0 %v740
    %764 = vmatprep.subr.mxu0 %v737
    %765 = vmatpush1.msra.mxu0 %v736
    %766 = vmatprep.subr.mxu0 %v733
    %767 = vmatpush1.msra.mxu0 %v732
    %768 = vmatprep.subr.mxu0 %v729
    %769 = vmatpush1.msra.mxu0 %v728
    %770 = vmatprep.subr.mxu0 %v725
    %771 = vmatpush1.msra.mxu0 %v724
    %772 = vmatprep.subr.mxu0 %v721
    %773 = vmatpush1.msra.mxu0 %v720
    %774 = vmatprep.subr.mxu0 %v717
    %775 = vmatpush1.msra.mxu0 %v716
    %776 = vmatprep.subr.mxu0 %v713
    %777 = vmatpush1.msra.mxu0 %v712
    %778 = vmatprep.subr.mxu0 %v709
    %779 = vmatpush1.msra.mxu0 %v708
    %780 = vmatprep.subr.mxu0 %v705
    %781 = vmatpush1.msra.mxu0 %v704
    %782 = vmatprep.subr.mxu0 %v701
    %783 = vmatpush1.msra.mxu0 %v700
    %784 = vmatprep.subr.mxu0 %v697
    %785 = vmatpush1.msra.mxu0 %v696
    %786 = vmatprep.subr.mxu0 %v693
    %787 = vmatpush1.msra.mxu0 %v692
    %788 = vmatprep.subr.mxu0 0.0
    %789 = vmatpush2.msra.mxu0 0.0
    %790 = vmatprep.subr.mxu0 0.0
    %791 = vmatpush2.msra.mxu0 0.0
    %792 = vmatprep.subr.mxu0 0.0
    %793 = vmatpush2.msra.mxu0 0.0
    %794 = vmatprep.subr.mxu0 0.0
    %795 = vmatpush2.msra.mxu0 0.0
    %796 = vmatprep.subr.mxu0 0.0
    %797 = vmatpush2.msra.mxu0 0.0
    %798 = vmatprep.subr.mxu0 0.0
    %799 = vmatpush2.msra.mxu0 0.0
    %800 = vmatprep.subr.mxu0 0.0
    %801 = vmatpush2.msra.mxu0 0.0
    %802 = vmatprep.subr.mxu0 0.0
    %803 = vmatpush2.msra.mxu0 0.0
    %804 = vmatprep.subr.mxu0 0.0
    %805 = vmatpush2.msra.mxu0 0.0
    %806 = vmatprep.subr.mxu0 0.0
    %807 = vmatpush2.msra.mxu0 0.0
    %808 = vmatprep.subr.mxu0 0.0
    %809 = vmatpush2.msra.mxu0 0.0
    %810 = vmatprep.subr.mxu0 0.0
    %811 = vmatpush2.msra.mxu0 0.0
    %812 = vmatprep.subr.mxu0 0.0
    %813 = vmatpush2.msra.mxu0 0.0
    %814 = vmatprep.subr.mxu0 0.0
    %815 = vmatpush2.msra.mxu0 0.0
    %816 = vmatprep.subr.mxu0 0.0
    %817 = vmatpush2.msra.mxu0 0.0
    %818 = vmatprep.subr.mxu0 0.0
    %819 = vmatpush2.msra.mxu0 0.0
    %820 = vmatprep.mubr.f32.mxu0 0.0
    %821 = vmatmul.mubr.f32.gmra.mxu0 %v685
    %v822 = vpop.f32.mrf.mxu0
    %v823 = vadd.f32 0.0, %v822
    %v824 = vpop.f32.mrf.mxu0
    %v825 = vadd.f32 0.0, %v824
    %826 = vdwg.mxu0
    %827 = vmatprep.subr.mxu0 %v755
    %828 = vmatpush1.msra.mxu0 %v754
    %829 = vmatprep.subr.mxu0 %v751
    %830 = vmatpush1.msra.mxu0 %v750
    %831 = vmatprep.subr.mxu0 %v747
    %832 = vmatpush1.msra.mxu0 %v746
    %833 = vmatprep.subr.mxu0 %v743
    %834 = vmatpush1.msra.mxu0 %v742
    %835 = vmatprep.subr.mxu0 %v739
    %836 = vmatpush1.msra.mxu0 %v738
    %837 = vmatprep.subr.mxu0 %v735
    %838 = vmatpush1.msra.mxu0 %v734
    %839 = vmatprep.subr.mxu0 %v731
    %840 = vmatpush1.msra.mxu0 %v730
    %841 = vmatprep.subr.mxu0 %v727
    %842 = vmatpush1.msra.mxu0 %v726
    %843 = vmatprep.subr.mxu0 %v723
    %844 = vmatpush1.msra.mxu0 %v722
    %845 = vmatprep.subr.mxu0 %v719
    %846 = vmatpush1.msra.mxu0 %v718
    %847 = vmatprep.subr.mxu0 %v715
    %848 = vmatpush1.msra.mxu0 %v714
    %849 = vmatprep.subr.mxu0 %v711
    %850 = vmatpush1.msra.mxu0 %v710
    %851 = vmatprep.subr.mxu0 %v707
    %852 = vmatpush1.msra.mxu0 %v706
    %853 = vmatprep.subr.mxu0 %v703
    %854 = vmatpush1.msra.mxu0 %v702
    %855 = vmatprep.subr.mxu0 %v699
    %856 = vmatpush1.msra.mxu0 %v698
    %857 = vmatprep.subr.mxu0 %v695
    %858 = vmatpush1.msra.mxu0 %v694
    %859 = vmatprep.subr.mxu0 0.0
    %860 = vmatpush2.msra.mxu0 0.0
    %861 = vmatprep.subr.mxu0 0.0
    %862 = vmatpush2.msra.mxu0 0.0
    %863 = vmatprep.subr.mxu0 0.0
    %864 = vmatpush2.msra.mxu0 0.0
    %865 = vmatprep.subr.mxu0 0.0
    %866 = vmatpush2.msra.mxu0 0.0
    %867 = vmatprep.subr.mxu0 0.0
    %868 = vmatpush2.msra.mxu0 0.0
    %869 = vmatprep.subr.mxu0 0.0
    %870 = vmatpush2.msra.mxu0 0.0
    %871 = vmatprep.subr.mxu0 0.0
    %872 = vmatpush2.msra.mxu0 0.0
    %873 = vmatprep.subr.mxu0 0.0
    %874 = vmatpush2.msra.mxu0 0.0
    %875 = vmatprep.subr.mxu0 0.0
    %876 = vmatpush2.msra.mxu0 0.0
    %877 = vmatprep.subr.mxu0 0.0
    %878 = vmatpush2.msra.mxu0 0.0
    %879 = vmatprep.subr.mxu0 0.0
    %880 = vmatpush2.msra.mxu0 0.0
    %881 = vmatprep.subr.mxu0 0.0
    %882 = vmatpush2.msra.mxu0 0.0
    %883 = vmatprep.subr.mxu0 0.0
    %884 = vmatpush2.msra.mxu0 0.0
    %885 = vmatprep.subr.mxu0 0.0
    %886 = vmatpush2.msra.mxu0 0.0
    %887 = vmatprep.subr.mxu0 0.0
    %888 = vmatpush2.msra.mxu0 0.0
    %889 = vmatprep.subr.mxu0 0.0
    %890 = vmatpush2.msra.mxu0 0.0
    %891 = vmatprep.mubr.f32.mxu0 0.0
    %892 = vmatmul.mubr.f32.gmra.mxu0 %v685
    %v893 = vpop.f32.mrf.mxu0
    %v894 = vadd.f32 0.0, %v893
    %v895 = vpop.f32.mrf.mxu0
    %v896 = vadd.f32 0.0, %v895
    %897 = vdwg.mxu0
    %v898 = vadd.f32 %v688, %v823
    %v899 = vadd.f32 %v689, %v825
    %v900 = vadd.f32 %v690, %v894
    %v901 = vadd.f32 %v691, %v896
    %v902 = vxor.u32 %v898, 2147483648
    %v903 = vmul.f32 %v902, 1.442695
    %v904 = vpow.pop %v903
    %v905 = vadd.f32 %v904, 1.0
    %v906 = vrcp.pop %v905
    %v907 = vmul.f32 1.0, %v906
    %v908 = vxor.u32 %v899, 2147483648
    %v909 = vmul.f32 %v908, 1.442695
    %v910 = vpow.pop %v909
    %v911 = vadd.f32 %v910, 1.0
    %v912 = vrcp.pop %v911
    %v913 = vmul.f32 1.0, %v912
    %v914 = vtanh.pop %v900
    %v915 = vxor.u32 %v901, 2147483648
    %v916 = vmul.f32 %v915, 1.442695
    %v917 = vpow.pop %v916
    %v918 = vadd.f32 %v917, 1.0
    %v919 = vrcp.pop %v918
    %v920 = vmul.f32 1.0, %v919
    %v921 = vmul.f32 %v913, %v683
    %v922 = vmul.f32 %v907, %v914
    %v923 = vadd.f32 %v921, %v922
    %v924 = vtanh.pop %v923
    %v925 = vmul.f32 %v920, %v924
    %s926 = scalar_lea.vmem [#allocation2], 8
    %927 = vst [vmem:[%s926] sm:$0xff] %v925
    %s928 = scalar_lea.vmem [#allocation3], 64
    %v929 = vld [vmem:[%s928] sm:$0xff]
    %v930 = vld [vmem:[%s928 + $0x8] sm:$0xff]
    %v931 = vld [vmem:[%s928 + $0x10] sm:$0xff]
    %v932 = vld [vmem:[%s928 + $0x18] sm:$0xff]
    %v933 = vld [vmem:[#allocation9] sm:$0xff]
    %v934 = vld [vmem:[#allocation9 + $0x8] sm:$0xff]
    %v935 = vld [vmem:[#allocation9 + $0x10] sm:$0xff]
    %v936 = vld [vmem:[#allocation9 + $0x18] sm:$0xff]
    %v937 = vld [vmem:[#allocation9 + $0x20] sm:$0xff]
    %v938 = vld [vmem:[#allocation9 + $0x28] sm:$0xff]
    %v939 = vld [vmem:[#allocation9 + $0x30] sm:$0xff]
    %v940 = vld [vmem:[#allocation9 + $0x38] sm:$0xff]
    %v941 = vld [vmem:[#allocation9 + $0x40] sm:$0xff]
    %v942 = vld [vmem:[#allocation9 + $0x48] sm:$0xff]
    %v943 = vld [vmem:[#allocation9 + $0x50] sm:$0xff]
    %v944 = vld [vmem:[#allocation9 + $0x58] sm:$0xff]
    %v945 = vld [vmem:[#allocation9 + $0x60] sm:$0xff]
    %v946 = vld [vmem:[#allocation9 + $0x68] sm:$0xff]
    %v947 = vld [vmem:[#allocation9 + $0x70] sm:$0xff]
    %v948 = vld [vmem:[#allocation9 + $0x78] sm:$0xff]
    %v949 = vld [vmem:[#allocation9 + $0x80] sm:$0xff]
    %v950 = vld [vmem:[#allocation9 + $0x88] sm:$0xff]
    %v951 = vld [vmem:[#allocation9 + $0x90] sm:$0xff]
    %v952 = vld [vmem:[#allocation9 + $0x98] sm:$0xff]
    %v953 = vld [vmem:[#allocation9 + $0xa0] sm:$0xff]
    %v954 = vld [vmem:[#allocation9 + $0xa8] sm:$0xff]
    %v955 = vld [vmem:[#allocation9 + $0xb0] sm:$0xff]
    %v956 = vld [vmem:[#allocation9 + $0xb8] sm:$0xff]
    %v957 = vld [vmem:[#allocation9 + $0xc0] sm:$0xff]
    %v958 = vld [vmem:[#allocation9 + $0xc8] sm:$0xff]
    %v959 = vld [vmem:[#allocation9 + $0xd0] sm:$0xff]
    %v960 = vld [vmem:[#allocation9 + $0xd8] sm:$0xff]
    %v961 = vld [vmem:[#allocation9 + $0xe0] sm:$0xff]
    %v962 = vld [vmem:[#allocation9 + $0xe8] sm:$0xff]
    %v963 = vld [vmem:[#allocation9 + $0xf0] sm:$0xff]
    %v964 = vld [vmem:[#allocation9 + $0xf8] sm:$0xff]
    %v965 = vld [vmem:[#allocation9 + $0x100] sm:$0xff]
    %v966 = vld [vmem:[#allocation9 + $0x108] sm:$0xff]
    %v967 = vld [vmem:[#allocation9 + $0x110] sm:$0xff]
    %v968 = vld [vmem:[#allocation9 + $0x118] sm:$0xff]
    %v969 = vld [vmem:[#allocation9 + $0x120] sm:$0xff]
    %v970 = vld [vmem:[#allocation9 + $0x128] sm:$0xff]
    %v971 = vld [vmem:[#allocation9 + $0x130] sm:$0xff]
    %v972 = vld [vmem:[#allocation9 + $0x138] sm:$0xff]
    %v973 = vld [vmem:[#allocation9 + $0x140] sm:$0xff]
    %v974 = vld [vmem:[#allocation9 + $0x148] sm:$0xff]
    %v975 = vld [vmem:[#allocation9 + $0x150] sm:$0xff]
    %v976 = vld [vmem:[#allocation9 + $0x158] sm:$0xff]
    %v977 = vld [vmem:[#allocation9 + $0x160] sm:$0xff]
    %v978 = vld [vmem:[#allocation9 + $0x168] sm:$0xff]
    %v979 = vld [vmem:[#allocation9 + $0x170] sm:$0xff]
    %v980 = vld [vmem:[#allocation9 + $0x178] sm:$0xff]
    %v981 = vld [vmem:[#allocation9 + $0x180] sm:$0xff]
    %v982 = vld [vmem:[#allocation9 + $0x188] sm:$0xff]
    %v983 = vld [vmem:[#allocation9 + $0x190] sm:$0xff]
    %v984 = vld [vmem:[#allocation9 + $0x198] sm:$0xff]
    %v985 = vld [vmem:[#allocation9 + $0x1a0] sm:$0xff]
    %v986 = vld [vmem:[#allocation9 + $0x1a8] sm:$0xff]
    %v987 = vld [vmem:[#allocation9 + $0x1b0] sm:$0xff]
    %v988 = vld [vmem:[#allocation9 + $0x1b8] sm:$0xff]
    %v989 = vld [vmem:[#allocation9 + $0x1c0] sm:$0xff]
    %v990 = vld [vmem:[#allocation9 + $0x1c8] sm:$0xff]
    %v991 = vld [vmem:[#allocation9 + $0x1d0] sm:$0xff]
    %v992 = vld [vmem:[#allocation9 + $0x1d8] sm:$0xff]
    %v993 = vld [vmem:[#allocation9 + $0x1e0] sm:$0xff]
    %v994 = vld [vmem:[#allocation9 + $0x1e8] sm:$0xff]
    %v995 = vld [vmem:[#allocation9 + $0x1f0] sm:$0xff]
    %v996 = vld [vmem:[#allocation9 + $0x1f8] sm:$0xff]
    %997 = vmatprep.subr.mxu0 %v994
    %998 = vmatpush1.msra.mxu0 %v993
    %999 = vmatprep.subr.mxu0 %v990
    %1000 = vmatpush1.msra.mxu0 %v989
    %1001 = vmatprep.subr.mxu0 %v986
    %1002 = vmatpush1.msra.mxu0 %v985
    %1003 = vmatprep.subr.mxu0 %v982
    %1004 = vmatpush1.msra.mxu0 %v981
    %1005 = vmatprep.subr.mxu0 %v978
    %1006 = vmatpush1.msra.mxu0 %v977
    %1007 = vmatprep.subr.mxu0 %v974
    %1008 = vmatpush1.msra.mxu0 %v973
    %1009 = vmatprep.subr.mxu0 %v970
    %1010 = vmatpush1.msra.mxu0 %v969
    %1011 = vmatprep.subr.mxu0 %v966
    %1012 = vmatpush1.msra.mxu0 %v965
    %1013 = vmatprep.subr.mxu0 %v962
    %1014 = vmatpush1.msra.mxu0 %v961
    %1015 = vmatprep.subr.mxu0 %v958
    %1016 = vmatpush1.msra.mxu0 %v957
    %1017 = vmatprep.subr.mxu0 %v954
    %1018 = vmatpush1.msra.mxu0 %v953
    %1019 = vmatprep.subr.mxu0 %v950
    %1020 = vmatpush1.msra.mxu0 %v949
    %1021 = vmatprep.subr.mxu0 %v946
    %1022 = vmatpush1.msra.mxu0 %v945
    %1023 = vmatprep.subr.mxu0 %v942
    %1024 = vmatpush1.msra.mxu0 %v941
    %1025 = vmatprep.subr.mxu0 %v938
    %1026 = vmatpush1.msra.mxu0 %v937
    %1027 = vmatprep.subr.mxu0 %v934
    %1028 = vmatpush1.msra.mxu0 %v933
    %1029 = vmatprep.subr.mxu0 0.0
    %1030 = vmatpush2.msra.mxu0 0.0
    %1031 = vmatprep.subr.mxu0 0.0
    %1032 = vmatpush2.msra.mxu0 0.0
    %1033 = vmatprep.subr.mxu0 0.0
    %1034 = vmatpush2.msra.mxu0 0.0
    %1035 = vmatprep.subr.mxu0 0.0
    %1036 = vmatpush2.msra.mxu0 0.0
    %1037 = vmatprep.subr.mxu0 0.0
    %1038 = vmatpush2.msra.mxu0 0.0
    %1039 = vmatprep.subr.mxu0 0.0
    %1040 = vmatpush2.msra.mxu0 0.0
    %1041 = vmatprep.subr.mxu0 0.0
    %1042 = vmatpush2.msra.mxu0 0.0
    %1043 = vmatprep.subr.mxu0 0.0
    %1044 = vmatpush2.msra.mxu0 0.0
    %1045 = vmatprep.subr.mxu0 0.0
    %1046 = vmatpush2.msra.mxu0 0.0
    %1047 = vmatprep.subr.mxu0 0.0
    %1048 = vmatpush2.msra.mxu0 0.0
    %1049 = vmatprep.subr.mxu0 0.0
    %1050 = vmatpush2.msra.mxu0 0.0
    %1051 = vmatprep.subr.mxu0 0.0
    %1052 = vmatpush2.msra.mxu0 0.0
    %1053 = vmatprep.subr.mxu0 0.0
    %1054 = vmatpush2.msra.mxu0 0.0
    %1055 = vmatprep.subr.mxu0 0.0
    %1056 = vmatpush2.msra.mxu0 0.0
    %1057 = vmatprep.subr.mxu0 0.0
    %1058 = vmatpush2.msra.mxu0 0.0
    %1059 = vmatprep.subr.mxu0 0.0
    %1060 = vmatpush2.msra.mxu0 0.0
    %1061 = vmatprep.mubr.f32.mxu0 0.0
    %1062 = vmatmul.mubr.f32.gmra.mxu0 %v925
    %v1063 = vpop.f32.mrf.mxu0
    %v1064 = vadd.f32 0.0, %v1063
    %v1065 = vpop.f32.mrf.mxu0
    %v1066 = vadd.f32 0.0, %v1065
    %1067 = vdwg.mxu0
    %1068 = vmatprep.subr.mxu0 %v996
    %1069 = vmatpush1.msra.mxu0 %v995
    %1070 = vmatprep.subr.mxu0 %v992
    %1071 = vmatpush1.msra.mxu0 %v991
    %1072 = vmatprep.subr.mxu0 %v988
    %1073 = vmatpush1.msra.mxu0 %v987
    %1074 = vmatprep.subr.mxu0 %v984
    %1075 = vmatpush1.msra.mxu0 %v983
    %1076 = vmatprep.subr.mxu0 %v980
    %1077 = vmatpush1.msra.mxu0 %v979
    %1078 = vmatprep.subr.mxu0 %v976
    %1079 = vmatpush1.msra.mxu0 %v975
    %1080 = vmatprep.subr.mxu0 %v972
    %1081 = vmatpush1.msra.mxu0 %v971
    %1082 = vmatprep.subr.mxu0 %v968
    %1083 = vmatpush1.msra.mxu0 %v967
    %1084 = vmatprep.subr.mxu0 %v964
    %1085 = vmatpush1.msra.mxu0 %v963
    %1086 = vmatprep.subr.mxu0 %v960
    %1087 = vmatpush1.msra.mxu0 %v959
    %1088 = vmatprep.subr.mxu0 %v956
    %1089 = vmatpush1.msra.mxu0 %v955
    %1090 = vmatprep.subr.mxu0 %v952
    %1091 = vmatpush1.msra.mxu0 %v951
    %1092 = vmatprep.subr.mxu0 %v948
    %1093 = vmatpush1.msra.mxu0 %v947
    %1094 = vmatprep.subr.mxu0 %v944
    %1095 = vmatpush1.msra.mxu0 %v943
    %1096 = vmatprep.subr.mxu0 %v940
    %1097 = vmatpush1.msra.mxu0 %v939
    %1098 = vmatprep.subr.mxu0 %v936
    %1099 = vmatpush1.msra.mxu0 %v935
    %1100 = vmatprep.subr.mxu0 0.0
    %1101 = vmatpush2.msra.mxu0 0.0
    %1102 = vmatprep.subr.mxu0 0.0
    %1103 = vmatpush2.msra.mxu0 0.0
    %1104 = vmatprep.subr.mxu0 0.0
    %1105 = vmatpush2.msra.mxu0 0.0
    %1106 = vmatprep.subr.mxu0 0.0
    %1107 = vmatpush2.msra.mxu0 0.0
    %1108 = vmatprep.subr.mxu0 0.0
    %1109 = vmatpush2.msra.mxu0 0.0
    %1110 = vmatprep.subr.mxu0 0.0
    %1111 = vmatpush2.msra.mxu0 0.0
    %1112 = vmatprep.subr.mxu0 0.0
    %1113 = vmatpush2.msra.mxu0 0.0
    %1114 = vmatprep.subr.mxu0 0.0
    %1115 = vmatpush2.msra.mxu0 0.0
    %1116 = vmatprep.subr.mxu0 0.0
    %1117 = vmatpush2.msra.mxu0 0.0
    %1118 = vmatprep.subr.mxu0 0.0
    %1119 = vmatpush2.msra.mxu0 0.0
    %1120 = vmatprep.subr.mxu0 0.0
    %1121 = vmatpush2.msra.mxu0 0.0
    %1122 = vmatprep.subr.mxu0 0.0
    %1123 = vmatpush2.msra.mxu0 0.0
    %1124 = vmatprep.subr.mxu0 0.0
    %1125 = vmatpush2.msra.mxu0 0.0
    %1126 = vmatprep.subr.mxu0 0.0
    %1127 = vmatpush2.msra.mxu0 0.0
    %1128 = vmatprep.subr.mxu0 0.0
    %1129 = vmatpush2.msra.mxu0 0.0
    %1130 = vmatprep.subr.mxu0 0.0
    %1131 = vmatpush2.msra.mxu0 0.0
    %1132 = vmatprep.mubr.f32.mxu0 0.0
    %1133 = vmatmul.mubr.f32.gmra.mxu0 %v925
    %v1134 = vpop.f32.mrf.mxu0
    %v1135 = vadd.f32 0.0, %v1134
    %v1136 = vpop.f32.mrf.mxu0
    %v1137 = vadd.f32 0.0, %v1136
    %1138 = vdwg.mxu0
    %v1139 = vadd.f32 %v929, %v1064
    %v1140 = vadd.f32 %v930, %v1066
    %v1141 = vadd.f32 %v931, %v1135
    %v1142 = vadd.f32 %v932, %v1137
    %v1143 = vxor.u32 %v1139, 2147483648
    %v1144 = vmul.f32 %v1143, 1.442695
    %v1145 = vpow.pop %v1144
    %v1146 = vadd.f32 %v1145, 1.0
    %v1147 = vrcp.pop %v1146
    %v1148 = vmul.f32 1.0, %v1147
    %v1149 = vxor.u32 %v1140, 2147483648
    %v1150 = vmul.f32 %v1149, 1.442695
    %v1151 = vpow.pop %v1150
    %v1152 = vadd.f32 %v1151, 1.0
    %v1153 = vrcp.pop %v1152
    %v1154 = vmul.f32 1.0, %v1153
    %v1155 = vtanh.pop %v1141
    %v1156 = vxor.u32 %v1142, 2147483648
    %v1157 = vmul.f32 %v1156, 1.442695
    %v1158 = vpow.pop %v1157
    %v1159 = vadd.f32 %v1158, 1.0
    %v1160 = vrcp.pop %v1159
    %v1161 = vmul.f32 1.0, %v1160
    %v1162 = vmul.f32 %v1154, %v923
    %v1163 = vmul.f32 %v1148, %v1155
    %v1164 = vadd.f32 %v1162, %v1163
    %v1165 = vtanh.pop %v1164
    %v1166 = vmul.f32 %v1161, %v1165
    %s1167 = scalar_lea.vmem [#allocation2], 16
    %1168 = vst [vmem:[%s1167] sm:$0xff] %v1166
    %s1169 = scalar_lea.vmem [#allocation3], 96
    %v1170 = vld [vmem:[%s1169] sm:$0xff]
    %v1171 = vld [vmem:[%s1169 + $0x8] sm:$0xff]
    %v1172 = vld [vmem:[%s1169 + $0x10] sm:$0xff]
    %v1173 = vld [vmem:[%s1169 + $0x18] sm:$0xff]
    %v1174 = vld [vmem:[#allocation9] sm:$0xff]
    %v1175 = vld [vmem:[#allocation9 + $0x8] sm:$0xff]
    %v1176 = vld [vmem:[#allocation9 + $0x10] sm:$0xff]
    %v1177 = vld [vmem:[#allocation9 + $0x18] sm:$0xff]
    %v1178 = vld [vmem:[#allocation9 + $0x20] sm:$0xff]
    %v1179 = vld [vmem:[#allocation9 + $0x28] sm:$0xff]
    %v1180 = vld [vmem:[#allocation9 + $0x30] sm:$0xff]
    %v1181 = vld [vmem:[#allocation9 + $0x38] sm:$0xff]
    %v1182 = vld [vmem:[#allocation9 + $0x40] sm:$0xff]
    %v1183 = vld [vmem:[#allocation9 + $0x48] sm:$0xff]
    %v1184 = vld [vmem:[#allocation9 + $0x50] sm:$0xff]
    %v1185 = vld [vmem:[#allocation9 + $0x58] sm:$0xff]
    %v1186 = vld [vmem:[#allocation9 + $0x60] sm:$0xff]
    %v1187 = vld [vmem:[#allocation9 + $0x68] sm:$0xff]
    %v1188 = vld [vmem:[#allocation9 + $0x70] sm:$0xff]
    %v1189 = vld [vmem:[#allocation9 + $0x78] sm:$0xff]
    %v1190 = vld [vmem:[#allocation9 + $0x80] sm:$0xff]
    %v1191 = vld [vmem:[#allocation9 + $0x88] sm:$0xff]
    %v1192 = vld [vmem:[#allocation9 + $0x90] sm:$0xff]
    %v1193 = vld [vmem:[#allocation9 + $0x98] sm:$0xff]
    %v1194 = vld [vmem:[#allocation9 + $0xa0] sm:$0xff]
    %v1195 = vld [vmem:[#allocation9 + $0xa8] sm:$0xff]
    %v1196 = vld [vmem:[#allocation9 + $0xb0] sm:$0xff]
    %v1197 = vld [vmem:[#allocation9 + $0xb8] sm:$0xff]
    %v1198 = vld [vmem:[#allocation9 + $0xc0] sm:$0xff]
    %v1199 = vld [vmem:[#allocation9 + $0xc8] sm:$0xff]
    %v1200 = vld [vmem:[#allocation9 + $0xd0] sm:$0xff]
    %v1201 = vld [vmem:[#allocation9 + $0xd8] sm:$0xff]
    %v1202 = vld [vmem:[#allocation9 + $0xe0] sm:$0xff]
    %v1203 = vld [vmem:[#allocation9 + $0xe8] sm:$0xff]
    %v1204 = vld [vmem:[#allocation9 + $0xf0] sm:$0xff]
    %v1205 = vld [vmem:[#allocation9 + $0xf8] sm:$0xff]
    %v1206 = vld [vmem:[#allocation9 + $0x100] sm:$0xff]
    %v1207 = vld [vmem:[#allocation9 + $0x108] sm:$0xff]
    %v1208 = vld [vmem:[#allocation9 + $0x110] sm:$0xff]
    %v1209 = vld [vmem:[#allocation9 + $0x118] sm:$0xff]
    %v1210 = vld [vmem:[#allocation9 + $0x120] sm:$0xff]
    %v1211 = vld [vmem:[#allocation9 + $0x128] sm:$0xff]
    %v1212 = vld [vmem:[#allocation9 + $0x130] sm:$0xff]
    %v1213 = vld [vmem:[#allocation9 + $0x138] sm:$0xff]
    %v1214 = vld [vmem:[#allocation9 + $0x140] sm:$0xff]
    %v1215 = vld [vmem:[#allocation9 + $0x148] sm:$0xff]
    %v1216 = vld [vmem:[#allocation9 + $0x150] sm:$0xff]
    %v1217 = vld [vmem:[#allocation9 + $0x158] sm:$0xff]
    %v1218 = vld [vmem:[#allocation9 + $0x160] sm:$0xff]
    %v1219 = vld [vmem:[#allocation9 + $0x168] sm:$0xff]
    %v1220 = vld [vmem:[#allocation9 + $0x170] sm:$0xff]
    %v1221 = vld [vmem:[#allocation9 + $0x178] sm:$0xff]
    %v1222 = vld [vmem:[#allocation9 + $0x180] sm:$0xff]
    %v1223 = vld [vmem:[#allocation9 + $0x188] sm:$0xff]
    %v1224 = vld [vmem:[#allocation9 + $0x190] sm:$0xff]
    %v1225 = vld [vmem:[#allocation9 + $0x198] sm:$0xff]
    %v1226 = vld [vmem:[#allocation9 + $0x1a0] sm:$0xff]
    %v1227 = vld [vmem:[#allocation9 + $0x1a8] sm:$0xff]
    %v1228 = vld [vmem:[#allocation9 + $0x1b0] sm:$0xff]
    %v1229 = vld [vmem:[#allocation9 + $0x1b8] sm:$0xff]
    %v1230 = vld [vmem:[#allocation9 + $0x1c0] sm:$0xff]
    %v1231 = vld [vmem:[#allocation9 + $0x1c8] sm:$0xff]
    %v1232 = vld [vmem:[#allocation9 + $0x1d0] sm:$0xff]
    %v1233 = vld [vmem:[#allocation9 + $0x1d8] sm:$0xff]
    %v1234 = vld [vmem:[#allocation9 + $0x1e0] sm:$0xff]
    %v1235 = vld [vmem:[#allocation9 + $0x1e8] sm:$0xff]
    %v1236 = vld [vmem:[#allocation9 + $0x1f0] sm:$0xff]
    %v1237 = vld [vmem:[#allocation9 + $0x1f8] sm:$0xff]
    %1238 = vmatprep.subr.mxu0 %v1235
    %1239 = vmatpush1.msra.mxu0 %v1234
    %1240 = vmatprep.subr.mxu0 %v1231
    %1241 = vmatpush1.msra.mxu0 %v1230
    %1242 = vmatprep.subr.mxu0 %v1227
    %1243 = vmatpush1.msra.mxu0 %v1226
    %1244 = vmatprep.subr.mxu0 %v1223
    %1245 = vmatpush1.msra.mxu0 %v1222
    %1246 = vmatprep.subr.mxu0 %v1219
    %1247 = vmatpush1.msra.mxu0 %v1218
    %1248 = vmatprep.subr.mxu0 %v1215
    %1249 = vmatpush1.msra.mxu0 %v1214
    %1250 = vmatprep.subr.mxu0 %v1211
    %1251 = vmatpush1.msra.mxu0 %v1210
    %1252 = vmatprep.subr.mxu0 %v1207
    %1253 = vmatpush1.msra.mxu0 %v1206
    %1254 = vmatprep.subr.mxu0 %v1203
    %1255 = vmatpush1.msra.mxu0 %v1202
    %1256 = vmatprep.subr.mxu0 %v1199
    %1257 = vmatpush1.msra.mxu0 %v1198
    %1258 = vmatprep.subr.mxu0 %v1195
    %1259 = vmatpush1.msra.mxu0 %v1194
    %1260 = vmatprep.subr.mxu0 %v1191
    %1261 = vmatpush1.msra.mxu0 %v1190
    %1262 = vmatprep.subr.mxu0 %v1187
    %1263 = vmatpush1.msra.mxu0 %v1186
    %1264 = vmatprep.subr.mxu0 %v1183
    %1265 = vmatpush1.msra.mxu0 %v1182
    %1266 = vmatprep.subr.mxu0 %v1179
    %1267 = vmatpush1.msra.mxu0 %v1178
    %1268 = vmatprep.subr.mxu0 %v1175
    %1269 = vmatpush1.msra.mxu0 %v1174
    %1270 = vmatprep.subr.mxu0 0.0
    %1271 = vmatpush2.msra.mxu0 0.0
    %1272 = vmatprep.subr.mxu0 0.0
    %1273 = vmatpush2.msra.mxu0 0.0
    %1274 = vmatprep.subr.mxu0 0.0
    %1275 = vmatpush2.msra.mxu0 0.0
    %1276 = vmatprep.subr.mxu0 0.0
    %1277 = vmatpush2.msra.mxu0 0.0
    %1278 = vmatprep.subr.mxu0 0.0
    %1279 = vmatpush2.msra.mxu0 0.0
    %1280 = vmatprep.subr.mxu0 0.0
    %1281 = vmatpush2.msra.mxu0 0.0
    %1282 = vmatprep.subr.mxu0 0.0
    %1283 = vmatpush2.msra.mxu0 0.0
    %1284 = vmatprep.subr.mxu0 0.0
    %1285 = vmatpush2.msra.mxu0 0.0
    %1286 = vmatprep.subr.mxu0 0.0
    %1287 = vmatpush2.msra.mxu0 0.0
    %1288 = vmatprep.subr.mxu0 0.0
    %1289 = vmatpush2.msra.mxu0 0.0
    %1290 = vmatprep.subr.mxu0 0.0
    %1291 = vmatpush2.msra.mxu0 0.0
    %1292 = vmatprep.subr.mxu0 0.0
    %1293 = vmatpush2.msra.mxu0 0.0
    %1294 = vmatprep.subr.mxu0 0.0
    %1295 = vmatpush2.msra.mxu0 0.0
    %1296 = vmatprep.subr.mxu0 0.0
    %1297 = vmatpush2.msra.mxu0 0.0
    %1298 = vmatprep.subr.mxu0 0.0
    %1299 = vmatpush2.msra.mxu0 0.0
    %1300 = vmatprep.subr.mxu0 0.0
    %1301 = vmatpush2.msra.mxu0 0.0
    %1302 = vmatprep.mubr.f32.mxu0 0.0
    %1303 = vmatmul.mubr.f32.gmra.mxu0 %v1166
    %v1304 = vpop.f32.mrf.mxu0
    %v1305 = vadd.f32 0.0, %v1304
    %v1306 = vpop.f32.mrf.mxu0
    %v1307 = vadd.f32 0.0, %v1306
    %1308 = vdwg.mxu0
    %1309 = vmatprep.subr.mxu0 %v1237
    %1310 = vmatpush1.msra.mxu0 %v1236
    %1311 = vmatprep.subr.mxu0 %v1233
    %1312 = vmatpush1.msra.mxu0 %v1232
    %1313 = vmatprep.subr.mxu0 %v1229
    %1314 = vmatpush1.msra.mxu0 %v1228
    %1315 = vmatprep.subr.mxu0 %v1225
    %1316 = vmatpush1.msra.mxu0 %v1224
    %1317 = vmatprep.subr.mxu0 %v1221
    %1318 = vmatpush1.msra.mxu0 %v1220
    %1319 = vmatprep.subr.mxu0 %v1217
    %1320 = vmatpush1.msra.mxu0 %v1216
    %1321 = vmatprep.subr.mxu0 %v1213
    %1322 = vmatpush1.msra.mxu0 %v1212
    %1323 = vmatprep.subr.mxu0 %v1209
    %1324 = vmatpush1.msra.mxu0 %v1208
    %1325 = vmatprep.subr.mxu0 %v1205
    %1326 = vmatpush1.msra.mxu0 %v1204
    %1327 = vmatprep.subr.mxu0 %v1201
    %1328 = vmatpush1.msra.mxu0 %v1200
    %1329 = vmatprep.subr.mxu0 %v1197
    %1330 = vmatpush1.msra.mxu0 %v1196
    %1331 = vmatprep.subr.mxu0 %v1193
    %1332 = vmatpush1.msra.mxu0 %v1192
    %1333 = vmatprep.subr.mxu0 %v1189
    %1334 = vmatpush1.msra.mxu0 %v1188
    %1335 = vmatprep.subr.mxu0 %v1185
    %1336 = vmatpush1.msra.mxu0 %v1184
    %1337 = vmatprep.subr.mxu0 %v1181
    %1338 = vmatpush1.msra.mxu0 %v1180
    %1339 = vmatprep.subr.mxu0 %v1177
    %1340 = vmatpush1.msra.mxu0 %v1176
    %1341 = vmatprep.subr.mxu0 0.0
    %1342 = vmatpush2.msra.mxu0 0.0
    %1343 = vmatprep.subr.mxu0 0.0
    %1344 = vmatpush2.msra.mxu0 0.0
    %1345 = vmatprep.subr.mxu0 0.0
    %1346 = vmatpush2.msra.mxu0 0.0
    %1347 = vmatprep.subr.mxu0 0.0
    %1348 = vmatpush2.msra.mxu0 0.0
    %1349 = vmatprep.subr.mxu0 0.0
    %1350 = vmatpush2.msra.mxu0 0.0
    %1351 = vmatprep.subr.mxu0 0.0
    %1352 = vmatpush2.msra.mxu0 0.0
    %1353 = vmatprep.subr.mxu0 0.0
    %1354 = vmatpush2.msra.mxu0 0.0
    %1355 = vmatprep.subr.mxu0 0.0
    %1356 = vmatpush2.msra.mxu0 0.0
    %1357 = vmatprep.subr.mxu0 0.0
    %1358 = vmatpush2.msra.mxu0 0.0
    %1359 = vmatprep.subr.mxu0 0.0
    %1360 = vmatpush2.msra.mxu0 0.0
    %1361 = vmatprep.subr.mxu0 0.0
    %1362 = vmatpush2.msra.mxu0 0.0
    %1363 = vmatprep.subr.mxu0 0.0
    %1364 = vmatpush2.msra.mxu0 0.0
    %1365 = vmatprep.subr.mxu0 0.0
    %1366 = vmatpush2.msra.mxu0 0.0
    %1367 = vmatprep.subr.mxu0 0.0
    %1368 = vmatpush2.msra.mxu0 0.0
    %1369 = vmatprep.subr.mxu0 0.0
    %1370 = vmatpush2.msra.mxu0 0.0
    %1371 = vmatprep.subr.mxu0 0.0
    %1372 = vmatpush2.msra.mxu0 0.0
    %1373 = vmatprep.mubr.f32.mxu0 0.0
    %1374 = vmatmul.mubr.f32.gmra.mxu0 %v1166
    %v1375 = vpop.f32.mrf.mxu0
    %v1376 = vadd.f32 0.0, %v1375
    %v1377 = vpop.f32.mrf.mxu0
    %v1378 = vadd.f32 0.0, %v1377
    %1379 = vdwg.mxu0
    %v1380 = vadd.f32 %v1170, %v1305
    %v1381 = vadd.f32 %v1171, %v1307
    %v1382 = vadd.f32 %v1172, %v1376
    %v1383 = vadd.f32 %v1173, %v1378
    %v1384 = vxor.u32 %v1380, 2147483648
    %v1385 = vmul.f32 %v1384, 1.442695
    %v1386 = vpow.pop %v1385
    %v1387 = vadd.f32 %v1386, 1.0
    %v1388 = vrcp.pop %v1387
    %v1389 = vmul.f32 1.0, %v1388
    %v1390 = vxor.u32 %v1381, 2147483648
    %v1391 = vmul.f32 %v1390, 1.442695
    %v1392 = vpow.pop %v1391
    %v1393 = vadd.f32 %v1392, 1.0
    %v1394 = vrcp.pop %v1393
    %v1395 = vmul.f32 1.0, %v1394
    %v1396 = vtanh.pop %v1382
    %v1397 = vxor.u32 %v1383, 2147483648
    %v1398 = vmul.f32 %v1397, 1.442695
    %v1399 = vpow.pop %v1398
    %v1400 = vadd.f32 %v1399, 1.0
    %v1401 = vrcp.pop %v1400
    %v1402 = vmul.f32 1.0, %v1401
    %v1403 = vmul.f32 %v1395, %v1164
    %v1404 = vmul.f32 %v1389, %v1396
    %v1405 = vadd.f32 %v1403, %v1404
    %v1406 = vtanh.pop %v1405
    %v1407 = vmul.f32 %v1402, %v1406
    %s1408 = scalar_lea.vmem [#allocation2], 24
    %1409 = vst [vmem:[%s1408] sm:$0xff] %v1407
    %s1410 = scalar_lea.vmem [#allocation3], 128
    %v1411 = vld [vmem:[%s1410] sm:$0xff]
    %v1412 = vld [vmem:[%s1410 + $0x8] sm:$0xff]
    %v1413 = vld [vmem:[%s1410 + $0x10] sm:$0xff]
    %v1414 = vld [vmem:[%s1410 + $0x18] sm:$0xff]
    %v1415 = vld [vmem:[#allocation9] sm:$0xff]
    %v1416 = vld [vmem:[#allocation9 + $0x8] sm:$0xff]
    %v1417 = vld [vmem:[#allocation9 + $0x10] sm:$0xff]
    %v1418 = vld [vmem:[#allocation9 + $0x18] sm:$0xff]
    %v1419 = vld [vmem:[#allocation9 + $0x20] sm:$0xff]
    %v1420 = vld [vmem:[#allocation9 + $0x28] sm:$0xff]
    %v1421 = vld [vmem:[#allocation9 + $0x30] sm:$0xff]
    %v1422 = vld [vmem:[#allocation9 + $0x38] sm:$0xff]
    %v1423 = vld [vmem:[#allocation9 + $0x40] sm:$0xff]
    %v1424 = vld [vmem:[#allocation9 + $0x48] sm:$0xff]
    %v1425 = vld [vmem:[#allocation9 + $0x50] sm:$0xff]
    %v1426 = vld [vmem:[#allocation9 + $0x58] sm:$0xff]
    %v1427 = vld [vmem:[#allocation9 + $0x60] sm:$0xff]
    %v1428 = vld [vmem:[#allocation9 + $0x68] sm:$0xff]
    %v1429 = vld [vmem:[#allocation9 + $0x70] sm:$0xff]
    %v1430 = vld [vmem:[#allocation9 + $0x78] sm:$0xff]
    %v1431 = vld [vmem:[#allocation9 + $0x80] sm:$0xff]
    %v1432 = vld [vmem:[#allocation9 + $0x88] sm:$0xff]
    %v1433 = vld [vmem:[#allocation9 + $0x90] sm:$0xff]
    %v1434 = vld [vmem:[#allocation9 + $0x98] sm:$0xff]
    %v1435 = vld [vmem:[#allocation9 + $0xa0] sm:$0xff]
    %v1436 = vld [vmem:[#allocation9 + $0xa8] sm:$0xff]
    %v1437 = vld [vmem:[#allocation9 + $0xb0] sm:$0xff]
    %v1438 = vld [vmem:[#allocation9 + $0xb8] sm:$0xff]
    %v1439 = vld [vmem:[#allocation9 + $0xc0] sm:$0xff]
    %v1440 = vld [vmem:[#allocation9 + $0xc8] sm:$0xff]
    %v1441 = vld [vmem:[#allocation9 + $0xd0] sm:$0xff]
    %v1442 = vld [vmem:[#allocation9 + $0xd8] sm:$0xff]
    %v1443 = vld [vmem:[#allocation9 + $0xe0] sm:$0xff]
    %v1444 = vld [vmem:[#allocation9 + $0xe8] sm:$0xff]
    %v1445 = vld [vmem:[#allocation9 + $0xf0] sm:$0xff]
    %v1446 = vld [vmem:[#allocation9 + $0xf8] sm:$0xff]
    %v1447 = vld [vmem:[#allocation9 + $0x100] sm:$0xff]
    %v1448 = vld [vmem:[#allocation9 + $0x108] sm:$0xff]
    %v1449 = vld [vmem:[#allocation9 + $0x110] sm:$0xff]
    %v1450 = vld [vmem:[#allocation9 + $0x118] sm:$0xff]
    %v1451 = vld [vmem:[#allocation9 + $0x120] sm:$0xff]
    %v1452 = vld [vmem:[#allocation9 + $0x128] sm:$0xff]
    %v1453 = vld [vmem:[#allocation9 + $0x130] sm:$0xff]
    %v1454 = vld [vmem:[#allocation9 + $0x138] sm:$0xff]
    %v1455 = vld [vmem:[#allocation9 + $0x140] sm:$0xff]
    %v1456 = vld [vmem:[#allocation9 + $0x148] sm:$0xff]
    %v1457 = vld [vmem:[#allocation9 + $0x150] sm:$0xff]
    %v1458 = vld [vmem:[#allocation9 + $0x158] sm:$0xff]
    %v1459 = vld [vmem:[#allocation9 + $0x160] sm:$0xff]
    %v1460 = vld [vmem:[#allocation9 + $0x168] sm:$0xff]
    %v1461 = vld [vmem:[#allocation9 + $0x170] sm:$0xff]
    %v1462 = vld [vmem:[#allocation9 + $0x178] sm:$0xff]
    %v1463 = vld [vmem:[#allocation9 + $0x180] sm:$0xff]
    %v1464 = vld [vmem:[#allocation9 + $0x188] sm:$0xff]
    %v1465 = vld [vmem:[#allocation9 + $0x190] sm:$0xff]
    %v1466 = vld [vmem:[#allocation9 + $0x198] sm:$0xff]
    %v1467 = vld [vmem:[#allocation9 + $0x1a0] sm:$0xff]
    %v1468 = vld [vmem:[#allocation9 + $0x1a8] sm:$0xff]
    %v1469 = vld [vmem:[#allocation9 + $0x1b0] sm:$0xff]
    %v1470 = vld [vmem:[#allocation9 + $0x1b8] sm:$0xff]
    %v1471 = vld [vmem:[#allocation9 + $0x1c0] sm:$0xff]
    %v1472 = vld [vmem:[#allocation9 + $0x1c8] sm:$0xff]
    %v1473 = vld [vmem:[#allocation9 + $0x1d0] sm:$0xff]
    %v1474 = vld [vmem:[#allocation9 + $0x1d8] sm:$0xff]
    %v1475 = vld [vmem:[#allocation9 + $0x1e0] sm:$0xff]
    %v1476 = vld [vmem:[#allocation9 + $0x1e8] sm:$0xff]
    %v1477 = vld [vmem:[#allocation9 + $0x1f0] sm:$0xff]
    %v1478 = vld [vmem:[#allocation9 + $0x1f8] sm:$0xff]
    %1479 = vmatprep.subr.mxu0 %v1476
    %1480 = vmatpush1.msra.mxu0 %v1475
    %1481 = vmatprep.subr.mxu0 %v1472
    %1482 = vmatpush1.msra.mxu0 %v1471
    %1483 = vmatprep.subr.mxu0 %v1468
    %1484 = vmatpush1.msra.mxu0 %v1467
    %1485 = vmatprep.subr.mxu0 %v1464
    %1486 = vmatpush1.msra.mxu0 %v1463
    %1487 = vmatprep.subr.mxu0 %v1460
    %1488 = vmatpush1.msra.mxu0 %v1459
    %1489 = vmatprep.subr.mxu0 %v1456
    %1490 = vmatpush1.msra.mxu0 %v1455
    %1491 = vmatprep.subr.mxu0 %v1452
    %1492 = vmatpush1.msra.mxu0 %v1451
    %1493 = vmatprep.subr.mxu0 %v1448
    %1494 = vmatpush1.msra.mxu0 %v1447
    %1495 = vmatprep.subr.mxu0 %v1444
    %1496 = vmatpush1.msra.mxu0 %v1443
    %1497 = vmatprep.subr.mxu0 %v1440
    %1498 = vmatpush1.msra.mxu0 %v1439
    %1499 = vmatprep.subr.mxu0 %v1436
    %1500 = vmatpush1.msra.mxu0 %v1435
    %1501 = vmatprep.subr.mxu0 %v1432
    %1502 = vmatpush1.msra.mxu0 %v1431
    %1503 = vmatprep.subr.mxu0 %v1428
    %1504 = vmatpush1.msra.mxu0 %v1427
    %1505 = vmatprep.subr.mxu0 %v1424
    %1506 = vmatpush1.msra.mxu0 %v1423
    %1507 = vmatprep.subr.mxu0 %v1420
    %1508 = vmatpush1.msra.mxu0 %v1419
    %1509 = vmatprep.subr.mxu0 %v1416
    %1510 = vmatpush1.msra.mxu0 %v1415
    %1511 = vmatprep.subr.mxu0 0.0
    %1512 = vmatpush2.msra.mxu0 0.0
    %1513 = vmatprep.subr.mxu0 0.0
    %1514 = vmatpush2.msra.mxu0 0.0
    %1515 = vmatprep.subr.mxu0 0.0
    %1516 = vmatpush2.msra.mxu0 0.0
    %1517 = vmatprep.subr.mxu0 0.0
    %1518 = vmatpush2.msra.mxu0 0.0
    %1519 = vmatprep.subr.mxu0 0.0
    %1520 = vmatpush2.msra.mxu0 0.0
    %1521 = vmatprep.subr.mxu0 0.0
    %1522 = vmatpush2.msra.mxu0 0.0
    %1523 = vmatprep.subr.mxu0 0.0
    %1524 = vmatpush2.msra.mxu0 0.0
    %1525 = vmatprep.subr.mxu0 0.0
    %1526 = vmatpush2.msra.mxu0 0.0
    %1527 = vmatprep.subr.mxu0 0.0
    %1528 = vmatpush2.msra.mxu0 0.0
    %1529 = vmatprep.subr.mxu0 0.0
    %1530 = vmatpush2.msra.mxu0 0.0
    %1531 = vmatprep.subr.mxu0 0.0
    %1532 = vmatpush2.msra.mxu0 0.0
    %1533 = vmatprep.subr.mxu0 0.0
    %1534 = vmatpush2.msra.mxu0 0.0
    %1535 = vmatprep.subr.mxu0 0.0
    %1536 = vmatpush2.msra.mxu0 0.0
    %1537 = vmatprep.subr.mxu0 0.0
    %1538 = vmatpush2.msra.mxu0 0.0
    %1539 = vmatprep.subr.mxu0 0.0
    %1540 = vmatpush2.msra.mxu0 0.0
    %1541 = vmatprep.subr.mxu0 0.0
    %1542 = vmatpush2.msra.mxu0 0.0
    %1543 = vmatprep.mubr.f32.mxu0 0.0
    %1544 = vmatmul.mubr.f32.gmra.mxu0 %v1407
    %v1545 = vpop.f32.mrf.mxu0
    %v1546 = vadd.f32 0.0, %v1545
    %v1547 = vpop.f32.mrf.mxu0
    %v1548 = vadd.f32 0.0, %v1547
    %1549 = vdwg.mxu0
    %1550 = vmatprep.subr.mxu0 %v1478
    %1551 = vmatpush1.msra.mxu0 %v1477
    %1552 = vmatprep.subr.mxu0 %v1474
    %1553 = vmatpush1.msra.mxu0 %v1473
    %1554 = vmatprep.subr.mxu0 %v1470
    %1555 = vmatpush1.msra.mxu0 %v1469
    %1556 = vmatprep.subr.mxu0 %v1466
    %1557 = vmatpush1.msra.mxu0 %v1465
    %1558 = vmatprep.subr.mxu0 %v1462
    %1559 = vmatpush1.msra.mxu0 %v1461
    %1560 = vmatprep.subr.mxu0 %v1458
    %1561 = vmatpush1.msra.mxu0 %v1457
    %1562 = vmatprep.subr.mxu0 %v1454
    %1563 = vmatpush1.msra.mxu0 %v1453
    %1564 = vmatprep.subr.mxu0 %v1450
    %1565 = vmatpush1.msra.mxu0 %v1449
    %1566 = vmatprep.subr.mxu0 %v1446
    %1567 = vmatpush1.msra.mxu0 %v1445
    %1568 = vmatprep.subr.mxu0 %v1442
    %1569 = vmatpush1.msra.mxu0 %v1441
    %1570 = vmatprep.subr.mxu0 %v1438
    %1571 = vmatpush1.msra.mxu0 %v1437
    %1572 = vmatprep.subr.mxu0 %v1434
    %1573 = vmatpush1.msra.mxu0 %v1433
    %1574 = vmatprep.subr.mxu0 %v1430
    %1575 = vmatpush1.msra.mxu0 %v1429
    %1576 = vmatprep.subr.mxu0 %v1426
    %1577 = vmatpush1.msra.mxu0 %v1425
    %1578 = vmatprep.subr.mxu0 %v1422
    %1579 = vmatpush1.msra.mxu0 %v1421
    %1580 = vmatprep.subr.mxu0 %v1418
    %1581 = vmatpush1.msra.mxu0 %v1417
    %1582 = vmatprep.subr.mxu0 0.0
    %1583 = vmatpush2.msra.mxu0 0.0
    %1584 = vmatprep.subr.mxu0 0.0
    %1585 = vmatpush2.msra.mxu0 0.0
    %1586 = vmatprep.subr.mxu0 0.0
    %1587 = vmatpush2.msra.mxu0 0.0
    %1588 = vmatprep.subr.mxu0 0.0
    %1589 = vmatpush2.msra.mxu0 0.0
    %1590 = vmatprep.subr.mxu0 0.0
    %1591 = vmatpush2.msra.mxu0 0.0
    %1592 = vmatprep.subr.mxu0 0.0
    %1593 = vmatpush2.msra.mxu0 0.0
    %1594 = vmatprep.subr.mxu0 0.0
    %1595 = vmatpush2.msra.mxu0 0.0
    %1596 = vmatprep.subr.mxu0 0.0
    %1597 = vmatpush2.msra.mxu0 0.0
    %1598 = vmatprep.subr.mxu0 0.0
    %1599 = vmatpush2.msra.mxu0 0.0
    %1600 = vmatprep.subr.mxu0 0.0
    %1601 = vmatpush2.msra.mxu0 0.0
    %1602 = vmatprep.subr.mxu0 0.0
    %1603 = vmatpush2.msra.mxu0 0.0
    %1604 = vmatprep.subr.mxu0 0.0
    %1605 = vmatpush2.msra.mxu0 0.0
    %1606 = vmatprep.subr.mxu0 0.0
    %1607 = vmatpush2.msra.mxu0 0.0
    %1608 = vmatprep.subr.mxu0 0.0
    %1609 = vmatpush2.msra.mxu0 0.0
    %1610 = vmatprep.subr.mxu0 0.0
    %1611 = vmatpush2.msra.mxu0 0.0
    %1612 = vmatprep.subr.mxu0 0.0
    %1613 = vmatpush2.msra.mxu0 0.0
    %1614 = vmatprep.mubr.f32.mxu0 0.0
    %1615 = vmatmul.mubr.f32.gmra.mxu0 %v1407
    %v1616 = vpop.f32.mrf.mxu0
    %v1617 = vadd.f32 0.0, %v1616
    %v1618 = vpop.f32.mrf.mxu0
    %v1619 = vadd.f32 0.0, %v1618
    %1620 = vdwg.mxu0
    %v1621 = vadd.f32 %v1411, %v1546
    %v1622 = vadd.f32 %v1412, %v1548
    %v1623 = vadd.f32 %v1413, %v1617
    %v1624 = vadd.f32 %v1414, %v1619
    %v1625 = vxor.u32 %v1621, 2147483648
    %v1626 = vmul.f32 %v1625, 1.442695
    %v1627 = vpow.pop %v1626
    %v1628 = vadd.f32 %v1627, 1.0
    %v1629 = vrcp.pop %v1628
    %v1630 = vmul.f32 1.0, %v1629
    %v1631 = vxor.u32 %v1622, 2147483648
    %v1632 = vmul.f32 %v1631, 1.442695
    %v1633 = vpow.pop %v1632
    %v1634 = vadd.f32 %v1633, 1.0
    %v1635 = vrcp.pop %v1634
    %v1636 = vmul.f32 1.0, %v1635
    %v1637 = vtanh.pop %v1623
    %v1638 = vxor.u32 %v1624, 2147483648
    %v1639 = vmul.f32 %v1638, 1.442695
    %v1640 = vpow.pop %v1639
    %v1641 = vadd.f32 %v1640, 1.0
    %v1642 = vrcp.pop %v1641
    %v1643 = vmul.f32 1.0, %v1642
    %v1644 = vmul.f32 %v1636, %v1405
    %v1645 = vmul.f32 %v1630, %v1637
    %v1646 = vadd.f32 %v1644, %v1645
    %v1647 = vtanh.pop %v1646
    %v1648 = vmul.f32 %v1643, %v1647
    %s1649 = scalar_lea.vmem [#allocation2], 32
    %1650 = vst [vmem:[%s1649] sm:$0xff] %v1648
    %s1651 = scalar_lea.vmem [#allocation3], 160
    %v1652 = vld [vmem:[%s1651] sm:$0xff]
    %v1653 = vld [vmem:[%s1651 + $0x8] sm:$0xff]
    %v1654 = vld [vmem:[%s1651 + $0x10] sm:$0xff]
    %v1655 = vld [vmem:[%s1651 + $0x18] sm:$0xff]
    %v1656 = vld [vmem:[#allocation9] sm:$0xff]
    %v1657 = vld [vmem:[#allocation9 + $0x8] sm:$0xff]
    %v1658 = vld [vmem:[#allocation9 + $0x10] sm:$0xff]
    %v1659 = vld [vmem:[#allocation9 + $0x18] sm:$0xff]
    %v1660 = vld [vmem:[#allocation9 + $0x20] sm:$0xff]
    %v1661 = vld [vmem:[#allocation9 + $0x28] sm:$0xff]
    %v1662 = vld [vmem:[#allocation9 + $0x30] sm:$0xff]
    %v1663 = vld [vmem:[#allocation9 + $0x38] sm:$0xff]
    %v1664 = vld [vmem:[#allocation9 + $0x40] sm:$0xff]
    %v1665 = vld [vmem:[#allocation9 + $0x48] sm:$0xff]
    %v1666 = vld [vmem:[#allocation9 + $0x50] sm:$0xff]
    %v1667 = vld [vmem:[#allocation9 + $0x58] sm:$0xff]
    %v1668 = vld [vmem:[#allocation9 + $0x60] sm:$0xff]
    %v1669 = vld [vmem:[#allocation9 + $0x68] sm:$0xff]
    %v1670 = vld [vmem:[#allocation9 + $0x70] sm:$0xff]
    %v1671 = vld [vmem:[#allocation9 + $0x78] sm:$0xff]
    %v1672 = vld [vmem:[#allocation9 + $0x80] sm:$0xff]
    %v1673 = vld [vmem:[#allocation9 + $0x88] sm:$0xff]
    %v1674 = vld [vmem:[#allocation9 + $0x90] sm:$0xff]
    %v1675 = vld [vmem:[#allocation9 + $0x98] sm:$0xff]
    %v1676 = vld [vmem:[#allocation9 + $0xa0] sm:$0xff]
    %v1677 = vld [vmem:[#allocation9 + $0xa8] sm:$0xff]
    %v1678 = vld [vmem:[#allocation9 + $0xb0] sm:$0xff]
    %v1679 = vld [vmem:[#allocation9 + $0xb8] sm:$0xff]
    %v1680 = vld [vmem:[#allocation9 + $0xc0] sm:$0xff]
    %v1681 = vld [vmem:[#allocation9 + $0xc8] sm:$0xff]
    %v1682 = vld [vmem:[#allocation9 + $0xd0] sm:$0xff]
    %v1683 = vld [vmem:[#allocation9 + $0xd8] sm:$0xff]
    %v1684 = vld [vmem:[#allocation9 + $0xe0] sm:$0xff]
    %v1685 = vld [vmem:[#allocation9 + $0xe8] sm:$0xff]
    %v1686 = vld [vmem:[#allocation9 + $0xf0] sm:$0xff]
    %v1687 = vld [vmem:[#allocation9 + $0xf8] sm:$0xff]
    %v1688 = vld [vmem:[#allocation9 + $0x100] sm:$0xff]
    %v1689 = vld [vmem:[#allocation9 + $0x108] sm:$0xff]
    %v1690 = vld [vmem:[#allocation9 + $0x110] sm:$0xff]
    %v1691 = vld [vmem:[#allocation9 + $0x118] sm:$0xff]
    %v1692 = vld [vmem:[#allocation9 + $0x120] sm:$0xff]
    %v1693 = vld [vmem:[#allocation9 + $0x128] sm:$0xff]
    %v1694 = vld [vmem:[#allocation9 + $0x130] sm:$0xff]
    %v1695 = vld [vmem:[#allocation9 + $0x138] sm:$0xff]
    %v1696 = vld [vmem:[#allocation9 + $0x140] sm:$0xff]
    %v1697 = vld [vmem:[#allocation9 + $0x148] sm:$0xff]
    %v1698 = vld [vmem:[#allocation9 + $0x150] sm:$0xff]
    %v1699 = vld [vmem:[#allocation9 + $0x158] sm:$0xff]
    %v1700 = vld [vmem:[#allocation9 + $0x160] sm:$0xff]
    %v1701 = vld [vmem:[#allocation9 + $0x168] sm:$0xff]
    %v1702 = vld [vmem:[#allocation9 + $0x170] sm:$0xff]
    %v1703 = vld [vmem:[#allocation9 + $0x178] sm:$0xff]
    %v1704 = vld [vmem:[#allocation9 + $0x180] sm:$0xff]
    %v1705 = vld [vmem:[#allocation9 + $0x188] sm:$0xff]
    %v1706 = vld [vmem:[#allocation9 + $0x190] sm:$0xff]
    %v1707 = vld [vmem:[#allocation9 + $0x198] sm:$0xff]
    %v1708 = vld [vmem:[#allocation9 + $0x1a0] sm:$0xff]
    %v1709 = vld [vmem:[#allocation9 + $0x1a8] sm:$0xff]
    %v1710 = vld [vmem:[#allocation9 + $0x1b0] sm:$0xff]
    %v1711 = vld [vmem:[#allocation9 + $0x1b8] sm:$0xff]
    %v1712 = vld [vmem:[#allocation9 + $0x1c0] sm:$0xff]
    %v1713 = vld [vmem:[#allocation9 + $0x1c8] sm:$0xff]
    %v1714 = vld [vmem:[#allocation9 + $0x1d0] sm:$0xff]
    %v1715 = vld [vmem:[#allocation9 + $0x1d8] sm:$0xff]
    %v1716 = vld [vmem:[#allocation9 + $0x1e0] sm:$0xff]
    %v1717 = vld [vmem:[#allocation9 + $0x1e8] sm:$0xff]
    %v1718 = vld [vmem:[#allocation9 + $0x1f0] sm:$0xff]
    %v1719 = vld [vmem:[#allocation9 + $0x1f8] sm:$0xff]
    %1720 = vmatprep.subr.mxu0 %v1717
    %1721 = vmatpush1.msra.mxu0 %v1716
    %1722 = vmatprep.subr.mxu0 %v1713
    %1723 = vmatpush1.msra.mxu0 %v1712
    %1724 = vmatprep.subr.mxu0 %v1709
    %1725 = vmatpush1.msra.mxu0 %v1708
    %1726 = vmatprep.subr.mxu0 %v1705
    %1727 = vmatpush1.msra.mxu0 %v1704
    %1728 = vmatprep.subr.mxu0 %v1701
    %1729 = vmatpush1.msra.mxu0 %v1700
    %1730 = vmatprep.subr.mxu0 %v1697
    %1731 = vmatpush1.msra.mxu0 %v1696
    %1732 = vmatprep.subr.mxu0 %v1693
    %1733 = vmatpush1.msra.mxu0 %v1692
    %1734 = vmatprep.subr.mxu0 %v1689
    %1735 = vmatpush1.msra.mxu0 %v1688
    %1736 = vmatprep.subr.mxu0 %v1685
    %1737 = vmatpush1.msra.mxu0 %v1684
    %1738 = vmatprep.subr.mxu0 %v1681
    %1739 = vmatpush1.msra.mxu0 %v1680
    %1740 = vmatprep.subr.mxu0 %v1677
    %1741 = vmatpush1.msra.mxu0 %v1676
    %1742 = vmatprep.subr.mxu0 %v1673
    %1743 = vmatpush1.msra.mxu0 %v1672
    %1744 = vmatprep.subr.mxu0 %v1669
    %1745 = vmatpush1.msra.mxu0 %v1668
    %1746 = vmatprep.subr.mxu0 %v1665
    %1747 = vmatpush1.msra.mxu0 %v1664
    %1748 = vmatprep.subr.mxu0 %v1661
    %1749 = vmatpush1.msra.mxu0 %v1660
    %1750 = vmatprep.subr.mxu0 %v1657
    %1751 = vmatpush1.msra.mxu0 %v1656
    %1752 = vmatprep.subr.mxu0 0.0
    %1753 = vmatpush2.msra.mxu0 0.0
    %1754 = vmatprep.subr.mxu0 0.0
    %1755 = vmatpush2.msra.mxu0 0.0
    %1756 = vmatprep.subr.mxu0 0.0
    %1757 = vmatpush2.msra.mxu0 0.0
    %1758 = vmatprep.subr.mxu0 0.0
    %1759 = vmatpush2.msra.mxu0 0.0
    %1760 = vmatprep.subr.mxu0 0.0
    %1761 = vmatpush2.msra.mxu0 0.0
    %1762 = vmatprep.subr.mxu0 0.0
    %1763 = vmatpush2.msra.mxu0 0.0
    %1764 = vmatprep.subr.mxu0 0.0
    %1765 = vmatpush2.msra.mxu0 0.0
    %1766 = vmatprep.subr.mxu0 0.0
    %1767 = vmatpush2.msra.mxu0 0.0
    %1768 = vmatprep.subr.mxu0 0.0
    %1769 = vmatpush2.msra.mxu0 0.0
    %1770 = vmatprep.subr.mxu0 0.0
    %1771 = vmatpush2.msra.mxu0 0.0
    %1772 = vmatprep.subr.mxu0 0.0
    %1773 = vmatpush2.msra.mxu0 0.0
    %1774 = vmatprep.subr.mxu0 0.0
    %1775 = vmatpush2.msra.mxu0 0.0
    %1776 = vmatprep.subr.mxu0 0.0
    %1777 = vmatpush2.msra.mxu0 0.0
    %1778 = vmatprep.subr.mxu0 0.0
    %1779 = vmatpush2.msra.mxu0 0.0
    %1780 = vmatprep.subr.mxu0 0.0
    %1781 = vmatpush2.msra.mxu0 0.0
    %1782 = vmatprep.subr.mxu0 0.0
    %1783 = vmatpush2.msra.mxu0 0.0
    %1784 = vmatprep.mubr.f32.mxu0 0.0
    %1785 = vmatmul.mubr.f32.gmra.mxu0 %v1648
    %v1786 = vpop.f32.mrf.mxu0
    %v1787 = vadd.f32 0.0, %v1786
    %v1788 = vpop.f32.mrf.mxu0
    %v1789 = vadd.f32 0.0, %v1788
    %1790 = vdwg.mxu0
    %1791 = vmatprep.subr.mxu0 %v1719
    %1792 = vmatpush1.msra.mxu0 %v1718
    %1793 = vmatprep.subr.mxu0 %v1715
    %1794 = vmatpush1.msra.mxu0 %v1714
    %1795 = vmatprep.subr.mxu0 %v1711
    %1796 = vmatpush1.msra.mxu0 %v1710
    %1797 = vmatprep.subr.mxu0 %v1707
    %1798 = vmatpush1.msra.mxu0 %v1706
    %1799 = vmatprep.subr.mxu0 %v1703
    %1800 = vmatpush1.msra.mxu0 %v1702
    %1801 = vmatprep.subr.mxu0 %v1699
    %1802 = vmatpush1.msra.mxu0 %v1698
    %1803 = vmatprep.subr.mxu0 %v1695
    %1804 = vmatpush1.msra.mxu0 %v1694
    %1805 = vmatprep.subr.mxu0 %v1691
    %1806 = vmatpush1.msra.mxu0 %v1690
    %1807 = vmatprep.subr.mxu0 %v1687
    %1808 = vmatpush1.msra.mxu0 %v1686
    %1809 = vmatprep.subr.mxu0 %v1683
    %1810 = vmatpush1.msra.mxu0 %v1682
    %1811 = vmatprep.subr.mxu0 %v1679
    %1812 = vmatpush1.msra.mxu0 %v1678
    %1813 = vmatprep.subr.mxu0 %v1675
    %1814 = vmatpush1.msra.mxu0 %v1674
    %1815 = vmatprep.subr.mxu0 %v1671
    %1816 = vmatpush1.msra.mxu0 %v1670
    %1817 = vmatprep.subr.mxu0 %v1667
    %1818 = vmatpush1.msra.mxu0 %v1666
    %1819 = vmatprep.subr.mxu0 %v1663
    %1820 = vmatpush1.msra.mxu0 %v1662
    %1821 = vmatprep.subr.mxu0 %v1659
    %1822 = vmatpush1.msra.mxu0 %v1658
    %1823 = vmatprep.subr.mxu0 0.0
    %1824 = vmatpush2.msra.mxu0 0.0
    %1825 = vmatprep.subr.mxu0 0.0
    %1826 = vmatpush2.msra.mxu0 0.0
    %1827 = vmatprep.subr.mxu0 0.0
    %1828 = vmatpush2.msra.mxu0 0.0
    %1829 = vmatprep.subr.mxu0 0.0
    %1830 = vmatpush2.msra.mxu0 0.0
    %1831 = vmatprep.subr.mxu0 0.0
    %1832 = vmatpush2.msra.mxu0 0.0
    %1833 = vmatprep.subr.mxu0 0.0
    %1834 = vmatpush2.msra.mxu0 0.0
    %1835 = vmatprep.subr.mxu0 0.0
    %1836 = vmatpush2.msra.mxu0 0.0
    %1837 = vmatprep.subr.mxu0 0.0
    %1838 = vmatpush2.msra.mxu0 0.0
    %1839 = vmatprep.subr.mxu0 0.0
    %1840 = vmatpush2.msra.mxu0 0.0
    %1841 = vmatprep.subr.mxu0 0.0
    %1842 = vmatpush2.msra.mxu0 0.0
    %1843 = vmatprep.subr.mxu0 0.0
    %1844 = vmatpush2.msra.mxu0 0.0
    %1845 = vmatprep.subr.mxu0 0.0
    %1846 = vmatpush2.msra.mxu0 0.0
    %1847 = vmatprep.subr.mxu0 0.0
    %1848 = vmatpush2.msra.mxu0 0.0
    %1849 = vmatprep.subr.mxu0 0.0
    %1850 = vmatpush2.msra.mxu0 0.0
    %1851 = vmatprep.subr.mxu0 0.0
    %1852 = vmatpush2.msra.mxu0 0.0
    %1853 = vmatprep.subr.mxu0 0.0
    %1854 = vmatpush2.msra.mxu0 0.0
    %1855 = vmatprep.mubr.f32.mxu0 0.0
    %1856 = vmatmul.mubr.f32.gmra.mxu0 %v1648
    %v1857 = vpop.f32.mrf.mxu0
    %v1858 = vadd.f32 0.0, %v1857
    %v1859 = vpop.f32.mrf.mxu0
    %v1860 = vadd.f32 0.0, %v1859
    %1861 = vdwg.mxu0
    %v1862 = vadd.f32 %v1652, %v1787
    %v1863 = vadd.f32 %v1653, %v1789
    %v1864 = vadd.f32 %v1654, %v1858
    %v1865 = vadd.f32 %v1655, %v1860
    %v1866 = vxor.u32 %v1862, 2147483648
    %v1867 = vmul.f32 %v1866, 1.442695
    %v1868 = vpow.pop %v1867
    %v1869 = vadd.f32 %v1868, 1.0
    %v1870 = vrcp.pop %v1869
    %v1871 = vmul.f32 1.0, %v1870
    %v1872 = vxor.u32 %v1863, 2147483648
    %v1873 = vmul.f32 %v1872, 1.442695
    %v1874 = vpow.pop %v1873
    %v1875 = vadd.f32 %v1874, 1.0
    %v1876 = vrcp.pop %v1875
    %v1877 = vmul.f32 1.0, %v1876
    %v1878 = vtanh.pop %v1864
    %v1879 = vxor.u32 %v1865, 2147483648
    %v1880 = vmul.f32 %v1879, 1.442695
    %v1881 = vpow.pop %v1880
    %v1882 = vadd.f32 %v1881, 1.0
    %v1883 = vrcp.pop %v1882
    %v1884 = vmul.f32 1.0, %v1883
    %v1885 = vmul.f32 %v1877, %v1646
    %v1886 = vmul.f32 %v1871, %v1878
    %v1887 = vadd.f32 %v1885, %v1886
    %v1888 = vtanh.pop %v1887
    %v1889 = vmul.f32 %v1884, %v1888
    %s1890 = scalar_lea.vmem [#allocation2], 40
    %1891 = vst [vmem:[%s1890] sm:$0xff] %v1889
    %s1892 = scalar_lea.vmem [#allocation3], 192
    %v1893 = vld [vmem:[%s1892] sm:$0xff]
    %v1894 = vld [vmem:[%s1892 + $0x8] sm:$0xff]
    %v1895 = vld [vmem:[%s1892 + $0x10] sm:$0xff]
    %v1896 = vld [vmem:[%s1892 + $0x18] sm:$0xff]
    %v1897 = vld [vmem:[#allocation9] sm:$0xff]
    %v1898 = vld [vmem:[#allocation9 + $0x8] sm:$0xff]
    %v1899 = vld [vmem:[#allocation9 + $0x10] sm:$0xff]
    %v1900 = vld [vmem:[#allocation9 + $0x18] sm:$0xff]
    %v1901 = vld [vmem:[#allocation9 + $0x20] sm:$0xff]
    %v1902 = vld [vmem:[#allocation9 + $0x28] sm:$0xff]
    %v1903 = vld [vmem:[#allocation9 + $0x30] sm:$0xff]
    %v1904 = vld [vmem:[#allocation9 + $0x38] sm:$0xff]
    %v1905 = vld [vmem:[#allocation9 + $0x40] sm:$0xff]
    %v1906 = vld [vmem:[#allocation9 + $0x48] sm:$0xff]
    %v1907 = vld [vmem:[#allocation9 + $0x50] sm:$0xff]
    %v1908 = vld [vmem:[#allocation9 + $0x58] sm:$0xff]
    %v1909 = vld [vmem:[#allocation9 + $0x60] sm:$0xff]
    %v1910 = vld [vmem:[#allocation9 + $0x68] sm:$0xff]
    %v1911 = vld [vmem:[#allocation9 + $0x70] sm:$0xff]
    %v1912 = vld [vmem:[#allocation9 + $0x78] sm:$0xff]
    %v1913 = vld [vmem:[#allocation9 + $0x80] sm:$0xff]
    %v1914 = vld [vmem:[#allocation9 + $0x88] sm:$0xff]
    %v1915 = vld [vmem:[#allocation9 + $0x90] sm:$0xff]
    %v1916 = vld [vmem:[#allocation9 + $0x98] sm:$0xff]
    %v1917 = vld [vmem:[#allocation9 + $0xa0] sm:$0xff]
    %v1918 = vld [vmem:[#allocation9 + $0xa8] sm:$0xff]
    %v1919 = vld [vmem:[#allocation9 + $0xb0] sm:$0xff]
    %v1920 = vld [vmem:[#allocation9 + $0xb8] sm:$0xff]
    %v1921 = vld [vmem:[#allocation9 + $0xc0] sm:$0xff]
    %v1922 = vld [vmem:[#allocation9 + $0xc8] sm:$0xff]
    %v1923 = vld [vmem:[#allocation9 + $0xd0] sm:$0xff]
    %v1924 = vld [vmem:[#allocation9 + $0xd8] sm:$0xff]
    %v1925 = vld [vmem:[#allocation9 + $0xe0] sm:$0xff]
    %v1926 = vld [vmem:[#allocation9 + $0xe8] sm:$0xff]
    %v1927 = vld [vmem:[#allocation9 + $0xf0] sm:$0xff]
    %v1928 = vld [vmem:[#allocation9 + $0xf8] sm:$0xff]
    %v1929 = vld [vmem:[#allocation9 + $0x100] sm:$0xff]
    %v1930 = vld [vmem:[#allocation9 + $0x108] sm:$0xff]
    %v1931 = vld [vmem:[#allocation9 + $0x110] sm:$0xff]
    %v1932 = vld [vmem:[#allocation9 + $0x118] sm:$0xff]
    %v1933 = vld [vmem:[#allocation9 + $0x120] sm:$0xff]
    %v1934 = vld [vmem:[#allocation9 + $0x128] sm:$0xff]
    %v1935 = vld [vmem:[#allocation9 + $0x130] sm:$0xff]
    %v1936 = vld [vmem:[#allocation9 + $0x138] sm:$0xff]
    %v1937 = vld [vmem:[#allocation9 + $0x140] sm:$0xff]
    %v1938 = vld [vmem:[#allocation9 + $0x148] sm:$0xff]
    %v1939 = vld [vmem:[#allocation9 + $0x150] sm:$0xff]
    %v1940 = vld [vmem:[#allocation9 + $0x158] sm:$0xff]
    %v1941 = vld [vmem:[#allocation9 + $0x160] sm:$0xff]
    %v1942 = vld [vmem:[#allocation9 + $0x168] sm:$0xff]
    %v1943 = vld [vmem:[#allocation9 + $0x170] sm:$0xff]
    %v1944 = vld [vmem:[#allocation9 + $0x178] sm:$0xff]
    %v1945 = vld [vmem:[#allocation9 + $0x180] sm:$0xff]
    %v1946 = vld [vmem:[#allocation9 + $0x188] sm:$0xff]
    %v1947 = vld [vmem:[#allocation9 + $0x190] sm:$0xff]
    %v1948 = vld [vmem:[#allocation9 + $0x198] sm:$0xff]
    %v1949 = vld [vmem:[#allocation9 + $0x1a0] sm:$0xff]
    %v1950 = vld [vmem:[#allocation9 + $0x1a8] sm:$0xff]
    %v1951 = vld [vmem:[#allocation9 + $0x1b0] sm:$0xff]
    %v1952 = vld [vmem:[#allocation9 + $0x1b8] sm:$0xff]
    %v1953 = vld [vmem:[#allocation9 + $0x1c0] sm:$0xff]
    %v1954 = vld [vmem:[#allocation9 + $0x1c8] sm:$0xff]
    %v1955 = vld [vmem:[#allocation9 + $0x1d0] sm:$0xff]
    %v1956 = vld [vmem:[#allocation9 + $0x1d8] sm:$0xff]
    %v1957 = vld [vmem:[#allocation9 + $0x1e0] sm:$0xff]
    %v1958 = vld [vmem:[#allocation9 + $0x1e8] sm:$0xff]
    %v1959 = vld [vmem:[#allocation9 + $0x1f0] sm:$0xff]
    %v1960 = vld [vmem:[#allocation9 + $0x1f8] sm:$0xff]
    %1961 = vmatprep.subr.mxu0 %v1958
    %1962 = vmatpush1.msra.mxu0 %v1957
    %1963 = vmatprep.subr.mxu0 %v1954
    %1964 = vmatpush1.msra.mxu0 %v1953
    %1965 = vmatprep.subr.mxu0 %v1950
    %1966 = vmatpush1.msra.mxu0 %v1949
    %1967 = vmatprep.subr.mxu0 %v1946
    %1968 = vmatpush1.msra.mxu0 %v1945
    %1969 = vmatprep.subr.mxu0 %v1942
    %1970 = vmatpush1.msra.mxu0 %v1941
    %1971 = vmatprep.subr.mxu0 %v1938
    %1972 = vmatpush1.msra.mxu0 %v1937
    %1973 = vmatprep.subr.mxu0 %v1934
    %1974 = vmatpush1.msra.mxu0 %v1933
    %1975 = vmatprep.subr.mxu0 %v1930
    %1976 = vmatpush1.msra.mxu0 %v1929
    %1977 = vmatprep.subr.mxu0 %v1926
    %1978 = vmatpush1.msra.mxu0 %v1925
    %1979 = vmatprep.subr.mxu0 %v1922
    %1980 = vmatpush1.msra.mxu0 %v1921
    %1981 = vmatprep.subr.mxu0 %v1918
    %1982 = vmatpush1.msra.mxu0 %v1917
    %1983 = vmatprep.subr.mxu0 %v1914
    %1984 = vmatpush1.msra.mxu0 %v1913
    %1985 = vmatprep.subr.mxu0 %v1910
    %1986 = vmatpush1.msra.mxu0 %v1909
    %1987 = vmatprep.subr.mxu0 %v1906
    %1988 = vmatpush1.msra.mxu0 %v1905
    %1989 = vmatprep.subr.mxu0 %v1902
    %1990 = vmatpush1.msra.mxu0 %v1901
    %1991 = vmatprep.subr.mxu0 %v1898
    %1992 = vmatpush1.msra.mxu0 %v1897
    %1993 = vmatprep.subr.mxu0 0.0
    %1994 = vmatpush2.msra.mxu0 0.0
    %1995 = vmatprep.subr.mxu0 0.0
    %1996 = vmatpush2.msra.mxu0 0.0
    %1997 = vmatprep.subr.mxu0 0.0
    %1998 = vmatpush2.msra.mxu0 0.0
    %1999 = vmatprep.subr.mxu0 0.0
    %2000 = vmatpush2.msra.mxu0 0.0
    %2001 = vmatprep.subr.mxu0 0.0
    %2002 = vmatpush2.msra.mxu0 0.0
    %2003 = vmatprep.subr.mxu0 0.0
    %2004 = vmatpush2.msra.mxu0 0.0
    %2005 = vmatprep.subr.mxu0 0.0
    %2006 = vmatpush2.msra.mxu0 0.0
    %2007 = vmatprep.subr.mxu0 0.0
    %2008 = vmatpush2.msra.mxu0 0.0
    %2009 = vmatprep.subr.mxu0 0.0
    %2010 = vmatpush2.msra.mxu0 0.0
    %2011 = vmatprep.subr.mxu0 0.0
    %2012 = vmatpush2.msra.mxu0 0.0
    %2013 = vmatprep.subr.mxu0 0.0
    %2014 = vmatpush2.msra.mxu0 0.0
    %2015 = vmatprep.subr.mxu0 0.0
    %2016 = vmatpush2.msra.mxu0 0.0
    %2017 = vmatprep.subr.mxu0 0.0
    %2018 = vmatpush2.msra.mxu0 0.0
    %2019 = vmatprep.subr.mxu0 0.0
    %2020 = vmatpush2.msra.mxu0 0.0
    %2021 = vmatprep.subr.mxu0 0.0
    %2022 = vmatpush2.msra.mxu0 0.0
    %2023 = vmatprep.subr.mxu0 0.0
    %2024 = vmatpush2.msra.mxu0 0.0
    %2025 = vmatprep.mubr.f32.mxu0 0.0
    %2026 = vmatmul.mubr.f32.gmra.mxu0 %v1889
    %v2027 = vpop.f32.mrf.mxu0
    %v2028 = vadd.f32 0.0, %v2027
    %v2029 = vpop.f32.mrf.mxu0
    %v2030 = vadd.f32 0.0, %v2029
    %2031 = vdwg.mxu0
    %2032 = vmatprep.subr.mxu0 %v1960
    %2033 = vmatpush1.msra.mxu0 %v1959
    %2034 = vmatprep.subr.mxu0 %v1956
    %2035 = vmatpush1.msra.mxu0 %v1955
    %2036 = vmatprep.subr.mxu0 %v1952
    %2037 = vmatpush1.msra.mxu0 %v1951
    %2038 = vmatprep.subr.mxu0 %v1948
    %2039 = vmatpush1.msra.mxu0 %v1947
    %2040 = vmatprep.subr.mxu0 %v1944
    %2041 = vmatpush1.msra.mxu0 %v1943
    %2042 = vmatprep.subr.mxu0 %v1940
    %2043 = vmatpush1.msra.mxu0 %v1939
    %2044 = vmatprep.subr.mxu0 %v1936
    %2045 = vmatpush1.msra.mxu0 %v1935
    %2046 = vmatprep.subr.mxu0 %v1932
    %2047 = vmatpush1.msra.mxu0 %v1931
    %2048 = vmatprep.subr.mxu0 %v1928
    %2049 = vmatpush1.msra.mxu0 %v1927
    %2050 = vmatprep.subr.mxu0 %v1924
    %2051 = vmatpush1.msra.mxu0 %v1923
    %2052 = vmatprep.subr.mxu0 %v1920
    %2053 = vmatpush1.msra.mxu0 %v1919
    %2054 = vmatprep.subr.mxu0 %v1916
    %2055 = vmatpush1.msra.mxu0 %v1915
    %2056 = vmatprep.subr.mxu0 %v1912
    %2057 = vmatpush1.msra.mxu0 %v1911
    %2058 = vmatprep.subr.mxu0 %v1908
    %2059 = vmatpush1.msra.mxu0 %v1907
    %2060 = vmatprep.subr.mxu0 %v1904
    %2061 = vmatpush1.msra.mxu0 %v1903
    %2062 = vmatprep.subr.mxu0 %v1900
    %2063 = vmatpush1.msra.mxu0 %v1899
    %2064 = vmatprep.subr.mxu0 0.0
    %2065 = vmatpush2.msra.mxu0 0.0
    %2066 = vmatprep.subr.mxu0 0.0
    %2067 = vmatpush2.msra.mxu0 0.0
    %2068 = vmatprep.subr.mxu0 0.0
    %2069 = vmatpush2.msra.mxu0 0.0
    %2070 = vmatprep.subr.mxu0 0.0
    %2071 = vmatpush2.msra.mxu0 0.0
    %2072 = vmatprep.subr.mxu0 0.0
    %2073 = vmatpush2.msra.mxu0 0.0
    %2074 = vmatprep.subr.mxu0 0.0
    %2075 = vmatpush2.msra.mxu0 0.0
    %2076 = vmatprep.subr.mxu0 0.0
    %2077 = vmatpush2.msra.mxu0 0.0
    %2078 = vmatprep.subr.mxu0 0.0
    %2079 = vmatpush2.msra.mxu0 0.0
    %2080 = vmatprep.subr.mxu0 0.0
    %2081 = vmatpush2.msra.mxu0 0.0
    %2082 = vmatprep.subr.mxu0 0.0
    %2083 = vmatpush2.msra.mxu0 0.0
    %2084 = vmatprep.subr.mxu0 0.0
    %2085 = vmatpush2.msra.mxu0 0.0
    %2086 = vmatprep.subr.mxu0 0.0
    %2087 = vmatpush2.msra.mxu0 0.0
    %2088 = vmatprep.subr.mxu0 0.0
    %2089 = vmatpush2.msra.mxu0 0.0
    %2090 = vmatprep.subr.mxu0 0.0
    %2091 = vmatpush2.msra.mxu0 0.0
    %2092 = vmatprep.subr.mxu0 0.0
    %2093 = vmatpush2.msra.mxu0 0.0
    %2094 = vmatprep.subr.mxu0 0.0
    %2095 = vmatpush2.msra.mxu0 0.0
    %2096 = vmatprep.mubr.f32.mxu0 0.0
    %2097 = vmatmul.mubr.f32.gmra.mxu0 %v1889
    %v2098 = vpop.f32.mrf.mxu0
    %v2099 = vadd.f32 0.0, %v2098
    %v2100 = vpop.f32.mrf.mxu0
    %v2101 = vadd.f32 0.0, %v2100
    %2102 = vdwg.mxu0
    %v2103 = vadd.f32 %v1893, %v2028
    %v2104 = vadd.f32 %v1894, %v2030
    %v2105 = vadd.f32 %v1895, %v2099
    %v2106 = vadd.f32 %v1896, %v2101
    %v2107 = vxor.u32 %v2103, 2147483648
    %v2108 = vmul.f32 %v2107, 1.442695
    %v2109 = vpow.pop %v2108
    %v2110 = vadd.f32 %v2109, 1.0
    %v2111 = vrcp.pop %v2110
    %v2112 = vmul.f32 1.0, %v2111
    %v2113 = vxor.u32 %v2104, 2147483648
    %v2114 = vmul.f32 %v2113, 1.442695
    %v2115 = vpow.pop %v2114
    %v2116 = vadd.f32 %v2115, 1.0
    %v2117 = vrcp.pop %v2116
    %v2118 = vmul.f32 1.0, %v2117
    %v2119 = vtanh.pop %v2105
    %v2120 = vxor.u32 %v2106, 2147483648
    %v2121 = vmul.f32 %v2120, 1.442695
    %v2122 = vpow.pop %v2121
    %v2123 = vadd.f32 %v2122, 1.0
    %v2124 = vrcp.pop %v2123
    %v2125 = vmul.f32 1.0, %v2124
    %v2126 = vmul.f32 %v2118, %v1887
    %v2127 = vmul.f32 %v2112, %v2119
    %v2128 = vadd.f32 %v2126, %v2127
    %v2129 = vtanh.pop %v2128
    %v2130 = vmul.f32 %v2125, %v2129
    %s2131 = scalar_lea.vmem [#allocation2], 48
    %2132 = vst [vmem:[%s2131] sm:$0xff] %v2130
    %s2133 = scalar_lea.vmem [#allocation3], 224
    %v2134 = vld [vmem:[%s2133] sm:$0xff]
    %v2135 = vld [vmem:[%s2133 + $0x8] sm:$0xff]
    %v2136 = vld [vmem:[%s2133 + $0x10] sm:$0xff]
    %v2137 = vld [vmem:[%s2133 + $0x18] sm:$0xff]
    %v2138 = vld [vmem:[#allocation9] sm:$0xff]
    %v2139 = vld [vmem:[#allocation9 + $0x8] sm:$0xff]
    %v2140 = vld [vmem:[#allocation9 + $0x10] sm:$0xff]
    %v2141 = vld [vmem:[#allocation9 + $0x18] sm:$0xff]
    %v2142 = vld [vmem:[#allocation9 + $0x20] sm:$0xff]
    %v2143 = vld [vmem:[#allocation9 + $0x28] sm:$0xff]
    %v2144 = vld [vmem:[#allocation9 + $0x30] sm:$0xff]
    %v2145 = vld [vmem:[#allocation9 + $0x38] sm:$0xff]
    %v2146 = vld [vmem:[#allocation9 + $0x40] sm:$0xff]
    %v2147 = vld [vmem:[#allocation9 + $0x48] sm:$0xff]
    %v2148 = vld [vmem:[#allocation9 + $0x50] sm:$0xff]
    %v2149 = vld [vmem:[#allocation9 + $0x58] sm:$0xff]
    %v2150 = vld [vmem:[#allocation9 + $0x60] sm:$0xff]
    %v2151 = vld [vmem:[#allocation9 + $0x68] sm:$0xff]
    %v2152 = vld [vmem:[#allocation9 + $0x70] sm:$0xff]
    %v2153 = vld [vmem:[#allocation9 + $0x78] sm:$0xff]
    %v2154 = vld [vmem:[#allocation9 + $0x80] sm:$0xff]
    %v2155 = vld [vmem:[#allocation9 + $0x88] sm:$0xff]
    %v2156 = vld [vmem:[#allocation9 + $0x90] sm:$0xff]
    %v2157 = vld [vmem:[#allocation9 + $0x98] sm:$0xff]
    %v2158 = vld [vmem:[#allocation9 + $0xa0] sm:$0xff]
    %v2159 = vld [vmem:[#allocation9 + $0xa8] sm:$0xff]
    %v2160 = vld [vmem:[#allocation9 + $0xb0] sm:$0xff]
    %v2161 = vld [vmem:[#allocation9 + $0xb8] sm:$0xff]
    %v2162 = vld [vmem:[#allocation9 + $0xc0] sm:$0xff]
    %v2163 = vld [vmem:[#allocation9 + $0xc8] sm:$0xff]
    %v2164 = vld [vmem:[#allocation9 + $0xd0] sm:$0xff]
    %v2165 = vld [vmem:[#allocation9 + $0xd8] sm:$0xff]
    %v2166 = vld [vmem:[#allocation9 + $0xe0] sm:$0xff]
    %v2167 = vld [vmem:[#allocation9 + $0xe8] sm:$0xff]
    %v2168 = vld [vmem:[#allocation9 + $0xf0] sm:$0xff]
    %v2169 = vld [vmem:[#allocation9 + $0xf8] sm:$0xff]
    %v2170 = vld [vmem:[#allocation9 + $0x100] sm:$0xff]
    %v2171 = vld [vmem:[#allocation9 + $0x108] sm:$0xff]
    %v2172 = vld [vmem:[#allocation9 + $0x110] sm:$0xff]
    %v2173 = vld [vmem:[#allocation9 + $0x118] sm:$0xff]
    %v2174 = vld [vmem:[#allocation9 + $0x120] sm:$0xff]
    %v2175 = vld [vmem:[#allocation9 + $0x128] sm:$0xff]
    %v2176 = vld [vmem:[#allocation9 + $0x130] sm:$0xff]
    %v2177 = vld [vmem:[#allocation9 + $0x138] sm:$0xff]
    %v2178 = vld [vmem:[#allocation9 + $0x140] sm:$0xff]
    %v2179 = vld [vmem:[#allocation9 + $0x148] sm:$0xff]
    %v2180 = vld [vmem:[#allocation9 + $0x150] sm:$0xff]
    %v2181 = vld [vmem:[#allocation9 + $0x158] sm:$0xff]
    %v2182 = vld [vmem:[#allocation9 + $0x160] sm:$0xff]
    %v2183 = vld [vmem:[#allocation9 + $0x168] sm:$0xff]
    %v2184 = vld [vmem:[#allocation9 + $0x170] sm:$0xff]
    %v2185 = vld [vmem:[#allocation9 + $0x178] sm:$0xff]
    %v2186 = vld [vmem:[#allocation9 + $0x180] sm:$0xff]
    %v2187 = vld [vmem:[#allocation9 + $0x188] sm:$0xff]
    %v2188 = vld [vmem:[#allocation9 + $0x190] sm:$0xff]
    %v2189 = vld [vmem:[#allocation9 + $0x198] sm:$0xff]
    %v2190 = vld [vmem:[#allocation9 + $0x1a0] sm:$0xff]
    %v2191 = vld [vmem:[#allocation9 + $0x1a8] sm:$0xff]
    %v2192 = vld [vmem:[#allocation9 + $0x1b0] sm:$0xff]
    %v2193 = vld [vmem:[#allocation9 + $0x1b8] sm:$0xff]
    %v2194 = vld [vmem:[#allocation9 + $0x1c0] sm:$0xff]
    %v2195 = vld [vmem:[#allocation9 + $0x1c8] sm:$0xff]
    %v2196 = vld [vmem:[#allocation9 + $0x1d0] sm:$0xff]
    %v2197 = vld [vmem:[#allocation9 + $0x1d8] sm:$0xff]
    %v2198 = vld [vmem:[#allocation9 + $0x1e0] sm:$0xff]
    %v2199 = vld [vmem:[#allocation9 + $0x1e8] sm:$0xff]
    %v2200 = vld [vmem:[#allocation9 + $0x1f0] sm:$0xff]
    %v2201 = vld [vmem:[#allocation9 + $0x1f8] sm:$0xff]
    %2202 = vmatprep.subr.mxu0 %v2199
    %2203 = vmatpush1.msra.mxu0 %v2198
    %2204 = vmatprep.subr.mxu0 %v2195
    %2205 = vmatpush1.msra.mxu0 %v2194
    %2206 = vmatprep.subr.mxu0 %v2191
    %2207 = vmatpush1.msra.mxu0 %v2190
    %2208 = vmatprep.subr.mxu0 %v2187
    %2209 = vmatpush1.msra.mxu0 %v2186
    %2210 = vmatprep.subr.mxu0 %v2183
    %2211 = vmatpush1.msra.mxu0 %v2182
    %2212 = vmatprep.subr.mxu0 %v2179
    %2213 = vmatpush1.msra.mxu0 %v2178
    %2214 = vmatprep.subr.mxu0 %v2175
    %2215 = vmatpush1.msra.mxu0 %v2174
    %2216 = vmatprep.subr.mxu0 %v2171
    %2217 = vmatpush1.msra.mxu0 %v2170
    %2218 = vmatprep.subr.mxu0 %v2167
    %2219 = vmatpush1.msra.mxu0 %v2166
    %2220 = vmatprep.subr.mxu0 %v2163
    %2221 = vmatpush1.msra.mxu0 %v2162
    %2222 = vmatprep.subr.mxu0 %v2159
    %2223 = vmatpush1.msra.mxu0 %v2158
    %2224 = vmatprep.subr.mxu0 %v2155
    %2225 = vmatpush1.msra.mxu0 %v2154
    %2226 = vmatprep.subr.mxu0 %v2151
    %2227 = vmatpush1.msra.mxu0 %v2150
    %2228 = vmatprep.subr.mxu0 %v2147
    %2229 = vmatpush1.msra.mxu0 %v2146
    %2230 = vmatprep.subr.mxu0 %v2143
    %2231 = vmatpush1.msra.mxu0 %v2142
    %2232 = vmatprep.subr.mxu0 %v2139
    %2233 = vmatpush1.msra.mxu0 %v2138
    %2234 = vmatprep.subr.mxu0 0.0
    %2235 = vmatpush2.msra.mxu0 0.0
    %2236 = vmatprep.subr.mxu0 0.0
    %2237 = vmatpush2.msra.mxu0 0.0
    %2238 = vmatprep.subr.mxu0 0.0
    %2239 = vmatpush2.msra.mxu0 0.0
    %2240 = vmatprep.subr.mxu0 0.0
    %2241 = vmatpush2.msra.mxu0 0.0
    %2242 = vmatprep.subr.mxu0 0.0
    %2243 = vmatpush2.msra.mxu0 0.0
    %2244 = vmatprep.subr.mxu0 0.0
    %2245 = vmatpush2.msra.mxu0 0.0
    %2246 = vmatprep.subr.mxu0 0.0
    %2247 = vmatpush2.msra.mxu0 0.0
    %2248 = vmatprep.subr.mxu0 0.0
    %2249 = vmatpush2.msra.mxu0 0.0
    %2250 = vmatprep.subr.mxu0 0.0
    %2251 = vmatpush2.msra.mxu0 0.0
    %2252 = vmatprep.subr.mxu0 0.0
    %2253 = vmatpush2.msra.mxu0 0.0
    %2254 = vmatprep.subr.mxu0 0.0
    %2255 = vmatpush2.msra.mxu0 0.0
    %2256 = vmatprep.subr.mxu0 0.0
    %2257 = vmatpush2.msra.mxu0 0.0
    %2258 = vmatprep.subr.mxu0 0.0
    %2259 = vmatpush2.msra.mxu0 0.0
    %2260 = vmatprep.subr.mxu0 0.0
    %2261 = vmatpush2.msra.mxu0 0.0
    %2262 = vmatprep.subr.mxu0 0.0
    %2263 = vmatpush2.msra.mxu0 0.0
    %2264 = vmatprep.subr.mxu0 0.0
    %2265 = vmatpush2.msra.mxu0 0.0
    %2266 = vmatprep.mubr.f32.mxu0 0.0
    %2267 = vmatmul.mubr.f32.gmra.mxu0 %v2130
    %v2268 = vpop.f32.mrf.mxu0
    %v2269 = vadd.f32 0.0, %v2268
    %v2270 = vpop.f32.mrf.mxu0
    %v2271 = vadd.f32 0.0, %v2270
    %2272 = vdwg.mxu0
    %2273 = vmatprep.subr.mxu0 %v2201
    %2274 = vmatpush1.msra.mxu0 %v2200
    %2275 = vmatprep.subr.mxu0 %v2197
    %2276 = vmatpush1.msra.mxu0 %v2196
    %2277 = vmatprep.subr.mxu0 %v2193
    %2278 = vmatpush1.msra.mxu0 %v2192
    %2279 = vmatprep.subr.mxu0 %v2189
    %2280 = vmatpush1.msra.mxu0 %v2188
    %2281 = vmatprep.subr.mxu0 %v2185
    %2282 = vmatpush1.msra.mxu0 %v2184
    %2283 = vmatprep.subr.mxu0 %v2181
    %2284 = vmatpush1.msra.mxu0 %v2180
    %2285 = vmatprep.subr.mxu0 %v2177
    %2286 = vmatpush1.msra.mxu0 %v2176
    %2287 = vmatprep.subr.mxu0 %v2173
    %2288 = vmatpush1.msra.mxu0 %v2172
    %2289 = vmatprep.subr.mxu0 %v2169
    %2290 = vmatpush1.msra.mxu0 %v2168
    %2291 = vmatprep.subr.mxu0 %v2165
    %2292 = vmatpush1.msra.mxu0 %v2164
    %2293 = vmatprep.subr.mxu0 %v2161
    %2294 = vmatpush1.msra.mxu0 %v2160
    %2295 = vmatprep.subr.mxu0 %v2157
    %2296 = vmatpush1.msra.mxu0 %v2156
    %2297 = vmatprep.subr.mxu0 %v2153
    %2298 = vmatpush1.msra.mxu0 %v2152
    %2299 = vmatprep.subr.mxu0 %v2149
    %2300 = vmatpush1.msra.mxu0 %v2148
    %2301 = vmatprep.subr.mxu0 %v2145
    %2302 = vmatpush1.msra.mxu0 %v2144
    %2303 = vmatprep.subr.mxu0 %v2141
    %2304 = vmatpush1.msra.mxu0 %v2140
    %2305 = vmatprep.subr.mxu0 0.0
    %2306 = vmatpush2.msra.mxu0 0.0
    %2307 = vmatprep.subr.mxu0 0.0
    %2308 = vmatpush2.msra.mxu0 0.0
    %2309 = vmatprep.subr.mxu0 0.0
    %2310 = vmatpush2.msra.mxu0 0.0
    %2311 = vmatprep.subr.mxu0 0.0
    %2312 = vmatpush2.msra.mxu0 0.0
    %2313 = vmatprep.subr.mxu0 0.0
    %2314 = vmatpush2.msra.mxu0 0.0
    %2315 = vmatprep.subr.mxu0 0.0
    %2316 = vmatpush2.msra.mxu0 0.0
    %2317 = vmatprep.subr.mxu0 0.0
    %2318 = vmatpush2.msra.mxu0 0.0
    %2319 = vmatprep.subr.mxu0 0.0
    %2320 = vmatpush2.msra.mxu0 0.0
    %2321 = vmatprep.subr.mxu0 0.0
    %2322 = vmatpush2.msra.mxu0 0.0
    %2323 = vmatprep.subr.mxu0 0.0
    %2324 = vmatpush2.msra.mxu0 0.0
    %2325 = vmatprep.subr.mxu0 0.0
    %2326 = vmatpush2.msra.mxu0 0.0
    %2327 = vmatprep.subr.mxu0 0.0
    %2328 = vmatpush2.msra.mxu0 0.0
    %2329 = vmatprep.subr.mxu0 0.0
    %2330 = vmatpush2.msra.mxu0 0.0
    %2331 = vmatprep.subr.mxu0 0.0
    %2332 = vmatpush2.msra.mxu0 0.0
    %2333 = vmatprep.subr.mxu0 0.0
    %2334 = vmatpush2.msra.mxu0 0.0
    %2335 = vmatprep.subr.mxu0 0.0
    %2336 = vmatpush2.msra.mxu0 0.0
    %2337 = vmatprep.mubr.f32.mxu0 0.0
    %2338 = vmatmul.mubr.f32.gmra.mxu0 %v2130
    %v2339 = vpop.f32.mrf.mxu0
    %v2340 = vadd.f32 0.0, %v2339
    %v2341 = vpop.f32.mrf.mxu0
    %v2342 = vadd.f32 0.0, %v2341
    %2343 = vdwg.mxu0
    %v2344 = vadd.f32 %v2134, %v2269
    %v2345 = vadd.f32 %v2135, %v2271
    %v2346 = vadd.f32 %v2136, %v2340
    %v2347 = vadd.f32 %v2137, %v2342
    %v2348 = vxor.u32 %v2344, 2147483648
    %v2349 = vmul.f32 %v2348, 1.442695
    %v2350 = vpow.pop %v2349
    %v2351 = vadd.f32 %v2350, 1.0
    %v2352 = vrcp.pop %v2351
    %v2353 = vmul.f32 1.0, %v2352
    %v2354 = vxor.u32 %v2345, 2147483648
    %v2355 = vmul.f32 %v2354, 1.442695
    %v2356 = vpow.pop %v2355
    %v2357 = vadd.f32 %v2356, 1.0
    %v2358 = vrcp.pop %v2357
    %v2359 = vmul.f32 1.0, %v2358
    %v2360 = vtanh.pop %v2346
    %v2361 = vxor.u32 %v2347, 2147483648
    %v2362 = vmul.f32 %v2361, 1.442695
    %v2363 = vpow.pop %v2362
    %v2364 = vadd.f32 %v2363, 1.0
    %v2365 = vrcp.pop %v2364
    %v2366 = vmul.f32 1.0, %v2365
    %v2367 = vmul.f32 %v2359, %v2128
    %v2368 = vmul.f32 %v2353, %v2360
    %v2369 = vadd.f32 %v2367, %v2368
    %v2370 = vtanh.pop %v2369
    %v2371 = vmul.f32 %v2366, %v2370
    %s2372 = scalar_lea.vmem [#allocation2], 56
    %2373 = vst [vmem:[%s2372] sm:$0xff] %v2371
    %2374 = vst [vmem:[#allocation14] sm:$0xff] %v2371
    %2375 = vst [vmem:[#allocation16] sm:$0xff] %v2369
    %v2376 = vld [vmem:[#allocation2] sm:$0xff]
    %v2377 = vld [vmem:[#allocation2 + $0x8] sm:$0xff]
    %v2378 = vld [vmem:[#allocation2 + $0x10] sm:$0xff]
    %v2379 = vld [vmem:[#allocation2 + $0x18] sm:$0xff]
    %v2380 = vld [vmem:[#allocation2 + $0x20] sm:$0xff]
    %v2381 = vld [vmem:[#allocation2 + $0x28] sm:$0xff]
    %v2382 = vld [vmem:[#allocation2 + $0x30] sm:$0xff]
    %v2383 = vld [vmem:[#allocation2 + $0x38] sm:$0xff]
    %s2384 = scalar_lea.vmem [#allocation7], 512
    %v2385 = vld [vmem:[%s2384] sm:$0xff]
    %v2386 = vld [vmem:[%s2384 + $0x8] sm:$0xff]
    %v2387 = vld [vmem:[%s2384 + $0x10] sm:$0xff]
    %v2388 = vld [vmem:[%s2384 + $0x18] sm:$0xff]
    %v2389 = vld [vmem:[%s2384 + $0x20] sm:$0xff]
    %v2390 = vld [vmem:[%s2384 + $0x28] sm:$0xff]
    %v2391 = vld [vmem:[%s2384 + $0x30] sm:$0xff]
    %v2392 = vld [vmem:[%s2384 + $0x38] sm:$0xff]
    %v2393 = vld [vmem:[%s2384 + $0x40] sm:$0xff]
    %v2394 = vld [vmem:[%s2384 + $0x48] sm:$0xff]
    %v2395 = vld [vmem:[%s2384 + $0x50] sm:$0xff]
    %v2396 = vld [vmem:[%s2384 + $0x58] sm:$0xff]
    %v2397 = vld [vmem:[%s2384 + $0x60] sm:$0xff]
    %v2398 = vld [vmem:[%s2384 + $0x68] sm:$0xff]
    %v2399 = vld [vmem:[%s2384 + $0x70] sm:$0xff]
    %v2400 = vld [vmem:[%s2384 + $0x78] sm:$0xff]
    %v2401 = vld [vmem:[%s2384 + $0x80] sm:$0xff]
    %v2402 = vld [vmem:[%s2384 + $0x88] sm:$0xff]
    %v2403 = vld [vmem:[%s2384 + $0x90] sm:$0xff]
    %v2404 = vld [vmem:[%s2384 + $0x98] sm:$0xff]
    %v2405 = vld [vmem:[%s2384 + $0xa0] sm:$0xff]
    %v2406 = vld [vmem:[%s2384 + $0xa8] sm:$0xff]
    %v2407 = vld [vmem:[%s2384 + $0xb0] sm:$0xff]
    %v2408 = vld [vmem:[%s2384 + $0xb8] sm:$0xff]
    %v2409 = vld [vmem:[%s2384 + $0xc0] sm:$0xff]
    %v2410 = vld [vmem:[%s2384 + $0xc8] sm:$0xff]
    %v2411 = vld [vmem:[%s2384 + $0xd0] sm:$0xff]
    %v2412 = vld [vmem:[%s2384 + $0xd8] sm:$0xff]
    %v2413 = vld [vmem:[%s2384 + $0xe0] sm:$0xff]
    %v2414 = vld [vmem:[%s2384 + $0xe8] sm:$0xff]
    %v2415 = vld [vmem:[%s2384 + $0xf0] sm:$0xff]
    %v2416 = vld [vmem:[%s2384 + $0xf8] sm:$0xff]
    %v2417 = vld [vmem:[%s2384 + $0x100] sm:$0xff]
    %v2418 = vld [vmem:[%s2384 + $0x108] sm:$0xff]
    %v2419 = vld [vmem:[%s2384 + $0x110] sm:$0xff]
    %v2420 = vld [vmem:[%s2384 + $0x118] sm:$0xff]
    %v2421 = vld [vmem:[%s2384 + $0x120] sm:$0xff]
    %v2422 = vld [vmem:[%s2384 + $0x128] sm:$0xff]
    %v2423 = vld [vmem:[%s2384 + $0x130] sm:$0xff]
    %v2424 = vld [vmem:[%s2384 + $0x138] sm:$0xff]
    %v2425 = vld [vmem:[%s2384 + $0x140] sm:$0xff]
    %v2426 = vld [vmem:[%s2384 + $0x148] sm:$0xff]
    %v2427 = vld [vmem:[%s2384 + $0x150] sm:$0xff]
    %v2428 = vld [vmem:[%s2384 + $0x158] sm:$0xff]
    %v2429 = vld [vmem:[%s2384 + $0x160] sm:$0xff]
    %v2430 = vld [vmem:[%s2384 + $0x168] sm:$0xff]
    %v2431 = vld [vmem:[%s2384 + $0x170] sm:$0xff]
    %v2432 = vld [vmem:[%s2384 + $0x178] sm:$0xff]
    %v2433 = vld [vmem:[%s2384 + $0x180] sm:$0xff]
    %v2434 = vld [vmem:[%s2384 + $0x188] sm:$0xff]
    %v2435 = vld [vmem:[%s2384 + $0x190] sm:$0xff]
    %v2436 = vld [vmem:[%s2384 + $0x198] sm:$0xff]
    %v2437 = vld [vmem:[%s2384 + $0x1a0] sm:$0xff]
    %v2438 = vld [vmem:[%s2384 + $0x1a8] sm:$0xff]
    %v2439 = vld [vmem:[%s2384 + $0x1b0] sm:$0xff]
    %v2440 = vld [vmem:[%s2384 + $0x1b8] sm:$0xff]
    %v2441 = vld [vmem:[%s2384 + $0x1c0] sm:$0xff]
    %v2442 = vld [vmem:[%s2384 + $0x1c8] sm:$0xff]
    %v2443 = vld [vmem:[%s2384 + $0x1d0] sm:$0xff]
    %v2444 = vld [vmem:[%s2384 + $0x1d8] sm:$0xff]
    %v2445 = vld [vmem:[%s2384 + $0x1e0] sm:$0xff]
    %v2446 = vld [vmem:[%s2384 + $0x1e8] sm:$0xff]
    %v2447 = vld [vmem:[%s2384 + $0x1f0] sm:$0xff]
    %v2448 = vld [vmem:[%s2384 + $0x1f8] sm:$0xff]
    %s2449 = scalar_lea.vmem [#allocation10], 4
    %v2450 = vld [vmem:[%s2449] sm:$0xf]
    %v2452 = vlaneseq
    %v2453 = vshrl.u32 %v2452, 7
    %v2454 = vsub.s32 0, %v2453
    %v2455 = vrot.slane %v2450, %v2454
    %v2456 = vlaneseq
    %v2457 = vshrl.u32 %v2456, 7
    %v2458 = vsub.s32 1, %v2457
    %v2459 = vrot.slane %v2450, %v2458
    %v2460 = vlaneseq
    %v2461 = vshrl.u32 %v2460, 7
    %v2462 = vsub.s32 2, %v2461
    %v2463 = vrot.slane %v2450, %v2462
    %v2464 = vlaneseq
    %v2465 = vshrl.u32 %v2464, 7
    %v2466 = vsub.s32 3, %v2465
    %v2467 = vrot.slane %v2450, %v2466
    %2472 = vmatprep.subr.mxu0 %v2446
    %2473 = vmatpush1.msra.mxu0 %v2445
    %2474 = vmatprep.subr.mxu0 %v2442
    %2475 = vmatpush1.msra.mxu0 %v2441
    %2476 = vmatprep.subr.mxu0 %v2438
    %2477 = vmatpush1.msra.mxu0 %v2437
    %2478 = vmatprep.subr.mxu0 %v2434
    %2479 = vmatpush1.msra.mxu0 %v2433
    %2480 = vmatprep.subr.mxu0 %v2430
    %2481 = vmatpush1.msra.mxu0 %v2429
    %2482 = vmatprep.subr.mxu0 %v2426
    %2483 = vmatpush1.msra.mxu0 %v2425
    %2484 = vmatprep.subr.mxu0 %v2422
    %2485 = vmatpush1.msra.mxu0 %v2421
    %2486 = vmatprep.subr.mxu0 %v2418
    %2487 = vmatpush1.msra.mxu0 %v2417
    %2488 = vmatprep.subr.mxu0 %v2414
    %2489 = vmatpush1.msra.mxu0 %v2413
    %2490 = vmatprep.subr.mxu0 %v2410
    %2491 = vmatpush1.msra.mxu0 %v2409
    %2492 = vmatprep.subr.mxu0 %v2406
    %2493 = vmatpush1.msra.mxu0 %v2405
    %2494 = vmatprep.subr.mxu0 %v2402
    %2495 = vmatpush1.msra.mxu0 %v2401
    %2496 = vmatprep.subr.mxu0 %v2398
    %2497 = vmatpush1.msra.mxu0 %v2397
    %2498 = vmatprep.subr.mxu0 %v2394
    %2499 = vmatpush1.msra.mxu0 %v2393
    %2500 = vmatprep.subr.mxu0 %v2390
    %2501 = vmatpush1.msra.mxu0 %v2389
    %2502 = vmatprep.subr.mxu0 %v2386
    %2503 = vmatpush1.msra.mxu0 %v2385
    %2504 = vmatprep.subr.mxu0 0.0
    %2505 = vmatpush2.msra.mxu0 0.0
    %2506 = vmatprep.subr.mxu0 0.0
    %2507 = vmatpush2.msra.mxu0 0.0
    %2508 = vmatprep.subr.mxu0 0.0
    %2509 = vmatpush2.msra.mxu0 0.0
    %2510 = vmatprep.subr.mxu0 0.0
    %2511 = vmatpush2.msra.mxu0 0.0
    %2512 = vmatprep.subr.mxu0 0.0
    %2513 = vmatpush2.msra.mxu0 0.0
    %2514 = vmatprep.subr.mxu0 0.0
    %2515 = vmatpush2.msra.mxu0 0.0
    %2516 = vmatprep.subr.mxu0 0.0
    %2517 = vmatpush2.msra.mxu0 0.0
    %2518 = vmatprep.subr.mxu0 0.0
    %2519 = vmatpush2.msra.mxu0 0.0
    %2520 = vmatprep.subr.mxu0 0.0
    %2521 = vmatpush2.msra.mxu0 0.0
    %2522 = vmatprep.subr.mxu0 0.0
    %2523 = vmatpush2.msra.mxu0 0.0
    %2524 = vmatprep.subr.mxu0 0.0
    %2525 = vmatpush2.msra.mxu0 0.0
    %2526 = vmatprep.subr.mxu0 0.0
    %2527 = vmatpush2.msra.mxu0 0.0
    %2528 = vmatprep.subr.mxu0 0.0
    %2529 = vmatpush2.msra.mxu0 0.0
    %2530 = vmatprep.subr.mxu0 0.0
    %2531 = vmatpush2.msra.mxu0 0.0
    %2532 = vmatprep.subr.mxu0 0.0
    %2533 = vmatpush2.msra.mxu0 0.0
    %2534 = vmatprep.subr.mxu0 0.0
    %2535 = vmatpush2.msra.mxu0 0.0
    %2536 = vmatprep.mubr.f32.mxu0 0.0
    %2537 = vmatmul.mubr.f32.gmra.mxu0 %v2376
    %v2538 = vpop.f32.mrf.mxu0
    %v2539 = vadd.f32 %v2455, %v2538
    %v2540 = vpop.f32.mrf.mxu0
    %v2541 = vadd.f32 %v2459, %v2540
    %2542 = vmatprep.mubr.f32.mxu0 0.0
    %2543 = vmatmul.mubr.f32.gmra.mxu0 %v2377
    %v2544 = vpop.f32.mrf.mxu0
    %v2545 = vadd.f32 %v2455, %v2544
    %v2546 = vpop.f32.mrf.mxu0
    %v2547 = vadd.f32 %v2459, %v2546
    %2548 = vmatprep.mubr.f32.mxu0 0.0
    %2549 = vmatmul.mubr.f32.gmra.mxu0 %v2378
    %v2550 = vpop.f32.mrf.mxu0
    %v2551 = vadd.f32 %v2455, %v2550
    %v2552 = vpop.f32.mrf.mxu0
    %v2553 = vadd.f32 %v2459, %v2552
    %2554 = vmatprep.mubr.f32.mxu0 0.0
    %2555 = vmatmul.mubr.f32.gmra.mxu0 %v2379
    %v2556 = vpop.f32.mrf.mxu0
    %v2557 = vadd.f32 %v2455, %v2556
    %v2558 = vpop.f32.mrf.mxu0
    %v2559 = vadd.f32 %v2459, %v2558
    %2560 = vmatprep.mubr.f32.mxu0 0.0
    %2561 = vmatmul.mubr.f32.gmra.mxu0 %v2380
    %v2562 = vpop.f32.mrf.mxu0
    %v2563 = vadd.f32 %v2455, %v2562
    %v2564 = vpop.f32.mrf.mxu0
    %v2565 = vadd.f32 %v2459, %v2564
    %2566 = vmatprep.mubr.f32.mxu0 0.0
    %2567 = vmatmul.mubr.f32.gmra.mxu0 %v2381
    %v2568 = vpop.f32.mrf.mxu0
    %v2569 = vadd.f32 %v2455, %v2568
    %v2570 = vpop.f32.mrf.mxu0
    %v2571 = vadd.f32 %v2459, %v2570
    %2572 = vmatprep.mubr.f32.mxu0 0.0
    %2573 = vmatmul.mubr.f32.gmra.mxu0 %v2382
    %v2574 = vpop.f32.mrf.mxu0
    %v2575 = vadd.f32 %v2455, %v2574
    %v2576 = vpop.f32.mrf.mxu0
    %v2577 = vadd.f32 %v2459, %v2576
    %2578 = vmatprep.mubr.f32.mxu0 0.0
    %2579 = vmatmul.mubr.f32.gmra.mxu0 %v2383
    %v2580 = vpop.f32.mrf.mxu0
    %v2581 = vadd.f32 %v2455, %v2580
    %v2582 = vpop.f32.mrf.mxu0
    %v2583 = vadd.f32 %v2459, %v2582
    %2584 = vdwg.mxu0
    %2585 = vmatprep.subr.mxu0 %v2448
    %2586 = vmatpush1.msra.mxu0 %v2447
    %2587 = vmatprep.subr.mxu0 %v2444
    %2588 = vmatpush1.msra.mxu0 %v2443
    %2589 = vmatprep.subr.mxu0 %v2440
    %2590 = vmatpush1.msra.mxu0 %v2439
    %2591 = vmatprep.subr.mxu0 %v2436
    %2592 = vmatpush1.msra.mxu0 %v2435
    %2593 = vmatprep.subr.mxu0 %v2432
    %2594 = vmatpush1.msra.mxu0 %v2431
    %2595 = vmatprep.subr.mxu0 %v2428
    %2596 = vmatpush1.msra.mxu0 %v2427
    %2597 = vmatprep.subr.mxu0 %v2424
    %2598 = vmatpush1.msra.mxu0 %v2423
    %2599 = vmatprep.subr.mxu0 %v2420
    %2600 = vmatpush1.msra.mxu0 %v2419
    %2601 = vmatprep.subr.mxu0 %v2416
    %2602 = vmatpush1.msra.mxu0 %v2415
    %2603 = vmatprep.subr.mxu0 %v2412
    %2604 = vmatpush1.msra.mxu0 %v2411
    %2605 = vmatprep.subr.mxu0 %v2408
    %2606 = vmatpush1.msra.mxu0 %v2407
    %2607 = vmatprep.subr.mxu0 %v2404
    %2608 = vmatpush1.msra.mxu0 %v2403
    %2609 = vmatprep.subr.mxu0 %v2400
    %2610 = vmatpush1.msra.mxu0 %v2399
    %2611 = vmatprep.subr.mxu0 %v2396
    %2612 = vmatpush1.msra.mxu0 %v2395
    %2613 = vmatprep.subr.mxu0 %v2392
    %2614 = vmatpush1.msra.mxu0 %v2391
    %2615 = vmatprep.subr.mxu0 %v2388
    %2616 = vmatpush1.msra.mxu0 %v2387
    %2617 = vmatprep.subr.mxu0 0.0
    %2618 = vmatpush2.msra.mxu0 0.0
    %2619 = vmatprep.subr.mxu0 0.0
    %2620 = vmatpush2.msra.mxu0 0.0
    %2621 = vmatprep.subr.mxu0 0.0
    %2622 = vmatpush2.msra.mxu0 0.0
    %2623 = vmatprep.subr.mxu0 0.0
    %2624 = vmatpush2.msra.mxu0 0.0
    %2625 = vmatprep.subr.mxu0 0.0
    %2626 = vmatpush2.msra.mxu0 0.0
    %2627 = vmatprep.subr.mxu0 0.0
    %2628 = vmatpush2.msra.mxu0 0.0
    %2629 = vmatprep.subr.mxu0 0.0
    %2630 = vmatpush2.msra.mxu0 0.0
    %2631 = vmatprep.subr.mxu0 0.0
    %2632 = vmatpush2.msra.mxu0 0.0
    %2633 = vmatprep.subr.mxu0 0.0
    %2634 = vmatpush2.msra.mxu0 0.0
    %2635 = vmatprep.subr.mxu0 0.0
    %2636 = vmatpush2.msra.mxu0 0.0
    %2637 = vmatprep.subr.mxu0 0.0
    %2638 = vmatpush2.msra.mxu0 0.0
    %2639 = vmatprep.subr.mxu0 0.0
    %2640 = vmatpush2.msra.mxu0 0.0
    %2641 = vmatprep.subr.mxu0 0.0
    %2642 = vmatpush2.msra.mxu0 0.0
    %2643 = vmatprep.subr.mxu0 0.0
    %2644 = vmatpush2.msra.mxu0 0.0
    %2645 = vmatprep.subr.mxu0 0.0
    %2646 = vmatpush2.msra.mxu0 0.0
    %2647 = vmatprep.subr.mxu0 0.0
    %2648 = vmatpush2.msra.mxu0 0.0
    %2649 = vmatprep.mubr.f32.mxu0 0.0
    %2650 = vmatmul.mubr.f32.gmra.mxu0 %v2376
    %v2651 = vpop.f32.mrf.mxu0
    %v2652 = vadd.f32 %v2463, %v2651
    %v2653 = vpop.f32.mrf.mxu0
    %v2654 = vadd.f32 %v2467, %v2653
    %2655 = vmatprep.mubr.f32.mxu0 0.0
    %2656 = vmatmul.mubr.f32.gmra.mxu0 %v2377
    %v2657 = vpop.f32.mrf.mxu0
    %v2658 = vadd.f32 %v2463, %v2657
    %v2659 = vpop.f32.mrf.mxu0
    %v2660 = vadd.f32 %v2467, %v2659
    %2661 = vmatprep.mubr.f32.mxu0 0.0
    %2662 = vmatmul.mubr.f32.gmra.mxu0 %v2378
    %v2663 = vpop.f32.mrf.mxu0
    %v2664 = vadd.f32 %v2463, %v2663
    %v2665 = vpop.f32.mrf.mxu0
    %v2666 = vadd.f32 %v2467, %v2665
    %2667 = vmatprep.mubr.f32.mxu0 0.0
    %2668 = vmatmul.mubr.f32.gmra.mxu0 %v2379
    %v2669 = vpop.f32.mrf.mxu0
    %v2670 = vadd.f32 %v2463, %v2669
    %v2671 = vpop.f32.mrf.mxu0
    %v2672 = vadd.f32 %v2467, %v2671
    %2673 = vmatprep.mubr.f32.mxu0 0.0
    %2674 = vmatmul.mubr.f32.gmra.mxu0 %v2380
    %v2675 = vpop.f32.mrf.mxu0
    %v2676 = vadd.f32 %v2463, %v2675
    %v2677 = vpop.f32.mrf.mxu0
    %v2678 = vadd.f32 %v2467, %v2677
    %2679 = vmatprep.mubr.f32.mxu0 0.0
    %2680 = vmatmul.mubr.f32.gmra.mxu0 %v2381
    %v2681 = vpop.f32.mrf.mxu0
    %v2682 = vadd.f32 %v2463, %v2681
    %v2683 = vpop.f32.mrf.mxu0
    %v2684 = vadd.f32 %v2467, %v2683
    %2685 = vmatprep.mubr.f32.mxu0 0.0
    %2686 = vmatmul.mubr.f32.gmra.mxu0 %v2382
    %v2687 = vpop.f32.mrf.mxu0
    %v2688 = vadd.f32 %v2463, %v2687
    %v2689 = vpop.f32.mrf.mxu0
    %v2690 = vadd.f32 %v2467, %v2689
    %2691 = vmatprep.mubr.f32.mxu0 0.0
    %2692 = vmatmul.mubr.f32.gmra.mxu0 %v2383
    %v2693 = vpop.f32.mrf.mxu0
    %v2694 = vadd.f32 %v2463, %v2693
    %v2695 = vpop.f32.mrf.mxu0
    %v2696 = vadd.f32 %v2467, %v2695
    %2697 = vdwg.mxu0
    %2698 = vst [vmem:[#allocation3] sm:$0xff] %v2539
    %2699 = vst [vmem:[#allocation3 + $0x8] sm:$0xff] %v2541
    %2700 = vst [vmem:[#allocation3 + $0x10] sm:$0xff] %v2652
    %2701 = vst [vmem:[#allocation3 + $0x18] sm:$0xff] %v2654
    %2702 = vst [vmem:[#allocation3 + $0x20] sm:$0xff] %v2545
    %2703 = vst [vmem:[#allocation3 + $0x28] sm:$0xff] %v2547
    %2704 = vst [vmem:[#allocation3 + $0x30] sm:$0xff] %v2658
    %2705 = vst [vmem:[#allocation3 + $0x38] sm:$0xff] %v2660
    %2706 = vst [vmem:[#allocation3 + $0x40] sm:$0xff] %v2551
    %2707 = vst [vmem:[#allocation3 + $0x48] sm:$0xff] %v2553
    %2708 = vst [vmem:[#allocation3 + $0x50] sm:$0xff] %v2664
    %2709 = vst [vmem:[#allocation3 + $0x58] sm:$0xff] %v2666
    %2710 = vst [vmem:[#allocation3 + $0x60] sm:$0xff] %v2557
    %2711 = vst [vmem:[#allocation3 + $0x68] sm:$0xff] %v2559
    %2712 = vst [vmem:[#allocation3 + $0x70] sm:$0xff] %v2670
    %2713 = vst [vmem:[#allocation3 + $0x78] sm:$0xff] %v2672
    %2714 = vst [vmem:[#allocation3 + $0x80] sm:$0xff] %v2563
    %2715 = vst [vmem:[#allocation3 + $0x88] sm:$0xff] %v2565
    %2716 = vst [vmem:[#allocation3 + $0x90] sm:$0xff] %v2676
    %2717 = vst [vmem:[#allocation3 + $0x98] sm:$0xff] %v2678
    %2718 = vst [vmem:[#allocation3 + $0xa0] sm:$0xff] %v2569
    %2719 = vst [vmem:[#allocation3 + $0xa8] sm:$0xff] %v2571
    %2720 = vst [vmem:[#allocation3 + $0xb0] sm:$0xff] %v2682
    %2721 = vst [vmem:[#allocation3 + $0xb8] sm:$0xff] %v2684
    %2722 = vst [vmem:[#allocation3 + $0xc0] sm:$0xff] %v2575
    %2723 = vst [vmem:[#allocation3 + $0xc8] sm:$0xff] %v2577
    %2724 = vst [vmem:[#allocation3 + $0xd0] sm:$0xff] %v2688
    %2725 = vst [vmem:[#allocation3 + $0xd8] sm:$0xff] %v2690
    %2726 = vst [vmem:[#allocation3 + $0xe0] sm:$0xff] %v2581
    %2727 = vst [vmem:[#allocation3 + $0xe8] sm:$0xff] %v2583
    %2728 = vst [vmem:[#allocation3 + $0xf0] sm:$0xff] %v2694
    %2729 = vst [vmem:[#allocation3 + $0xf8] sm:$0xff] %v2696
    %v2730 = vld [vmem:[#allocation3] sm:$0xff]
    %v2731 = vld [vmem:[#allocation3 + $0x8] sm:$0xff]
    %v2732 = vld [vmem:[#allocation3 + $0x10] sm:$0xff]
    %v2733 = vld [vmem:[#allocation3 + $0x18] sm:$0xff]
    %s2734 = scalar_lea.vmem [#allocation9], 512
    %v2735 = vld [vmem:[%s2734] sm:$0xff]
    %v2736 = vld [vmem:[%s2734 + $0x8] sm:$0xff]
    %v2737 = vld [vmem:[%s2734 + $0x10] sm:$0xff]
    %v2738 = vld [vmem:[%s2734 + $0x18] sm:$0xff]
    %v2739 = vld [vmem:[%s2734 + $0x20] sm:$0xff]
    %v2740 = vld [vmem:[%s2734 + $0x28] sm:$0xff]
    %v2741 = vld [vmem:[%s2734 + $0x30] sm:$0xff]
    %v2742 = vld [vmem:[%s2734 + $0x38] sm:$0xff]
    %v2743 = vld [vmem:[%s2734 + $0x40] sm:$0xff]
    %v2744 = vld [vmem:[%s2734 + $0x48] sm:$0xff]
    %v2745 = vld [vmem:[%s2734 + $0x50] sm:$0xff]
    %v2746 = vld [vmem:[%s2734 + $0x58] sm:$0xff]
    %v2747 = vld [vmem:[%s2734 + $0x60] sm:$0xff]
    %v2748 = vld [vmem:[%s2734 + $0x68] sm:$0xff]
    %v2749 = vld [vmem:[%s2734 + $0x70] sm:$0xff]
    %v2750 = vld [vmem:[%s2734 + $0x78] sm:$0xff]
    %v2751 = vld [vmem:[%s2734 + $0x80] sm:$0xff]
    %v2752 = vld [vmem:[%s2734 + $0x88] sm:$0xff]
    %v2753 = vld [vmem:[%s2734 + $0x90] sm:$0xff]
    %v2754 = vld [vmem:[%s2734 + $0x98] sm:$0xff]
    %v2755 = vld [vmem:[%s2734 + $0xa0] sm:$0xff]
    %v2756 = vld [vmem:[%s2734 + $0xa8] sm:$0xff]
    %v2757 = vld [vmem:[%s2734 + $0xb0] sm:$0xff]
    %v2758 = vld [vmem:[%s2734 + $0xb8] sm:$0xff]
    %v2759 = vld [vmem:[%s2734 + $0xc0] sm:$0xff]
    %v2760 = vld [vmem:[%s2734 + $0xc8] sm:$0xff]
    %v2761 = vld [vmem:[%s2734 + $0xd0] sm:$0xff]
    %v2762 = vld [vmem:[%s2734 + $0xd8] sm:$0xff]
    %v2763 = vld [vmem:[%s2734 + $0xe0] sm:$0xff]
    %v2764 = vld [vmem:[%s2734 + $0xe8] sm:$0xff]
    %v2765 = vld [vmem:[%s2734 + $0xf0] sm:$0xff]
    %v2766 = vld [vmem:[%s2734 + $0xf8] sm:$0xff]
    %v2767 = vld [vmem:[%s2734 + $0x100] sm:$0xff]
    %v2768 = vld [vmem:[%s2734 + $0x108] sm:$0xff]
    %v2769 = vld [vmem:[%s2734 + $0x110] sm:$0xff]
    %v2770 = vld [vmem:[%s2734 + $0x118] sm:$0xff]
    %v2771 = vld [vmem:[%s2734 + $0x120] sm:$0xff]
    %v2772 = vld [vmem:[%s2734 + $0x128] sm:$0xff]
    %v2773 = vld [vmem:[%s2734 + $0x130] sm:$0xff]
    %v2774 = vld [vmem:[%s2734 + $0x138] sm:$0xff]
    %v2775 = vld [vmem:[%s2734 + $0x140] sm:$0xff]
    %v2776 = vld [vmem:[%s2734 + $0x148] sm:$0xff]
    %v2777 = vld [vmem:[%s2734 + $0x150] sm:$0xff]
    %v2778 = vld [vmem:[%s2734 + $0x158] sm:$0xff]
    %v2779 = vld [vmem:[%s2734 + $0x160] sm:$0xff]
    %v2780 = vld [vmem:[%s2734 + $0x168] sm:$0xff]
    %v2781 = vld [vmem:[%s2734 + $0x170] sm:$0xff]
    %v2782 = vld [vmem:[%s2734 + $0x178] sm:$0xff]
    %v2783 = vld [vmem:[%s2734 + $0x180] sm:$0xff]
    %v2784 = vld [vmem:[%s2734 + $0x188] sm:$0xff]
    %v2785 = vld [vmem:[%s2734 + $0x190] sm:$0xff]
    %v2786 = vld [vmem:[%s2734 + $0x198] sm:$0xff]
    %v2787 = vld [vmem:[%s2734 + $0x1a0] sm:$0xff]
    %v2788 = vld [vmem:[%s2734 + $0x1a8] sm:$0xff]
    %v2789 = vld [vmem:[%s2734 + $0x1b0] sm:$0xff]
    %v2790 = vld [vmem:[%s2734 + $0x1b8] sm:$0xff]
    %v2791 = vld [vmem:[%s2734 + $0x1c0] sm:$0xff]
    %v2792 = vld [vmem:[%s2734 + $0x1c8] sm:$0xff]
    %v2793 = vld [vmem:[%s2734 + $0x1d0] sm:$0xff]
    %v2794 = vld [vmem:[%s2734 + $0x1d8] sm:$0xff]
    %v2795 = vld [vmem:[%s2734 + $0x1e0] sm:$0xff]
    %v2796 = vld [vmem:[%s2734 + $0x1e8] sm:$0xff]
    %v2797 = vld [vmem:[%s2734 + $0x1f0] sm:$0xff]
    %v2798 = vld [vmem:[%s2734 + $0x1f8] sm:$0xff]
    %2799 = vmatprep.subr.mxu0 %v2796
    %2800 = vmatpush1.msra.mxu0 %v2795
    %2801 = vmatprep.subr.mxu0 %v2792
    %2802 = vmatpush1.msra.mxu0 %v2791
    %2803 = vmatprep.subr.mxu0 %v2788
    %2804 = vmatpush1.msra.mxu0 %v2787
    %2805 = vmatprep.subr.mxu0 %v2784
    %2806 = vmatpush1.msra.mxu0 %v2783
    %2807 = vmatprep.subr.mxu0 %v2780
    %2808 = vmatpush1.msra.mxu0 %v2779
    %2809 = vmatprep.subr.mxu0 %v2776
    %2810 = vmatpush1.msra.mxu0 %v2775
    %2811 = vmatprep.subr.mxu0 %v2772
    %2812 = vmatpush1.msra.mxu0 %v2771
    %2813 = vmatprep.subr.mxu0 %v2768
    %2814 = vmatpush1.msra.mxu0 %v2767
    %2815 = vmatprep.subr.mxu0 %v2764
    %2816 = vmatpush1.msra.mxu0 %v2763
    %2817 = vmatprep.subr.mxu0 %v2760
    %2818 = vmatpush1.msra.mxu0 %v2759
    %2819 = vmatprep.subr.mxu0 %v2756
    %2820 = vmatpush1.msra.mxu0 %v2755
    %2821 = vmatprep.subr.mxu0 %v2752
    %2822 = vmatpush1.msra.mxu0 %v2751
    %2823 = vmatprep.subr.mxu0 %v2748
    %2824 = vmatpush1.msra.mxu0 %v2747
    %2825 = vmatprep.subr.mxu0 %v2744
    %2826 = vmatpush1.msra.mxu0 %v2743
    %2827 = vmatprep.subr.mxu0 %v2740
    %2828 = vmatpush1.msra.mxu0 %v2739
    %2829 = vmatprep.subr.mxu0 %v2736
    %2830 = vmatpush1.msra.mxu0 %v2735
    %2831 = vmatprep.subr.mxu0 0.0
    %2832 = vmatpush2.msra.mxu0 0.0
    %2833 = vmatprep.subr.mxu0 0.0
    %2834 = vmatpush2.msra.mxu0 0.0
    %2835 = vmatprep.subr.mxu0 0.0
    %2836 = vmatpush2.msra.mxu0 0.0
    %2837 = vmatprep.subr.mxu0 0.0
    %2838 = vmatpush2.msra.mxu0 0.0
    %2839 = vmatprep.subr.mxu0 0.0
    %2840 = vmatpush2.msra.mxu0 0.0
    %2841 = vmatprep.subr.mxu0 0.0
    %2842 = vmatpush2.msra.mxu0 0.0
    %2843 = vmatprep.subr.mxu0 0.0
    %2844 = vmatpush2.msra.mxu0 0.0
    %2845 = vmatprep.subr.mxu0 0.0
    %2846 = vmatpush2.msra.mxu0 0.0
    %2847 = vmatprep.subr.mxu0 0.0
    %2848 = vmatpush2.msra.mxu0 0.0
    %2849 = vmatprep.subr.mxu0 0.0
    %2850 = vmatpush2.msra.mxu0 0.0
    %2851 = vmatprep.subr.mxu0 0.0
    %2852 = vmatpush2.msra.mxu0 0.0
    %2853 = vmatprep.subr.mxu0 0.0
    %2854 = vmatpush2.msra.mxu0 0.0
    %2855 = vmatprep.subr.mxu0 0.0
    %2856 = vmatpush2.msra.mxu0 0.0
    %2857 = vmatprep.subr.mxu0 0.0
    %2858 = vmatpush2.msra.mxu0 0.0
    %2859 = vmatprep.subr.mxu0 0.0
    %2860 = vmatpush2.msra.mxu0 0.0
    %2861 = vmatprep.subr.mxu0 0.0
    %2862 = vmatpush2.msra.mxu0 0.0
    %2863 = vmatprep.mubr.f32.mxu0 0.0
    %2864 = vmatmul.mubr.f32.gmra.mxu0 0.0
    %v2865 = vpop.f32.mrf.mxu0
    %v2866 = vadd.f32 0.0, %v2865
    %v2867 = vpop.f32.mrf.mxu0
    %v2868 = vadd.f32 0.0, %v2867
    %2869 = vdwg.mxu0
    %2870 = vmatprep.subr.mxu0 %v2798
    %2871 = vmatpush1.msra.mxu0 %v2797
    %2872 = vmatprep.subr.mxu0 %v2794
    %2873 = vmatpush1.msra.mxu0 %v2793
    %2874 = vmatprep.subr.mxu0 %v2790
    %2875 = vmatpush1.msra.mxu0 %v2789
    %2876 = vmatprep.subr.mxu0 %v2786
    %2877 = vmatpush1.msra.mxu0 %v2785
    %2878 = vmatprep.subr.mxu0 %v2782
    %2879 = vmatpush1.msra.mxu0 %v2781
    %2880 = vmatprep.subr.mxu0 %v2778
    %2881 = vmatpush1.msra.mxu0 %v2777
    %2882 = vmatprep.subr.mxu0 %v2774
    %2883 = vmatpush1.msra.mxu0 %v2773
    %2884 = vmatprep.subr.mxu0 %v2770
    %2885 = vmatpush1.msra.mxu0 %v2769
    %2886 = vmatprep.subr.mxu0 %v2766
    %2887 = vmatpush1.msra.mxu0 %v2765
    %2888 = vmatprep.subr.mxu0 %v2762
    %2889 = vmatpush1.msra.mxu0 %v2761
    %2890 = vmatprep.subr.mxu0 %v2758
    %2891 = vmatpush1.msra.mxu0 %v2757
    %2892 = vmatprep.subr.mxu0 %v2754
    %2893 = vmatpush1.msra.mxu0 %v2753
    %2894 = vmatprep.subr.mxu0 %v2750
    %2895 = vmatpush1.msra.mxu0 %v2749
    %2896 = vmatprep.subr.mxu0 %v2746
    %2897 = vmatpush1.msra.mxu0 %v2745
    %2898 = vmatprep.subr.mxu0 %v2742
    %2899 = vmatpush1.msra.mxu0 %v2741
    %2900 = vmatprep.subr.mxu0 %v2738
    %2901 = vmatpush1.msra.mxu0 %v2737
    %2902 = vmatprep.subr.mxu0 0.0
    %2903 = vmatpush2.msra.mxu0 0.0
    %2904 = vmatprep.subr.mxu0 0.0
    %2905 = vmatpush2.msra.mxu0 0.0
    %2906 = vmatprep.subr.mxu0 0.0
    %2907 = vmatpush2.msra.mxu0 0.0
    %2908 = vmatprep.subr.mxu0 0.0
    %2909 = vmatpush2.msra.mxu0 0.0
    %2910 = vmatprep.subr.mxu0 0.0
    %2911 = vmatpush2.msra.mxu0 0.0
    %2912 = vmatprep.subr.mxu0 0.0
    %2913 = vmatpush2.msra.mxu0 0.0
    %2914 = vmatprep.subr.mxu0 0.0
    %2915 = vmatpush2.msra.mxu0 0.0
    %2916 = vmatprep.subr.mxu0 0.0
    %2917 = vmatpush2.msra.mxu0 0.0
    %2918 = vmatprep.subr.mxu0 0.0
    %2919 = vmatpush2.msra.mxu0 0.0
    %2920 = vmatprep.subr.mxu0 0.0
    %2921 = vmatpush2.msra.mxu0 0.0
    %2922 = vmatprep.subr.mxu0 0.0
    %2923 = vmatpush2.msra.mxu0 0.0
    %2924 = vmatprep.subr.mxu0 0.0
    %2925 = vmatpush2.msra.mxu0 0.0
    %2926 = vmatprep.subr.mxu0 0.0
    %2927 = vmatpush2.msra.mxu0 0.0
    %2928 = vmatprep.subr.mxu0 0.0
    %2929 = vmatpush2.msra.mxu0 0.0
    %2930 = vmatprep.subr.mxu0 0.0
    %2931 = vmatpush2.msra.mxu0 0.0
    %2932 = vmatprep.subr.mxu0 0.0
    %2933 = vmatpush2.msra.mxu0 0.0
    %2934 = vmatprep.mubr.f32.mxu0 0.0
    %2935 = vmatmul.mubr.f32.gmra.mxu0 0.0
    %v2936 = vpop.f32.mrf.mxu0
    %v2937 = vadd.f32 0.0, %v2936
    %v2938 = vpop.f32.mrf.mxu0
    %v2939 = vadd.f32 0.0, %v2938
    %2940 = vdwg.mxu0
    %v2941 = vadd.f32 %v2730, %v2866
    %v2942 = vadd.f32 %v2731, %v2868
    %v2943 = vadd.f32 %v2732, %v2937
    %v2944 = vadd.f32 %v2733, %v2939
    %v2945 = vxor.u32 %v2941, 2147483648
    %v2946 = vmul.f32 %v2945, 1.442695
    %v2947 = vpow.pop %v2946
    %v2948 = vadd.f32 %v2947, 1.0
    %v2949 = vrcp.pop %v2948
    %v2950 = vmul.f32 1.0, %v2949
    %v2951 = vxor.u32 %v2942, 2147483648
    %v2952 = vmul.f32 %v2951, 1.442695
    %v2953 = vpow.pop %v2952
    %v2954 = vadd.f32 %v2953, 1.0
    %v2955 = vrcp.pop %v2954
    %v2956 = vmul.f32 1.0, %v2955
    %v2957 = vtanh.pop %v2943
    %v2958 = vxor.u32 %v2944, 2147483648
    %v2959 = vmul.f32 %v2958, 1.442695
    %v2960 = vpow.pop %v2959
    %v2961 = vadd.f32 %v2960, 1.0
    %v2962 = vrcp.pop %v2961
    %v2963 = vmul.f32 1.0, %v2962
    %v2964 = vmul.f32 %v2956, 0.0
    %v2965 = vmul.f32 %v2950, %v2957
    %v2966 = vadd.f32 %v2964, %v2965
    %v2967 = vtanh.pop %v2966
    %v2968 = vmul.f32 %v2963, %v2967
    %v2969 = vld [vmem:[%s687] sm:$0xff]
    %v2970 = vld [vmem:[%s687 + $0x8] sm:$0xff]
    %v2971 = vld [vmem:[%s687 + $0x10] sm:$0xff]
    %v2972 = vld [vmem:[%s687 + $0x18] sm:$0xff]
    %2973 = vmatprep.subr.mxu0 %v2796
    %2974 = vmatpush1.msra.mxu0 %v2795
    %2975 = vmatprep.subr.mxu0 %v2792
    %2976 = vmatpush1.msra.mxu0 %v2791
    %2977 = vmatprep.subr.mxu0 %v2788
    %2978 = vmatpush1.msra.mxu0 %v2787
    %2979 = vmatprep.subr.mxu0 %v2784
    %2980 = vmatpush1.msra.mxu0 %v2783
    %2981 = vmatprep.subr.mxu0 %v2780
    %2982 = vmatpush1.msra.mxu0 %v2779
    %2983 = vmatprep.subr.mxu0 %v2776
    %2984 = vmatpush1.msra.mxu0 %v2775
    %2985 = vmatprep.subr.mxu0 %v2772
    %2986 = vmatpush1.msra.mxu0 %v2771
    %2987 = vmatprep.subr.mxu0 %v2768
    %2988 = vmatpush1.msra.mxu0 %v2767
    %2989 = vmatprep.subr.mxu0 %v2764
    %2990 = vmatpush1.msra.mxu0 %v2763
    %2991 = vmatprep.subr.mxu0 %v2760
    %2992 = vmatpush1.msra.mxu0 %v2759
    %2993 = vmatprep.subr.mxu0 %v2756
    %2994 = vmatpush1.msra.mxu0 %v2755
    %2995 = vmatprep.subr.mxu0 %v2752
    %2996 = vmatpush1.msra.mxu0 %v2751
    %2997 = vmatprep.subr.mxu0 %v2748
    %2998 = vmatpush1.msra.mxu0 %v2747
    %2999 = vmatprep.subr.mxu0 %v2744
    %3000 = vmatpush1.msra.mxu0 %v2743
    %3001 = vmatprep.subr.mxu0 %v2740
    %3002 = vmatpush1.msra.mxu0 %v2739
    %3003 = vmatprep.subr.mxu0 %v2736
    %3004 = vmatpush1.msra.mxu0 %v2735
    %3005 = vmatprep.subr.mxu0 0.0
    %3006 = vmatpush2.msra.mxu0 0.0
    %3007 = vmatprep.subr.mxu0 0.0
    %3008 = vmatpush2.msra.mxu0 0.0
    %3009 = vmatprep.subr.mxu0 0.0
    %3010 = vmatpush2.msra.mxu0 0.0
    %3011 = vmatprep.subr.mxu0 0.0
    %3012 = vmatpush2.msra.mxu0 0.0
    %3013 = vmatprep.subr.mxu0 0.0
    %3014 = vmatpush2.msra.mxu0 0.0
    %3015 = vmatprep.subr.mxu0 0.0
    %3016 = vmatpush2.msra.mxu0 0.0
    %3017 = vmatprep.subr.mxu0 0.0
    %3018 = vmatpush2.msra.mxu0 0.0
    %3019 = vmatprep.subr.mxu0 0.0
    %3020 = vmatpush2.msra.mxu0 0.0
    %3021 = vmatprep.subr.mxu0 0.0
    %3022 = vmatpush2.msra.mxu0 0.0
    %3023 = vmatprep.subr.mxu0 0.0
    %3024 = vmatpush2.msra.mxu0 0.0
    %3025 = vmatprep.subr.mxu0 0.0
    %3026 = vmatpush2.msra.mxu0 0.0
    %3027 = vmatprep.subr.mxu0 0.0
    %3028 = vmatpush2.msra.mxu0 0.0
    %3029 = vmatprep.subr.mxu0 0.0
    %3030 = vmatpush2.msra.mxu0 0.0
    %3031 = vmatprep.subr.mxu0 0.0
    %3032 = vmatpush2.msra.mxu0 0.0
    %3033 = vmatprep.subr.mxu0 0.0
    %3034 = vmatpush2.msra.mxu0 0.0
    %3035 = vmatprep.subr.mxu0 0.0
    %3036 = vmatpush2.msra.mxu0 0.0
    %3037 = vmatprep.mubr.f32.mxu0 0.0
    %3038 = vmatmul.mubr.f32.gmra.mxu0 %v2968
    %v3039 = vpop.f32.mrf.mxu0
    %v3040 = vadd.f32 0.0, %v3039
    %v3041 = vpop.f32.mrf.mxu0
    %v3042 = vadd.f32 0.0, %v3041
    %3043 = vdwg.mxu0
    %3044 = vmatprep.subr.mxu0 %v2798
    %3045 = vmatpush1.msra.mxu0 %v2797
    %3046 = vmatprep.subr.mxu0 %v2794
    %3047 = vmatpush1.msra.mxu0 %v2793
    %3048 = vmatprep.subr.mxu0 %v2790
    %3049 = vmatpush1.msra.mxu0 %v2789
    %3050 = vmatprep.subr.mxu0 %v2786
    %3051 = vmatpush1.msra.mxu0 %v2785
    %3052 = vmatprep.subr.mxu0 %v2782
    %3053 = vmatpush1.msra.mxu0 %v2781
    %3054 = vmatprep.subr.mxu0 %v2778
    %3055 = vmatpush1.msra.mxu0 %v2777
    %3056 = vmatprep.subr.mxu0 %v2774
    %3057 = vmatpush1.msra.mxu0 %v2773
    %3058 = vmatprep.subr.mxu0 %v2770
    %3059 = vmatpush1.msra.mxu0 %v2769
    %3060 = vmatprep.subr.mxu0 %v2766
    %3061 = vmatpush1.msra.mxu0 %v2765
    %3062 = vmatprep.subr.mxu0 %v2762
    %3063 = vmatpush1.msra.mxu0 %v2761
    %3064 = vmatprep.subr.mxu0 %v2758
    %3065 = vmatpush1.msra.mxu0 %v2757
    %3066 = vmatprep.subr.mxu0 %v2754
    %3067 = vmatpush1.msra.mxu0 %v2753
    %3068 = vmatprep.subr.mxu0 %v2750
    %3069 = vmatpush1.msra.mxu0 %v2749
    %3070 = vmatprep.subr.mxu0 %v2746
    %3071 = vmatpush1.msra.mxu0 %v2745
    %3072 = vmatprep.subr.mxu0 %v2742
    %3073 = vmatpush1.msra.mxu0 %v2741
    %3074 = vmatprep.subr.mxu0 %v2738
    %3075 = vmatpush1.msra.mxu0 %v2737
    %3076 = vmatprep.subr.mxu0 0.0
    %3077 = vmatpush2.msra.mxu0 0.0
    %3078 = vmatprep.subr.mxu0 0.0
    %3079 = vmatpush2.msra.mxu0 0.0
    %3080 = vmatprep.subr.mxu0 0.0
    %3081 = vmatpush2.msra.mxu0 0.0
    %3082 = vmatprep.subr.mxu0 0.0
    %3083 = vmatpush2.msra.mxu0 0.0
    %3084 = vmatprep.subr.mxu0 0.0
    %3085 = vmatpush2.msra.mxu0 0.0
    %3086 = vmatprep.subr.mxu0 0.0
    %3087 = vmatpush2.msra.mxu0 0.0
    %3088 = vmatprep.subr.mxu0 0.0
    %3089 = vmatpush2.msra.mxu0 0.0
    %3090 = vmatprep.subr.mxu0 0.0
    %3091 = vmatpush2.msra.mxu0 0.0
    %3092 = vmatprep.subr.mxu0 0.0
    %3093 = vmatpush2.msra.mxu0 0.0
    %3094 = vmatprep.subr.mxu0 0.0
    %3095 = vmatpush2.msra.mxu0 0.0
    %3096 = vmatprep.subr.mxu0 0.0
    %3097 = vmatpush2.msra.mxu0 0.0
    %3098 = vmatprep.subr.mxu0 0.0
    %3099 = vmatpush2.msra.mxu0 0.0
    %3100 = vmatprep.subr.mxu0 0.0
    %3101 = vmatpush2.msra.mxu0 0.0
    %3102 = vmatprep.subr.mxu0 0.0
    %3103 = vmatpush2.msra.mxu0 0.0
    %3104 = vmatprep.subr.mxu0 0.0
    %3105 = vmatpush2.msra.mxu0 0.0
    %3106 = vmatprep.subr.mxu0 0.0
    %3107 = vmatpush2.msra.mxu0 0.0
    %3108 = vmatprep.mubr.f32.mxu0 0.0
    %3109 = vmatmul.mubr.f32.gmra.mxu0 %v2968
    %v3110 = vpop.f32.mrf.mxu0
    %v3111 = vadd.f32 0.0, %v3110
    %v3112 = vpop.f32.mrf.mxu0
    %v3113 = vadd.f32 0.0, %v3112
    %3114 = vdwg.mxu0
    %v3115 = vadd.f32 %v2969, %v3040
    %v3116 = vadd.f32 %v2970, %v3042
    %v3117 = vadd.f32 %v2971, %v3111
    %v3118 = vadd.f32 %v2972, %v3113
    %v3119 = vxor.u32 %v3115, 2147483648
    %v3120 = vmul.f32 %v3119, 1.442695
    %v3121 = vpow.pop %v3120
    %v3122 = vadd.f32 %v3121, 1.0
    %v3123 = vrcp.pop %v3122
    %v3124 = vmul.f32 1.0, %v3123
    %v3125 = vxor.u32 %v3116, 2147483648
    %v3126 = vmul.f32 %v3125, 1.442695
    %v3127 = vpow.pop %v3126
    %v3128 = vadd.f32 %v3127, 1.0
    %v3129 = vrcp.pop %v3128
    %v3130 = vmul.f32 1.0, %v3129
    %v3131 = vtanh.pop %v3117
    %v3132 = vxor.u32 %v3118, 2147483648
    %v3133 = vmul.f32 %v3132, 1.442695
    %v3134 = vpow.pop %v3133
    %v3135 = vadd.f32 %v3134, 1.0
    %v3136 = vrcp.pop %v3135
    %v3137 = vmul.f32 1.0, %v3136
    %v3138 = vmul.f32 %v3130, %v2966
    %v3139 = vmul.f32 %v3124, %v3131
    %v3140 = vadd.f32 %v3138, %v3139
    %v3141 = vtanh.pop %v3140
    %v3142 = vmul.f32 %v3137, %v3141
    %v3143 = vld [vmem:[%s928] sm:$0xff]
    %v3144 = vld [vmem:[%s928 + $0x8] sm:$0xff]
    %v3145 = vld [vmem:[%s928 + $0x10] sm:$0xff]
    %v3146 = vld [vmem:[%s928 + $0x18] sm:$0xff]
    %3147 = vmatprep.subr.mxu0 %v2796
    %3148 = vmatpush1.msra.mxu0 %v2795
    %3149 = vmatprep.subr.mxu0 %v2792
    %3150 = vmatpush1.msra.mxu0 %v2791
    %3151 = vmatprep.subr.mxu0 %v2788
    %3152 = vmatpush1.msra.mxu0 %v2787
    %3153 = vmatprep.subr.mxu0 %v2784
    %3154 = vmatpush1.msra.mxu0 %v2783
    %3155 = vmatprep.subr.mxu0 %v2780
    %3156 = vmatpush1.msra.mxu0 %v2779
    %3157 = vmatprep.subr.mxu0 %v2776
    %3158 = vmatpush1.msra.mxu0 %v2775
    %3159 = vmatprep.subr.mxu0 %v2772
    %3160 = vmatpush1.msra.mxu0 %v2771
    %3161 = vmatprep.subr.mxu0 %v2768
    %3162 = vmatpush1.msra.mxu0 %v2767
    %3163 = vmatprep.subr.mxu0 %v2764
    %3164 = vmatpush1.msra.mxu0 %v2763
    %3165 = vmatprep.subr.mxu0 %v2760
    %3166 = vmatpush1.msra.mxu0 %v2759
    %3167 = vmatprep.subr.mxu0 %v2756
    %3168 = vmatpush1.msra.mxu0 %v2755
    %3169 = vmatprep.subr.mxu0 %v2752
    %3170 = vmatpush1.msra.mxu0 %v2751
    %3171 = vmatprep.subr.mxu0 %v2748
    %3172 = vmatpush1.msra.mxu0 %v2747
    %3173 = vmatprep.subr.mxu0 %v2744
    %3174 = vmatpush1.msra.mxu0 %v2743
    %3175 = vmatprep.subr.mxu0 %v2740
    %3176 = vmatpush1.msra.mxu0 %v2739
    %3177 = vmatprep.subr.mxu0 %v2736
    %3178 = vmatpush1.msra.mxu0 %v2735
    %3179 = vmatprep.subr.mxu0 0.0
    %3180 = vmatpush2.msra.mxu0 0.0
    %3181 = vmatprep.subr.mxu0 0.0
    %3182 = vmatpush2.msra.mxu0 0.0
    %3183 = vmatprep.subr.mxu0 0.0
    %3184 = vmatpush2.msra.mxu0 0.0
    %3185 = vmatprep.subr.mxu0 0.0
    %3186 = vmatpush2.msra.mxu0 0.0
    %3187 = vmatprep.subr.mxu0 0.0
    %3188 = vmatpush2.msra.mxu0 0.0
    %3189 = vmatprep.subr.mxu0 0.0
    %3190 = vmatpush2.msra.mxu0 0.0
    %3191 = vmatprep.subr.mxu0 0.0
    %3192 = vmatpush2.msra.mxu0 0.0
    %3193 = vmatprep.subr.mxu0 0.0
    %3194 = vmatpush2.msra.mxu0 0.0
    %3195 = vmatprep.subr.mxu0 0.0
    %3196 = vmatpush2.msra.mxu0 0.0
    %3197 = vmatprep.subr.mxu0 0.0
    %3198 = vmatpush2.msra.mxu0 0.0
    %3199 = vmatprep.subr.mxu0 0.0
    %3200 = vmatpush2.msra.mxu0 0.0
    %3201 = vmatprep.subr.mxu0 0.0
    %3202 = vmatpush2.msra.mxu0 0.0
    %3203 = vmatprep.subr.mxu0 0.0
    %3204 = vmatpush2.msra.mxu0 0.0
    %3205 = vmatprep.subr.mxu0 0.0
    %3206 = vmatpush2.msra.mxu0 0.0
    %3207 = vmatprep.subr.mxu0 0.0
    %3208 = vmatpush2.msra.mxu0 0.0
    %3209 = vmatprep.subr.mxu0 0.0
    %3210 = vmatpush2.msra.mxu0 0.0
    %3211 = vmatprep.mubr.f32.mxu0 0.0
    %3212 = vmatmul.mubr.f32.gmra.mxu0 %v3142
    %v3213 = vpop.f32.mrf.mxu0
    %v3214 = vadd.f32 0.0, %v3213
    %v3215 = vpop.f32.mrf.mxu0
    %v3216 = vadd.f32 0.0, %v3215
    %3217 = vdwg.mxu0
    %3218 = vmatprep.subr.mxu0 %v2798
    %3219 = vmatpush1.msra.mxu0 %v2797
    %3220 = vmatprep.subr.mxu0 %v2794
    %3221 = vmatpush1.msra.mxu0 %v2793
    %3222 = vmatprep.subr.mxu0 %v2790
    %3223 = vmatpush1.msra.mxu0 %v2789
    %3224 = vmatprep.subr.mxu0 %v2786
    %3225 = vmatpush1.msra.mxu0 %v2785
    %3226 = vmatprep.subr.mxu0 %v2782
    %3227 = vmatpush1.msra.mxu0 %v2781
    %3228 = vmatprep.subr.mxu0 %v2778
    %3229 = vmatpush1.msra.mxu0 %v2777
    %3230 = vmatprep.subr.mxu0 %v2774
    %3231 = vmatpush1.msra.mxu0 %v2773
    %3232 = vmatprep.subr.mxu0 %v2770
    %3233 = vmatpush1.msra.mxu0 %v2769
    %3234 = vmatprep.subr.mxu0 %v2766
    %3235 = vmatpush1.msra.mxu0 %v2765
    %3236 = vmatprep.subr.mxu0 %v2762
    %3237 = vmatpush1.msra.mxu0 %v2761
    %3238 = vmatprep.subr.mxu0 %v2758
    %3239 = vmatpush1.msra.mxu0 %v2757
    %3240 = vmatprep.subr.mxu0 %v2754
    %3241 = vmatpush1.msra.mxu0 %v2753
    %3242 = vmatprep.subr.mxu0 %v2750
    %3243 = vmatpush1.msra.mxu0 %v2749
    %3244 = vmatprep.subr.mxu0 %v2746
    %3245 = vmatpush1.msra.mxu0 %v2745
    %3246 = vmatprep.subr.mxu0 %v2742
    %3247 = vmatpush1.msra.mxu0 %v2741
    %3248 = vmatprep.subr.mxu0 %v2738
    %3249 = vmatpush1.msra.mxu0 %v2737
    %3250 = vmatprep.subr.mxu0 0.0
    %3251 = vmatpush2.msra.mxu0 0.0
    %3252 = vmatprep.subr.mxu0 0.0
    %3253 = vmatpush2.msra.mxu0 0.0
    %3254 = vmatprep.subr.mxu0 0.0
    %3255 = vmatpush2.msra.mxu0 0.0
    %3256 = vmatprep.subr.mxu0 0.0
    %3257 = vmatpush2.msra.mxu0 0.0
    %3258 = vmatprep.subr.mxu0 0.0
    %3259 = vmatpush2.msra.mxu0 0.0
    %3260 = vmatprep.subr.mxu0 0.0
    %3261 = vmatpush2.msra.mxu0 0.0
    %3262 = vmatprep.subr.mxu0 0.0
    %3263 = vmatpush2.msra.mxu0 0.0
    %3264 = vmatprep.subr.mxu0 0.0
    %3265 = vmatpush2.msra.mxu0 0.0
    %3266 = vmatprep.subr.mxu0 0.0
    %3267 = vmatpush2.msra.mxu0 0.0
    %3268 = vmatprep.subr.mxu0 0.0
    %3269 = vmatpush2.msra.mxu0 0.0
    %3270 = vmatprep.subr.mxu0 0.0
    %3271 = vmatpush2.msra.mxu0 0.0
    %3272 = vmatprep.subr.mxu0 0.0
    %3273 = vmatpush2.msra.mxu0 0.0
    %3274 = vmatprep.subr.mxu0 0.0
    %3275 = vmatpush2.msra.mxu0 0.0
    %3276 = vmatprep.subr.mxu0 0.0
    %3277 = vmatpush2.msra.mxu0 0.0
    %3278 = vmatprep.subr.mxu0 0.0
    %3279 = vmatpush2.msra.mxu0 0.0
    %3280 = vmatprep.subr.mxu0 0.0
    %3281 = vmatpush2.msra.mxu0 0.0
    %3282 = vmatprep.mubr.f32.mxu0 0.0
    %3283 = vmatmul.mubr.f32.gmra.mxu0 %v3142
    %v3284 = vpop.f32.mrf.mxu0
    %v3285 = vadd.f32 0.0, %v3284
    %v3286 = vpop.f32.mrf.mxu0
    %v3287 = vadd.f32 0.0, %v3286
    %3288 = vdwg.mxu0
    %v3289 = vadd.f32 %v3143, %v3214
    %v3290 = vadd.f32 %v3144, %v3216
    %v3291 = vadd.f32 %v3145, %v3285
    %v3292 = vadd.f32 %v3146, %v3287
    %v3293 = vxor.u32 %v3289, 2147483648
    %v3294 = vmul.f32 %v3293, 1.442695
    %v3295 = vpow.pop %v3294
    %v3296 = vadd.f32 %v3295, 1.0
    %v3297 = vrcp.pop %v3296
    %v3298 = vmul.f32 1.0, %v3297
    %v3299 = vxor.u32 %v3290, 2147483648
    %v3300 = vmul.f32 %v3299, 1.442695
    %v3301 = vpow.pop %v3300
    %v3302 = vadd.f32 %v3301, 1.0
    %v3303 = vrcp.pop %v3302
    %v3304 = vmul.f32 1.0, %v3303
    %v3305 = vtanh.pop %v3291
    %v3306 = vxor.u32 %v3292, 2147483648
    %v3307 = vmul.f32 %v3306, 1.442695
    %v3308 = vpow.pop %v3307
    %v3309 = vadd.f32 %v3308, 1.0
    %v3310 = vrcp.pop %v3309
    %v3311 = vmul.f32 1.0, %v3310
    %v3312 = vmul.f32 %v3304, %v3140
    %v3313 = vmul.f32 %v3298, %v3305
    %v3314 = vadd.f32 %v3312, %v3313
    %v3315 = vtanh.pop %v3314
    %v3316 = vmul.f32 %v3311, %v3315
    %v3317 = vld [vmem:[%s1169] sm:$0xff]
    %v3318 = vld [vmem:[%s1169 + $0x8] sm:$0xff]
    %v3319 = vld [vmem:[%s1169 + $0x10] sm:$0xff]
    %v3320 = vld [vmem:[%s1169 + $0x18] sm:$0xff]
    %3321 = vmatprep.subr.mxu0 %v2796
    %3322 = vmatpush1.msra.mxu0 %v2795
    %3323 = vmatprep.subr.mxu0 %v2792
    %3324 = vmatpush1.msra.mxu0 %v2791
    %3325 = vmatprep.subr.mxu0 %v2788
    %3326 = vmatpush1.msra.mxu0 %v2787
    %3327 = vmatprep.subr.mxu0 %v2784
    %3328 = vmatpush1.msra.mxu0 %v2783
    %3329 = vmatprep.subr.mxu0 %v2780
    %3330 = vmatpush1.msra.mxu0 %v2779
    %3331 = vmatprep.subr.mxu0 %v2776
    %3332 = vmatpush1.msra.mxu0 %v2775
    %3333 = vmatprep.subr.mxu0 %v2772
    %3334 = vmatpush1.msra.mxu0 %v2771
    %3335 = vmatprep.subr.mxu0 %v2768
    %3336 = vmatpush1.msra.mxu0 %v2767
    %3337 = vmatprep.subr.mxu0 %v2764
    %3338 = vmatpush1.msra.mxu0 %v2763
    %3339 = vmatprep.subr.mxu0 %v2760
    %3340 = vmatpush1.msra.mxu0 %v2759
    %3341 = vmatprep.subr.mxu0 %v2756
    %3342 = vmatpush1.msra.mxu0 %v2755
    %3343 = vmatprep.subr.mxu0 %v2752
    %3344 = vmatpush1.msra.mxu0 %v2751
    %3345 = vmatprep.subr.mxu0 %v2748
    %3346 = vmatpush1.msra.mxu0 %v2747
    %3347 = vmatprep.subr.mxu0 %v2744
    %3348 = vmatpush1.msra.mxu0 %v2743
    %3349 = vmatprep.subr.mxu0 %v2740
    %3350 = vmatpush1.msra.mxu0 %v2739
    %3351 = vmatprep.subr.mxu0 %v2736
    %3352 = vmatpush1.msra.mxu0 %v2735
    %3353 = vmatprep.subr.mxu0 0.0
    %3354 = vmatpush2.msra.mxu0 0.0
    %3355 = vmatprep.subr.mxu0 0.0
    %3356 = vmatpush2.msra.mxu0 0.0
    %3357 = vmatprep.subr.mxu0 0.0
    %3358 = vmatpush2.msra.mxu0 0.0
    %3359 = vmatprep.subr.mxu0 0.0
    %3360 = vmatpush2.msra.mxu0 0.0
    %3361 = vmatprep.subr.mxu0 0.0
    %3362 = vmatpush2.msra.mxu0 0.0
    %3363 = vmatprep.subr.mxu0 0.0
    %3364 = vmatpush2.msra.mxu0 0.0
    %3365 = vmatprep.subr.mxu0 0.0
    %3366 = vmatpush2.msra.mxu0 0.0
    %3367 = vmatprep.subr.mxu0 0.0
    %3368 = vmatpush2.msra.mxu0 0.0
    %3369 = vmatprep.subr.mxu0 0.0
    %3370 = vmatpush2.msra.mxu0 0.0
    %3371 = vmatprep.subr.mxu0 0.0
    %3372 = vmatpush2.msra.mxu0 0.0
    %3373 = vmatprep.subr.mxu0 0.0
    %3374 = vmatpush2.msra.mxu0 0.0
    %3375 = vmatprep.subr.mxu0 0.0
    %3376 = vmatpush2.msra.mxu0 0.0
    %3377 = vmatprep.subr.mxu0 0.0
    %3378 = vmatpush2.msra.mxu0 0.0
    %3379 = vmatprep.subr.mxu0 0.0
    %3380 = vmatpush2.msra.mxu0 0.0
    %3381 = vmatprep.subr.mxu0 0.0
    %3382 = vmatpush2.msra.mxu0 0.0
    %3383 = vmatprep.subr.mxu0 0.0
    %3384 = vmatpush2.msra.mxu0 0.0
    %3385 = vmatprep.mubr.f32.mxu0 0.0
    %3386 = vmatmul.mubr.f32.gmra.mxu0 %v3316
    %v3387 = vpop.f32.mrf.mxu0
    %v3388 = vadd.f32 0.0, %v3387
    %v3389 = vpop.f32.mrf.mxu0
    %v3390 = vadd.f32 0.0, %v3389
    %3391 = vdwg.mxu0
    %3392 = vmatprep.subr.mxu0 %v2798
    %3393 = vmatpush1.msra.mxu0 %v2797
    %3394 = vmatprep.subr.mxu0 %v2794
    %3395 = vmatpush1.msra.mxu0 %v2793
    %3396 = vmatprep.subr.mxu0 %v2790
    %3397 = vmatpush1.msra.mxu0 %v2789
    %3398 = vmatprep.subr.mxu0 %v2786
    %3399 = vmatpush1.msra.mxu0 %v2785
    %3400 = vmatprep.subr.mxu0 %v2782
    %3401 = vmatpush1.msra.mxu0 %v2781
    %3402 = vmatprep.subr.mxu0 %v2778
    %3403 = vmatpush1.msra.mxu0 %v2777
    %3404 = vmatprep.subr.mxu0 %v2774
    %3405 = vmatpush1.msra.mxu0 %v2773
    %3406 = vmatprep.subr.mxu0 %v2770
    %3407 = vmatpush1.msra.mxu0 %v2769
    %3408 = vmatprep.subr.mxu0 %v2766
    %3409 = vmatpush1.msra.mxu0 %v2765
    %3410 = vmatprep.subr.mxu0 %v2762
    %3411 = vmatpush1.msra.mxu0 %v2761
    %3412 = vmatprep.subr.mxu0 %v2758
    %3413 = vmatpush1.msra.mxu0 %v2757
    %3414 = vmatprep.subr.mxu0 %v2754
    %3415 = vmatpush1.msra.mxu0 %v2753
    %3416 = vmatprep.subr.mxu0 %v2750
    %3417 = vmatpush1.msra.mxu0 %v2749
    %3418 = vmatprep.subr.mxu0 %v2746
    %3419 = vmatpush1.msra.mxu0 %v2745
    %3420 = vmatprep.subr.mxu0 %v2742
    %3421 = vmatpush1.msra.mxu0 %v2741
    %3422 = vmatprep.subr.mxu0 %v2738
    %3423 = vmatpush1.msra.mxu0 %v2737
    %3424 = vmatprep.subr.mxu0 0.0
    %3425 = vmatpush2.msra.mxu0 0.0
    %3426 = vmatprep.subr.mxu0 0.0
    %3427 = vmatpush2.msra.mxu0 0.0
    %3428 = vmatprep.subr.mxu0 0.0
    %3429 = vmatpush2.msra.mxu0 0.0
    %3430 = vmatprep.subr.mxu0 0.0
    %3431 = vmatpush2.msra.mxu0 0.0
    %3432 = vmatprep.subr.mxu0 0.0
    %3433 = vmatpush2.msra.mxu0 0.0
    %3434 = vmatprep.subr.mxu0 0.0
    %3435 = vmatpush2.msra.mxu0 0.0
    %3436 = vmatprep.subr.mxu0 0.0
    %3437 = vmatpush2.msra.mxu0 0.0
    %3438 = vmatprep.subr.mxu0 0.0
    %3439 = vmatpush2.msra.mxu0 0.0
    %3440 = vmatprep.subr.mxu0 0.0
    %3441 = vmatpush2.msra.mxu0 0.0
    %3442 = vmatprep.subr.mxu0 0.0
    %3443 = vmatpush2.msra.mxu0 0.0
    %3444 = vmatprep.subr.mxu0 0.0
    %3445 = vmatpush2.msra.mxu0 0.0
    %3446 = vmatprep.subr.mxu0 0.0
    %3447 = vmatpush2.msra.mxu0 0.0
    %3448 = vmatprep.subr.mxu0 0.0
    %3449 = vmatpush2.msra.mxu0 0.0
    %3450 = vmatprep.subr.mxu0 0.0
    %3451 = vmatpush2.msra.mxu0 0.0
    %3452 = vmatprep.subr.mxu0 0.0
    %3453 = vmatpush2.msra.mxu0 0.0
    %3454 = vmatprep.subr.mxu0 0.0
    %3455 = vmatpush2.msra.mxu0 0.0
    %3456 = vmatprep.mubr.f32.mxu0 0.0
    %3457 = vmatmul.mubr.f32.gmra.mxu0 %v3316
    %v3458 = vpop.f32.mrf.mxu0
    %v3459 = vadd.f32 0.0, %v3458
    %v3460 = vpop.f32.mrf.mxu0
    %v3461 = vadd.f32 0.0, %v3460
    %3462 = vdwg.mxu0
    %v3463 = vadd.f32 %v3317, %v3388
    %v3464 = vadd.f32 %v3318, %v3390
    %v3465 = vadd.f32 %v3319, %v3459
    %v3466 = vadd.f32 %v3320, %v3461
    %v3467 = vxor.u32 %v3463, 2147483648
    %v3468 = vmul.f32 %v3467, 1.442695
    %v3469 = vpow.pop %v3468
    %v3470 = vadd.f32 %v3469, 1.0
    %v3471 = vrcp.pop %v3470
    %v3472 = vmul.f32 1.0, %v3471
    %v3473 = vxor.u32 %v3464, 2147483648
    %v3474 = vmul.f32 %v3473, 1.442695
    %v3475 = vpow.pop %v3474
    %v3476 = vadd.f32 %v3475, 1.0
    %v3477 = vrcp.pop %v3476
    %v3478 = vmul.f32 1.0, %v3477
    %v3479 = vtanh.pop %v3465
    %v3480 = vxor.u32 %v3466, 2147483648
    %v3481 = vmul.f32 %v3480, 1.442695
    %v3482 = vpow.pop %v3481
    %v3483 = vadd.f32 %v3482, 1.0
    %v3484 = vrcp.pop %v3483
    %v3485 = vmul.f32 1.0, %v3484
    %v3486 = vmul.f32 %v3478, %v3314
    %v3487 = vmul.f32 %v3472, %v3479
    %v3488 = vadd.f32 %v3486, %v3487
    %v3489 = vtanh.pop %v3488
    %v3490 = vmul.f32 %v3485, %v3489
    %v3491 = vld [vmem:[%s1410] sm:$0xff]
    %v3492 = vld [vmem:[%s1410 + $0x8] sm:$0xff]
    %v3493 = vld [vmem:[%s1410 + $0x10] sm:$0xff]
    %v3494 = vld [vmem:[%s1410 + $0x18] sm:$0xff]
    %3495 = vmatprep.subr.mxu0 %v2796
    %3496 = vmatpush1.msra.mxu0 %v2795
    %3497 = vmatprep.subr.mxu0 %v2792
    %3498 = vmatpush1.msra.mxu0 %v2791
    %3499 = vmatprep.subr.mxu0 %v2788
    %3500 = vmatpush1.msra.mxu0 %v2787
    %3501 = vmatprep.subr.mxu0 %v2784
    %3502 = vmatpush1.msra.mxu0 %v2783
    %3503 = vmatprep.subr.mxu0 %v2780
    %3504 = vmatpush1.msra.mxu0 %v2779
    %3505 = vmatprep.subr.mxu0 %v2776
    %3506 = vmatpush1.msra.mxu0 %v2775
    %3507 = vmatprep.subr.mxu0 %v2772
    %3508 = vmatpush1.msra.mxu0 %v2771
    %3509 = vmatprep.subr.mxu0 %v2768
    %3510 = vmatpush1.msra.mxu0 %v2767
    %3511 = vmatprep.subr.mxu0 %v2764
    %3512 = vmatpush1.msra.mxu0 %v2763
    %3513 = vmatprep.subr.mxu0 %v2760
    %3514 = vmatpush1.msra.mxu0 %v2759
    %3515 = vmatprep.subr.mxu0 %v2756
    %3516 = vmatpush1.msra.mxu0 %v2755
    %3517 = vmatprep.subr.mxu0 %v2752
    %3518 = vmatpush1.msra.mxu0 %v2751
    %3519 = vmatprep.subr.mxu0 %v2748
    %3520 = vmatpush1.msra.mxu0 %v2747
    %3521 = vmatprep.subr.mxu0 %v2744
    %3522 = vmatpush1.msra.mxu0 %v2743
    %3523 = vmatprep.subr.mxu0 %v2740
    %3524 = vmatpush1.msra.mxu0 %v2739
    %3525 = vmatprep.subr.mxu0 %v2736
    %3526 = vmatpush1.msra.mxu0 %v2735
    %3527 = vmatprep.subr.mxu0 0.0
    %3528 = vmatpush2.msra.mxu0 0.0
    %3529 = vmatprep.subr.mxu0 0.0
    %3530 = vmatpush2.msra.mxu0 0.0
    %3531 = vmatprep.subr.mxu0 0.0
    %3532 = vmatpush2.msra.mxu0 0.0
    %3533 = vmatprep.subr.mxu0 0.0
    %3534 = vmatpush2.msra.mxu0 0.0
    %3535 = vmatprep.subr.mxu0 0.0
    %3536 = vmatpush2.msra.mxu0 0.0
    %3537 = vmatprep.subr.mxu0 0.0
    %3538 = vmatpush2.msra.mxu0 0.0
    %3539 = vmatprep.subr.mxu0 0.0
    %3540 = vmatpush2.msra.mxu0 0.0
    %3541 = vmatprep.subr.mxu0 0.0
    %3542 = vmatpush2.msra.mxu0 0.0
    %3543 = vmatprep.subr.mxu0 0.0
    %3544 = vmatpush2.msra.mxu0 0.0
    %3545 = vmatprep.subr.mxu0 0.0
    %3546 = vmatpush2.msra.mxu0 0.0
    %3547 = vmatprep.subr.mxu0 0.0
    %3548 = vmatpush2.msra.mxu0 0.0
    %3549 = vmatprep.subr.mxu0 0.0
    %3550 = vmatpush2.msra.mxu0 0.0
    %3551 = vmatprep.subr.mxu0 0.0
    %3552 = vmatpush2.msra.mxu0 0.0
    %3553 = vmatprep.subr.mxu0 0.0
    %3554 = vmatpush2.msra.mxu0 0.0
    %3555 = vmatprep.subr.mxu0 0.0
    %3556 = vmatpush2.msra.mxu0 0.0
    %3557 = vmatprep.subr.mxu0 0.0
    %3558 = vmatpush2.msra.mxu0 0.0
    %3559 = vmatprep.mubr.f32.mxu0 0.0
    %3560 = vmatmul.mubr.f32.gmra.mxu0 %v3490
    %v3561 = vpop.f32.mrf.mxu0
    %v3562 = vadd.f32 0.0, %v3561
    %v3563 = vpop.f32.mrf.mxu0
    %v3564 = vadd.f32 0.0, %v3563
    %3565 = vdwg.mxu0
    %3566 = vmatprep.subr.mxu0 %v2798
    %3567 = vmatpush1.msra.mxu0 %v2797
    %3568 = vmatprep.subr.mxu0 %v2794
    %3569 = vmatpush1.msra.mxu0 %v2793
    %3570 = vmatprep.subr.mxu0 %v2790
    %3571 = vmatpush1.msra.mxu0 %v2789
    %3572 = vmatprep.subr.mxu0 %v2786
    %3573 = vmatpush1.msra.mxu0 %v2785
    %3574 = vmatprep.subr.mxu0 %v2782
    %3575 = vmatpush1.msra.mxu0 %v2781
    %3576 = vmatprep.subr.mxu0 %v2778
    %3577 = vmatpush1.msra.mxu0 %v2777
    %3578 = vmatprep.subr.mxu0 %v2774
    %3579 = vmatpush1.msra.mxu0 %v2773
    %3580 = vmatprep.subr.mxu0 %v2770
    %3581 = vmatpush1.msra.mxu0 %v2769
    %3582 = vmatprep.subr.mxu0 %v2766
    %3583 = vmatpush1.msra.mxu0 %v2765
    %3584 = vmatprep.subr.mxu0 %v2762
    %3585 = vmatpush1.msra.mxu0 %v2761
    %3586 = vmatprep.subr.mxu0 %v2758
    %3587 = vmatpush1.msra.mxu0 %v2757
    %3588 = vmatprep.subr.mxu0 %v2754
    %3589 = vmatpush1.msra.mxu0 %v2753
    %3590 = vmatprep.subr.mxu0 %v2750
    %3591 = vmatpush1.msra.mxu0 %v2749
    %3592 = vmatprep.subr.mxu0 %v2746
    %3593 = vmatpush1.msra.mxu0 %v2745
    %3594 = vmatprep.subr.mxu0 %v2742
    %3595 = vmatpush1.msra.mxu0 %v2741
    %3596 = vmatprep.subr.mxu0 %v2738
    %3597 = vmatpush1.msra.mxu0 %v2737
    %3598 = vmatprep.subr.mxu0 0.0
    %3599 = vmatpush2.msra.mxu0 0.0
    %3600 = vmatprep.subr.mxu0 0.0
    %3601 = vmatpush2.msra.mxu0 0.0
    %3602 = vmatprep.subr.mxu0 0.0
    %3603 = vmatpush2.msra.mxu0 0.0
    %3604 = vmatprep.subr.mxu0 0.0
    %3605 = vmatpush2.msra.mxu0 0.0
    %3606 = vmatprep.subr.mxu0 0.0
    %3607 = vmatpush2.msra.mxu0 0.0
    %3608 = vmatprep.subr.mxu0 0.0
    %3609 = vmatpush2.msra.mxu0 0.0
    %3610 = vmatprep.subr.mxu0 0.0
    %3611 = vmatpush2.msra.mxu0 0.0
    %3612 = vmatprep.subr.mxu0 0.0
    %3613 = vmatpush2.msra.mxu0 0.0
    %3614 = vmatprep.subr.mxu0 0.0
    %3615 = vmatpush2.msra.mxu0 0.0
    %3616 = vmatprep.subr.mxu0 0.0
    %3617 = vmatpush2.msra.mxu0 0.0
    %3618 = vmatprep.subr.mxu0 0.0
    %3619 = vmatpush2.msra.mxu0 0.0
    %3620 = vmatprep.subr.mxu0 0.0
    %3621 = vmatpush2.msra.mxu0 0.0
    %3622 = vmatprep.subr.mxu0 0.0
    %3623 = vmatpush2.msra.mxu0 0.0
    %3624 = vmatprep.subr.mxu0 0.0
    %3625 = vmatpush2.msra.mxu0 0.0
    %3626 = vmatprep.subr.mxu0 0.0
    %3627 = vmatpush2.msra.mxu0 0.0
    %3628 = vmatprep.subr.mxu0 0.0
    %3629 = vmatpush2.msra.mxu0 0.0
    %3630 = vmatprep.mubr.f32.mxu0 0.0
    %3631 = vmatmul.mubr.f32.gmra.mxu0 %v3490
    %v3632 = vpop.f32.mrf.mxu0
    %v3633 = vadd.f32 0.0, %v3632
    %v3634 = vpop.f32.mrf.mxu0
    %v3635 = vadd.f32 0.0, %v3634
    %3636 = vdwg.mxu0
    %v3637 = vadd.f32 %v3491, %v3562
    %v3638 = vadd.f32 %v3492, %v3564
    %v3639 = vadd.f32 %v3493, %v3633
    %v3640 = vadd.f32 %v3494, %v3635
    %v3641 = vxor.u32 %v3637, 2147483648
    %v3642 = vmul.f32 %v3641, 1.442695
    %v3643 = vpow.pop %v3642
    %v3644 = vadd.f32 %v3643, 1.0
    %v3645 = vrcp.pop %v3644
    %v3646 = vmul.f32 1.0, %v3645
    %v3647 = vxor.u32 %v3638, 2147483648
    %v3648 = vmul.f32 %v3647, 1.442695
    %v3649 = vpow.pop %v3648
    %v3650 = vadd.f32 %v3649, 1.0
    %v3651 = vrcp.pop %v3650
    %v3652 = vmul.f32 1.0, %v3651
    %v3653 = vtanh.pop %v3639
    %v3654 = vxor.u32 %v3640, 2147483648
    %v3655 = vmul.f32 %v3654, 1.442695
    %v3656 = vpow.pop %v3655
    %v3657 = vadd.f32 %v3656, 1.0
    %v3658 = vrcp.pop %v3657
    %v3659 = vmul.f32 1.0, %v3658
    %v3660 = vmul.f32 %v3652, %v3488
    %v3661 = vmul.f32 %v3646, %v3653
    %v3662 = vadd.f32 %v3660, %v3661
    %v3663 = vtanh.pop %v3662
    %v3664 = vmul.f32 %v3659, %v3663
    %v3665 = vld [vmem:[%s1651] sm:$0xff]
    %v3666 = vld [vmem:[%s1651 + $0x8] sm:$0xff]
    %v3667 = vld [vmem:[%s1651 + $0x10] sm:$0xff]
    %v3668 = vld [vmem:[%s1651 + $0x18] sm:$0xff]
    %3669 = vmatprep.subr.mxu0 %v2796
    %3670 = vmatpush1.msra.mxu0 %v2795
    %3671 = vmatprep.subr.mxu0 %v2792
    %3672 = vmatpush1.msra.mxu0 %v2791
    %3673 = vmatprep.subr.mxu0 %v2788
    %3674 = vmatpush1.msra.mxu0 %v2787
    %3675 = vmatprep.subr.mxu0 %v2784
    %3676 = vmatpush1.msra.mxu0 %v2783
    %3677 = vmatprep.subr.mxu0 %v2780
    %3678 = vmatpush1.msra.mxu0 %v2779
    %3679 = vmatprep.subr.mxu0 %v2776
    %3680 = vmatpush1.msra.mxu0 %v2775
    %3681 = vmatprep.subr.mxu0 %v2772
    %3682 = vmatpush1.msra.mxu0 %v2771
    %3683 = vmatprep.subr.mxu0 %v2768
    %3684 = vmatpush1.msra.mxu0 %v2767
    %3685 = vmatprep.subr.mxu0 %v2764
    %3686 = vmatpush1.msra.mxu0 %v2763
    %3687 = vmatprep.subr.mxu0 %v2760
    %3688 = vmatpush1.msra.mxu0 %v2759
    %3689 = vmatprep.subr.mxu0 %v2756
    %3690 = vmatpush1.msra.mxu0 %v2755
    %3691 = vmatprep.subr.mxu0 %v2752
    %3692 = vmatpush1.msra.mxu0 %v2751
    %3693 = vmatprep.subr.mxu0 %v2748
    %3694 = vmatpush1.msra.mxu0 %v2747
    %3695 = vmatprep.subr.mxu0 %v2744
    %3696 = vmatpush1.msra.mxu0 %v2743
    %3697 = vmatprep.subr.mxu0 %v2740
    %3698 = vmatpush1.msra.mxu0 %v2739
    %3699 = vmatprep.subr.mxu0 %v2736
    %3700 = vmatpush1.msra.mxu0 %v2735
    %3701 = vmatprep.subr.mxu0 0.0
    %3702 = vmatpush2.msra.mxu0 0.0
    %3703 = vmatprep.subr.mxu0 0.0
    %3704 = vmatpush2.msra.mxu0 0.0
    %3705 = vmatprep.subr.mxu0 0.0
    %3706 = vmatpush2.msra.mxu0 0.0
    %3707 = vmatprep.subr.mxu0 0.0
    %3708 = vmatpush2.msra.mxu0 0.0
    %3709 = vmatprep.subr.mxu0 0.0
    %3710 = vmatpush2.msra.mxu0 0.0
    %3711 = vmatprep.subr.mxu0 0.0
    %3712 = vmatpush2.msra.mxu0 0.0
    %3713 = vmatprep.subr.mxu0 0.0
    %3714 = vmatpush2.msra.mxu0 0.0
    %3715 = vmatprep.subr.mxu0 0.0
    %3716 = vmatpush2.msra.mxu0 0.0
    %3717 = vmatprep.subr.mxu0 0.0
    %3718 = vmatpush2.msra.mxu0 0.0
    %3719 = vmatprep.subr.mxu0 0.0
    %3720 = vmatpush2.msra.mxu0 0.0
    %3721 = vmatprep.subr.mxu0 0.0
    %3722 = vmatpush2.msra.mxu0 0.0
    %3723 = vmatprep.subr.mxu0 0.0
    %3724 = vmatpush2.msra.mxu0 0.0
    %3725 = vmatprep.subr.mxu0 0.0
    %3726 = vmatpush2.msra.mxu0 0.0
    %3727 = vmatprep.subr.mxu0 0.0
    %3728 = vmatpush2.msra.mxu0 0.0
    %3729 = vmatprep.subr.mxu0 0.0
    %3730 = vmatpush2.msra.mxu0 0.0
    %3731 = vmatprep.subr.mxu0 0.0
    %3732 = vmatpush2.msra.mxu0 0.0
    %3733 = vmatprep.mubr.f32.mxu0 0.0
    %3734 = vmatmul.mubr.f32.gmra.mxu0 %v3664
    %v3735 = vpop.f32.mrf.mxu0
    %v3736 = vadd.f32 0.0, %v3735
    %v3737 = vpop.f32.mrf.mxu0
    %v3738 = vadd.f32 0.0, %v3737
    %3739 = vdwg.mxu0
    %3740 = vmatprep.subr.mxu0 %v2798
    %3741 = vmatpush1.msra.mxu0 %v2797
    %3742 = vmatprep.subr.mxu0 %v2794
    %3743 = vmatpush1.msra.mxu0 %v2793
    %3744 = vmatprep.subr.mxu0 %v2790
    %3745 = vmatpush1.msra.mxu0 %v2789
    %3746 = vmatprep.subr.mxu0 %v2786
    %3747 = vmatpush1.msra.mxu0 %v2785
    %3748 = vmatprep.subr.mxu0 %v2782
    %3749 = vmatpush1.msra.mxu0 %v2781
    %3750 = vmatprep.subr.mxu0 %v2778
    %3751 = vmatpush1.msra.mxu0 %v2777
    %3752 = vmatprep.subr.mxu0 %v2774
    %3753 = vmatpush1.msra.mxu0 %v2773
    %3754 = vmatprep.subr.mxu0 %v2770
    %3755 = vmatpush1.msra.mxu0 %v2769
    %3756 = vmatprep.subr.mxu0 %v2766
    %3757 = vmatpush1.msra.mxu0 %v2765
    %3758 = vmatprep.subr.mxu0 %v2762
    %3759 = vmatpush1.msra.mxu0 %v2761
    %3760 = vmatprep.subr.mxu0 %v2758
    %3761 = vmatpush1.msra.mxu0 %v2757
    %3762 = vmatprep.subr.mxu0 %v2754
    %3763 = vmatpush1.msra.mxu0 %v2753
    %3764 = vmatprep.subr.mxu0 %v2750
    %3765 = vmatpush1.msra.mxu0 %v2749
    %3766 = vmatprep.subr.mxu0 %v2746
    %3767 = vmatpush1.msra.mxu0 %v2745
    %3768 = vmatprep.subr.mxu0 %v2742
    %3769 = vmatpush1.msra.mxu0 %v2741
    %3770 = vmatprep.subr.mxu0 %v2738
    %3771 = vmatpush1.msra.mxu0 %v2737
    %3772 = vmatprep.subr.mxu0 0.0
    %3773 = vmatpush2.msra.mxu0 0.0
    %3774 = vmatprep.subr.mxu0 0.0
    %3775 = vmatpush2.msra.mxu0 0.0
    %3776 = vmatprep.subr.mxu0 0.0
    %3777 = vmatpush2.msra.mxu0 0.0
    %3778 = vmatprep.subr.mxu0 0.0
    %3779 = vmatpush2.msra.mxu0 0.0
    %3780 = vmatprep.subr.mxu0 0.0
    %3781 = vmatpush2.msra.mxu0 0.0
    %3782 = vmatprep.subr.mxu0 0.0
    %3783 = vmatpush2.msra.mxu0 0.0
    %3784 = vmatprep.subr.mxu0 0.0
    %3785 = vmatpush2.msra.mxu0 0.0
    %3786 = vmatprep.subr.mxu0 0.0
    %3787 = vmatpush2.msra.mxu0 0.0
    %3788 = vmatprep.subr.mxu0 0.0
    %3789 = vmatpush2.msra.mxu0 0.0
    %3790 = vmatprep.subr.mxu0 0.0
    %3791 = vmatpush2.msra.mxu0 0.0
    %3792 = vmatprep.subr.mxu0 0.0
    %3793 = vmatpush2.msra.mxu0 0.0
    %3794 = vmatprep.subr.mxu0 0.0
    %3795 = vmatpush2.msra.mxu0 0.0
    %3796 = vmatprep.subr.mxu0 0.0
    %3797 = vmatpush2.msra.mxu0 0.0
    %3798 = vmatprep.subr.mxu0 0.0
    %3799 = vmatpush2.msra.mxu0 0.0
    %3800 = vmatprep.subr.mxu0 0.0
    %3801 = vmatpush2.msra.mxu0 0.0
    %3802 = vmatprep.subr.mxu0 0.0
    %3803 = vmatpush2.msra.mxu0 0.0
    %3804 = vmatprep.mubr.f32.mxu0 0.0
    %3805 = vmatmul.mubr.f32.gmra.mxu0 %v3664
    %v3806 = vpop.f32.mrf.mxu0
    %v3807 = vadd.f32 0.0, %v3806
    %v3808 = vpop.f32.mrf.mxu0
    %v3809 = vadd.f32 0.0, %v3808
    %3810 = vdwg.mxu0
    %v3811 = vadd.f32 %v3665, %v3736
    %v3812 = vadd.f32 %v3666, %v3738
    %v3813 = vadd.f32 %v3667, %v3807
    %v3814 = vadd.f32 %v3668, %v3809
    %v3815 = vxor.u32 %v3811, 2147483648
    %v3816 = vmul.f32 %v3815, 1.442695
    %v3817 = vpow.pop %v3816
    %v3818 = vadd.f32 %v3817, 1.0
    %v3819 = vrcp.pop %v3818
    %v3820 = vmul.f32 1.0, %v3819
    %v3821 = vxor.u32 %v3812, 2147483648
    %v3822 = vmul.f32 %v3821, 1.442695
    %v3823 = vpow.pop %v3822
    %v3824 = vadd.f32 %v3823, 1.0
    %v3825 = vrcp.pop %v3824
    %v3826 = vmul.f32 1.0, %v3825
    %v3827 = vtanh.pop %v3813
    %v3828 = vxor.u32 %v3814, 2147483648
    %v3829 = vmul.f32 %v3828, 1.442695
    %v3830 = vpow.pop %v3829
    %v3831 = vadd.f32 %v3830, 1.0
    %v3832 = vrcp.pop %v3831
    %v3833 = vmul.f32 1.0, %v3832
    %v3834 = vmul.f32 %v3826, %v3662
    %v3835 = vmul.f32 %v3820, %v3827
    %v3836 = vadd.f32 %v3834, %v3835
    %v3837 = vtanh.pop %v3836
    %v3838 = vmul.f32 %v3833, %v3837
    %v3839 = vld [vmem:[%s1892] sm:$0xff]
    %v3840 = vld [vmem:[%s1892 + $0x8] sm:$0xff]
    %v3841 = vld [vmem:[%s1892 + $0x10] sm:$0xff]
    %v3842 = vld [vmem:[%s1892 + $0x18] sm:$0xff]
    %3843 = vmatprep.subr.mxu0 %v2796
    %3844 = vmatpush1.msra.mxu0 %v2795
    %3845 = vmatprep.subr.mxu0 %v2792
    %3846 = vmatpush1.msra.mxu0 %v2791
    %3847 = vmatprep.subr.mxu0 %v2788
    %3848 = vmatpush1.msra.mxu0 %v2787
    %3849 = vmatprep.subr.mxu0 %v2784
    %3850 = vmatpush1.msra.mxu0 %v2783
    %3851 = vmatprep.subr.mxu0 %v2780
    %3852 = vmatpush1.msra.mxu0 %v2779
    %3853 = vmatprep.subr.mxu0 %v2776
    %3854 = vmatpush1.msra.mxu0 %v2775
    %3855 = vmatprep.subr.mxu0 %v2772
    %3856 = vmatpush1.msra.mxu0 %v2771
    %3857 = vmatprep.subr.mxu0 %v2768
    %3858 = vmatpush1.msra.mxu0 %v2767
    %3859 = vmatprep.subr.mxu0 %v2764
    %3860 = vmatpush1.msra.mxu0 %v2763
    %3861 = vmatprep.subr.mxu0 %v2760
    %3862 = vmatpush1.msra.mxu0 %v2759
    %3863 = vmatprep.subr.mxu0 %v2756
    %3864 = vmatpush1.msra.mxu0 %v2755
    %3865 = vmatprep.subr.mxu0 %v2752
    %3866 = vmatpush1.msra.mxu0 %v2751
    %3867 = vmatprep.subr.mxu0 %v2748
    %3868 = vmatpush1.msra.mxu0 %v2747
    %3869 = vmatprep.subr.mxu0 %v2744
    %3870 = vmatpush1.msra.mxu0 %v2743
    %3871 = vmatprep.subr.mxu0 %v2740
    %3872 = vmatpush1.msra.mxu0 %v2739
    %3873 = vmatprep.subr.mxu0 %v2736
    %3874 = vmatpush1.msra.mxu0 %v2735
    %3875 = vmatprep.subr.mxu0 0.0
    %3876 = vmatpush2.msra.mxu0 0.0
    %3877 = vmatprep.subr.mxu0 0.0
    %3878 = vmatpush2.msra.mxu0 0.0
    %3879 = vmatprep.subr.mxu0 0.0
    %3880 = vmatpush2.msra.mxu0 0.0
    %3881 = vmatprep.subr.mxu0 0.0
    %3882 = vmatpush2.msra.mxu0 0.0
    %3883 = vmatprep.subr.mxu0 0.0
    %3884 = vmatpush2.msra.mxu0 0.0
    %3885 = vmatprep.subr.mxu0 0.0
    %3886 = vmatpush2.msra.mxu0 0.0
    %3887 = vmatprep.subr.mxu0 0.0
    %3888 = vmatpush2.msra.mxu0 0.0
    %3889 = vmatprep.subr.mxu0 0.0
    %3890 = vmatpush2.msra.mxu0 0.0
    %3891 = vmatprep.subr.mxu0 0.0
    %3892 = vmatpush2.msra.mxu0 0.0
    %3893 = vmatprep.subr.mxu0 0.0
    %3894 = vmatpush2.msra.mxu0 0.0
    %3895 = vmatprep.subr.mxu0 0.0
    %3896 = vmatpush2.msra.mxu0 0.0
    %3897 = vmatprep.subr.mxu0 0.0
    %3898 = vmatpush2.msra.mxu0 0.0
    %3899 = vmatprep.subr.mxu0 0.0
    %3900 = vmatpush2.msra.mxu0 0.0
    %3901 = vmatprep.subr.mxu0 0.0
    %3902 = vmatpush2.msra.mxu0 0.0
    %3903 = vmatprep.subr.mxu0 0.0
    %3904 = vmatpush2.msra.mxu0 0.0
    %3905 = vmatprep.subr.mxu0 0.0
    %3906 = vmatpush2.msra.mxu0 0.0
    %3907 = vmatprep.mubr.f32.mxu0 0.0
    %3908 = vmatmul.mubr.f32.gmra.mxu0 %v3838
    %v3909 = vpop.f32.mrf.mxu0
    %v3910 = vadd.f32 0.0, %v3909
    %v3911 = vpop.f32.mrf.mxu0
    %v3912 = vadd.f32 0.0, %v3911
    %3913 = vdwg.mxu0
    %3914 = vmatprep.subr.mxu0 %v2798
    %3915 = vmatpush1.msra.mxu0 %v2797
    %3916 = vmatprep.subr.mxu0 %v2794
    %3917 = vmatpush1.msra.mxu0 %v2793
    %3918 = vmatprep.subr.mxu0 %v2790
    %3919 = vmatpush1.msra.mxu0 %v2789
    %3920 = vmatprep.subr.mxu0 %v2786
    %3921 = vmatpush1.msra.mxu0 %v2785
    %3922 = vmatprep.subr.mxu0 %v2782
    %3923 = vmatpush1.msra.mxu0 %v2781
    %3924 = vmatprep.subr.mxu0 %v2778
    %3925 = vmatpush1.msra.mxu0 %v2777
    %3926 = vmatprep.subr.mxu0 %v2774
    %3927 = vmatpush1.msra.mxu0 %v2773
    %3928 = vmatprep.subr.mxu0 %v2770
    %3929 = vmatpush1.msra.mxu0 %v2769
    %3930 = vmatprep.subr.mxu0 %v2766
    %3931 = vmatpush1.msra.mxu0 %v2765
    %3932 = vmatprep.subr.mxu0 %v2762
    %3933 = vmatpush1.msra.mxu0 %v2761
    %3934 = vmatprep.subr.mxu0 %v2758
    %3935 = vmatpush1.msra.mxu0 %v2757
    %3936 = vmatprep.subr.mxu0 %v2754
    %3937 = vmatpush1.msra.mxu0 %v2753
    %3938 = vmatprep.subr.mxu0 %v2750
    %3939 = vmatpush1.msra.mxu0 %v2749
    %3940 = vmatprep.subr.mxu0 %v2746
    %3941 = vmatpush1.msra.mxu0 %v2745
    %3942 = vmatprep.subr.mxu0 %v2742
    %3943 = vmatpush1.msra.mxu0 %v2741
    %3944 = vmatprep.subr.mxu0 %v2738
    %3945 = vmatpush1.msra.mxu0 %v2737
    %3946 = vmatprep.subr.mxu0 0.0
    %3947 = vmatpush2.msra.mxu0 0.0
    %3948 = vmatprep.subr.mxu0 0.0
    %3949 = vmatpush2.msra.mxu0 0.0
    %3950 = vmatprep.subr.mxu0 0.0
    %3951 = vmatpush2.msra.mxu0 0.0
    %3952 = vmatprep.subr.mxu0 0.0
    %3953 = vmatpush2.msra.mxu0 0.0
    %3954 = vmatprep.subr.mxu0 0.0
    %3955 = vmatpush2.msra.mxu0 0.0
    %3956 = vmatprep.subr.mxu0 0.0
    %3957 = vmatpush2.msra.mxu0 0.0
    %3958 = vmatprep.subr.mxu0 0.0
    %3959 = vmatpush2.msra.mxu0 0.0
    %3960 = vmatprep.subr.mxu0 0.0
    %3961 = vmatpush2.msra.mxu0 0.0
    %3962 = vmatprep.subr.mxu0 0.0
    %3963 = vmatpush2.msra.mxu0 0.0
    %3964 = vmatprep.subr.mxu0 0.0
    %3965 = vmatpush2.msra.mxu0 0.0
    %3966 = vmatprep.subr.mxu0 0.0
    %3967 = vmatpush2.msra.mxu0 0.0
    %3968 = vmatprep.subr.mxu0 0.0
    %3969 = vmatpush2.msra.mxu0 0.0
    %3970 = vmatprep.subr.mxu0 0.0
    %3971 = vmatpush2.msra.mxu0 0.0
    %3972 = vmatprep.subr.mxu0 0.0
    %3973 = vmatpush2.msra.mxu0 0.0
    %3974 = vmatprep.subr.mxu0 0.0
    %3975 = vmatpush2.msra.mxu0 0.0
    %3976 = vmatprep.subr.mxu0 0.0
    %3977 = vmatpush2.msra.mxu0 0.0
    %3978 = vmatprep.mubr.f32.mxu0 0.0
    %3979 = vmatmul.mubr.f32.gmra.mxu0 %v3838
    %v3980 = vpop.f32.mrf.mxu0
    %v3981 = vadd.f32 0.0, %v3980
    %v3982 = vpop.f32.mrf.mxu0
    %v3983 = vadd.f32 0.0, %v3982
    %3984 = vdwg.mxu0
    %v3985 = vadd.f32 %v3839, %v3910
    %v3986 = vadd.f32 %v3840, %v3912
    %v3987 = vadd.f32 %v3841, %v3981
    %v3988 = vadd.f32 %v3842, %v3983
    %v3989 = vxor.u32 %v3985, 2147483648
    %v3990 = vmul.f32 %v3989, 1.442695
    %v3991 = vpow.pop %v3990
    %v3992 = vadd.f32 %v3991, 1.0
    %v3993 = vrcp.pop %v3992
    %v3994 = vmul.f32 1.0, %v3993
    %v3995 = vxor.u32 %v3986, 2147483648
    %v3996 = vmul.f32 %v3995, 1.442695
    %v3997 = vpow.pop %v3996
    %v3998 = vadd.f32 %v3997, 1.0
    %v3999 = vrcp.pop %v3998
    %v4000 = vmul.f32 1.0, %v3999
    %v4001 = vtanh.pop %v3987
    %v4002 = vxor.u32 %v3988, 2147483648
    %v4003 = vmul.f32 %v4002, 1.442695
    %v4004 = vpow.pop %v4003
    %v4005 = vadd.f32 %v4004, 1.0
    %v4006 = vrcp.pop %v4005
    %v4007 = vmul.f32 1.0, %v4006
    %v4008 = vmul.f32 %v4000, %v3836
    %v4009 = vmul.f32 %v3994, %v4001
    %v4010 = vadd.f32 %v4008, %v4009
    %v4011 = vtanh.pop %v4010
    %v4012 = vmul.f32 %v4007, %v4011
    %v4013 = vld [vmem:[%s2133] sm:$0xff]
    %v4014 = vld [vmem:[%s2133 + $0x8] sm:$0xff]
    %v4015 = vld [vmem:[%s2133 + $0x10] sm:$0xff]
    %v4016 = vld [vmem:[%s2133 + $0x18] sm:$0xff]
    %4017 = vmatprep.subr.mxu0 %v2796
    %4018 = vmatpush1.msra.mxu0 %v2795
    %4019 = vmatprep.subr.mxu0 %v2792
    %4020 = vmatpush1.msra.mxu0 %v2791
    %4021 = vmatprep.subr.mxu0 %v2788
    %4022 = vmatpush1.msra.mxu0 %v2787
    %4023 = vmatprep.subr.mxu0 %v2784
    %4024 = vmatpush1.msra.mxu0 %v2783
    %4025 = vmatprep.subr.mxu0 %v2780
    %4026 = vmatpush1.msra.mxu0 %v2779
    %4027 = vmatprep.subr.mxu0 %v2776
    %4028 = vmatpush1.msra.mxu0 %v2775
    %4029 = vmatprep.subr.mxu0 %v2772
    %4030 = vmatpush1.msra.mxu0 %v2771
    %4031 = vmatprep.subr.mxu0 %v2768
    %4032 = vmatpush1.msra.mxu0 %v2767
    %4033 = vmatprep.subr.mxu0 %v2764
    %4034 = vmatpush1.msra.mxu0 %v2763
    %4035 = vmatprep.subr.mxu0 %v2760
    %4036 = vmatpush1.msra.mxu0 %v2759
    %4037 = vmatprep.subr.mxu0 %v2756
    %4038 = vmatpush1.msra.mxu0 %v2755
    %4039 = vmatprep.subr.mxu0 %v2752
    %4040 = vmatpush1.msra.mxu0 %v2751
    %4041 = vmatprep.subr.mxu0 %v2748
    %4042 = vmatpush1.msra.mxu0 %v2747
    %4043 = vmatprep.subr.mxu0 %v2744
    %4044 = vmatpush1.msra.mxu0 %v2743
    %4045 = vmatprep.subr.mxu0 %v2740
    %4046 = vmatpush1.msra.mxu0 %v2739
    %4047 = vmatprep.subr.mxu0 %v2736
    %4048 = vmatpush1.msra.mxu0 %v2735
    %4049 = vmatprep.subr.mxu0 0.0
    %4050 = vmatpush2.msra.mxu0 0.0
    %4051 = vmatprep.subr.mxu0 0.0
    %4052 = vmatpush2.msra.mxu0 0.0
    %4053 = vmatprep.subr.mxu0 0.0
    %4054 = vmatpush2.msra.mxu0 0.0
    %4055 = vmatprep.subr.mxu0 0.0
    %4056 = vmatpush2.msra.mxu0 0.0
    %4057 = vmatprep.subr.mxu0 0.0
    %4058 = vmatpush2.msra.mxu0 0.0
    %4059 = vmatprep.subr.mxu0 0.0
    %4060 = vmatpush2.msra.mxu0 0.0
    %4061 = vmatprep.subr.mxu0 0.0
    %4062 = vmatpush2.msra.mxu0 0.0
    %4063 = vmatprep.subr.mxu0 0.0
    %4064 = vmatpush2.msra.mxu0 0.0
    %4065 = vmatprep.subr.mxu0 0.0
    %4066 = vmatpush2.msra.mxu0 0.0
    %4067 = vmatprep.subr.mxu0 0.0
    %4068 = vmatpush2.msra.mxu0 0.0
    %4069 = vmatprep.subr.mxu0 0.0
    %4070 = vmatpush2.msra.mxu0 0.0
    %4071 = vmatprep.subr.mxu0 0.0
    %4072 = vmatpush2.msra.mxu0 0.0
    %4073 = vmatprep.subr.mxu0 0.0
    %4074 = vmatpush2.msra.mxu0 0.0
    %4075 = vmatprep.subr.mxu0 0.0
    %4076 = vmatpush2.msra.mxu0 0.0
    %4077 = vmatprep.subr.mxu0 0.0
    %4078 = vmatpush2.msra.mxu0 0.0
    %4079 = vmatprep.subr.mxu0 0.0
    %4080 = vmatpush2.msra.mxu0 0.0
    %4081 = vmatprep.mubr.f32.mxu0 0.0
    %4082 = vmatmul.mubr.f32.gmra.mxu0 %v4012
    %v4083 = vpop.f32.mrf.mxu0
    %v4084 = vadd.f32 0.0, %v4083
    %v4085 = vpop.f32.mrf.mxu0
    %v4086 = vadd.f32 0.0, %v4085
    %4087 = vdwg.mxu0
    %4088 = vmatprep.subr.mxu0 %v2798
    %4089 = vmatpush1.msra.mxu0 %v2797
    %4090 = vmatprep.subr.mxu0 %v2794
    %4091 = vmatpush1.msra.mxu0 %v2793
    %4092 = vmatprep.subr.mxu0 %v2790
    %4093 = vmatpush1.msra.mxu0 %v2789
    %4094 = vmatprep.subr.mxu0 %v2786
    %4095 = vmatpush1.msra.mxu0 %v2785
    %4096 = vmatprep.subr.mxu0 %v2782
    %4097 = vmatpush1.msra.mxu0 %v2781
    %4098 = vmatprep.subr.mxu0 %v2778
    %4099 = vmatpush1.msra.mxu0 %v2777
    %4100 = vmatprep.subr.mxu0 %v2774
    %4101 = vmatpush1.msra.mxu0 %v2773
    %4102 = vmatprep.subr.mxu0 %v2770
    %4103 = vmatpush1.msra.mxu0 %v2769
    %4104 = vmatprep.subr.mxu0 %v2766
    %4105 = vmatpush1.msra.mxu0 %v2765
    %4106 = vmatprep.subr.mxu0 %v2762
    %4107 = vmatpush1.msra.mxu0 %v2761
    %4108 = vmatprep.subr.mxu0 %v2758
    %4109 = vmatpush1.msra.mxu0 %v2757
    %4110 = vmatprep.subr.mxu0 %v2754
    %4111 = vmatpush1.msra.mxu0 %v2753
    %4112 = vmatprep.subr.mxu0 %v2750
    %4113 = vmatpush1.msra.mxu0 %v2749
    %4114 = vmatprep.subr.mxu0 %v2746
    %4115 = vmatpush1.msra.mxu0 %v2745
    %4116 = vmatprep.subr.mxu0 %v2742
    %4117 = vmatpush1.msra.mxu0 %v2741
    %4118 = vmatprep.subr.mxu0 %v2738
    %4119 = vmatpush1.msra.mxu0 %v2737
    %4120 = vmatprep.subr.mxu0 0.0
    %4121 = vmatpush2.msra.mxu0 0.0
    %4122 = vmatprep.subr.mxu0 0.0
    %4123 = vmatpush2.msra.mxu0 0.0
    %4124 = vmatprep.subr.mxu0 0.0
    %4125 = vmatpush2.msra.mxu0 0.0
    %4126 = vmatprep.subr.mxu0 0.0
    %4127 = vmatpush2.msra.mxu0 0.0
    %4128 = vmatprep.subr.mxu0 0.0
    %4129 = vmatpush2.msra.mxu0 0.0
    %4130 = vmatprep.subr.mxu0 0.0
    %4131 = vmatpush2.msra.mxu0 0.0
    %4132 = vmatprep.subr.mxu0 0.0
    %4133 = vmatpush2.msra.mxu0 0.0
    %4134 = vmatprep.subr.mxu0 0.0
    %4135 = vmatpush2.msra.mxu0 0.0
    %4136 = vmatprep.subr.mxu0 0.0
    %4137 = vmatpush2.msra.mxu0 0.0
    %4138 = vmatprep.subr.mxu0 0.0
    %4139 = vmatpush2.msra.mxu0 0.0
    %4140 = vmatprep.subr.mxu0 0.0
    %4141 = vmatpush2.msra.mxu0 0.0
    %4142 = vmatprep.subr.mxu0 0.0
    %4143 = vmatpush2.msra.mxu0 0.0
    %4144 = vmatprep.subr.mxu0 0.0
    %4145 = vmatpush2.msra.mxu0 0.0
    %4146 = vmatprep.subr.mxu0 0.0
    %4147 = vmatpush2.msra.mxu0 0.0
    %4148 = vmatprep.subr.mxu0 0.0
    %4149 = vmatpush2.msra.mxu0 0.0
    %4150 = vmatprep.subr.mxu0 0.0
    %4151 = vmatpush2.msra.mxu0 0.0
    %4152 = vmatprep.mubr.f32.mxu0 0.0
    %4153 = vmatmul.mubr.f32.gmra.mxu0 %v4012
    %v4154 = vpop.f32.mrf.mxu0
    %v4155 = vadd.f32 0.0, %v4154
    %v4156 = vpop.f32.mrf.mxu0
    %v4157 = vadd.f32 0.0, %v4156
    %4158 = vdwg.mxu0
    %v4159 = vadd.f32 %v4013, %v4084
    %v4160 = vadd.f32 %v4014, %v4086
    %v4161 = vadd.f32 %v4015, %v4155
    %v4162 = vadd.f32 %v4016, %v4157
    %v4163 = vxor.u32 %v4159, 2147483648
    %v4164 = vmul.f32 %v4163, 1.442695
    %v4165 = vpow.pop %v4164
    %v4166 = vadd.f32 %v4165, 1.0
    %v4167 = vrcp.pop %v4166
    %v4168 = vmul.f32 1.0, %v4167
    %v4169 = vxor.u32 %v4160, 2147483648
    %v4170 = vmul.f32 %v4169, 1.442695
    %v4171 = vpow.pop %v4170
    %v4172 = vadd.f32 %v4171, 1.0
    %v4173 = vrcp.pop %v4172
    %v4174 = vmul.f32 1.0, %v4173
    %v4175 = vtanh.pop %v4161
    %v4176 = vxor.u32 %v4162, 2147483648
    %v4177 = vmul.f32 %v4176, 1.442695
    %v4178 = vpow.pop %v4177
    %v4179 = vadd.f32 %v4178, 1.0
    %v4180 = vrcp.pop %v4179
    %v4181 = vmul.f32 1.0, %v4180
    %v4182 = vmul.f32 %v4174, %v4010
    %v4183 = vmul.f32 %v4168, %v4175
    %v4184 = vadd.f32 %v4182, %v4183
    %v4185 = vtanh.pop %v4184
    %v4186 = vmul.f32 %v4181, %v4185
    %s4187 = scalar_lea.vmem [#allocation14], 8
    %4188 = vst [vmem:[%s4187] sm:$0xff] %v4186
    %s4189 = scalar_lea.vmem [#allocation16], 8
    %4190 = vst [vmem:[%s4189] sm:$0xff] %v4184
    %v4191 = vld [vmem:[#allocation12] sm:$0xff]
    %v4192 = vld [vmem:[#allocation12 + $0x8] sm:$0xff]
    %v4193 = vld [vmem:[#allocation12 + $0x10] sm:$0xff]
    %v4194 = vld [vmem:[#allocation12 + $0x18] sm:$0xff]
    %v4195 = vld [vmem:[#allocation12 + $0x20] sm:$0xff]
    %v4196 = vld [vmem:[#allocation12 + $0x28] sm:$0xff]
    %v4197 = vld [vmem:[#allocation12 + $0x30] sm:$0xff]
    %v4198 = vld [vmem:[#allocation12 + $0x38] sm:$0xff]
    %v4199 = vld [vmem:[#allocation12 + $0x40] sm:$0xff]
    %v4200 = vld [vmem:[#allocation12 + $0x48] sm:$0xff]
    %v4201 = vld [vmem:[#allocation12 + $0x50] sm:$0xff]
    %v4202 = vld [vmem:[#allocation12 + $0x58] sm:$0xff]
    %v4203 = vld [vmem:[#allocation12 + $0x60] sm:$0xff]
    %v4204 = vld [vmem:[#allocation12 + $0x68] sm:$0xff]
    %v4205 = vld [vmem:[#allocation12 + $0x70] sm:$0xff]
    %v4206 = vld [vmem:[#allocation12 + $0x78] sm:$0xff]
    %v4207 = vld [vmem:[%s5] sm:$0x1]
    %v4209 = vlaneseq
    %v4210 = vshrl.u32 %v4209, 7
    %v4211 = vsub.s32 0, %v4210
    %v4212 = vrot.slane %v4207, %v4211
    %4214 = vmatprep.subr.mxu0 0.0
    %4215 = vmatpush1.msra.mxu0 %v4206
    %4216 = vmatprep.subr.mxu0 0.0
    %4217 = vmatpush1.msra.mxu0 %v4205
    %4218 = vmatprep.subr.mxu0 0.0
    %4219 = vmatpush1.msra.mxu0 %v4204
    %4220 = vmatprep.subr.mxu0 0.0
    %4221 = vmatpush1.msra.mxu0 %v4203
    %4222 = vmatprep.subr.mxu0 0.0
    %4223 = vmatpush1.msra.mxu0 %v4202
    %4224 = vmatprep.subr.mxu0 0.0
    %4225 = vmatpush1.msra.mxu0 %v4201
    %4226 = vmatprep.subr.mxu0 0.0
    %4227 = vmatpush1.msra.mxu0 %v4200
    %4228 = vmatprep.subr.mxu0 0.0
    %4229 = vmatpush1.msra.mxu0 %v4199
    %4230 = vmatprep.subr.mxu0 0.0
    %4231 = vmatpush1.msra.mxu0 %v4198
    %4232 = vmatprep.subr.mxu0 0.0
    %4233 = vmatpush1.msra.mxu0 %v4197
    %4234 = vmatprep.subr.mxu0 0.0
    %4235 = vmatpush1.msra.mxu0 %v4196
    %4236 = vmatprep.subr.mxu0 0.0
    %4237 = vmatpush1.msra.mxu0 %v4195
    %4238 = vmatprep.subr.mxu0 0.0
    %4239 = vmatpush1.msra.mxu0 %v4194
    %4240 = vmatprep.subr.mxu0 0.0
    %4241 = vmatpush1.msra.mxu0 %v4193
    %4242 = vmatprep.subr.mxu0 0.0
    %4243 = vmatpush1.msra.mxu0 %v4192
    %4244 = vmatprep.subr.mxu0 0.0
    %4245 = vmatpush1.msra.mxu0 %v4191
    %4246 = vmatprep.subr.mxu0 0.0
    %4247 = vmatpush2.msra.mxu0 0.0
    %4248 = vmatprep.subr.mxu0 0.0
    %4249 = vmatpush2.msra.mxu0 0.0
    %4250 = vmatprep.subr.mxu0 0.0
    %4251 = vmatpush2.msra.mxu0 0.0
    %4252 = vmatprep.subr.mxu0 0.0
    %4253 = vmatpush2.msra.mxu0 0.0
    %4254 = vmatprep.subr.mxu0 0.0
    %4255 = vmatpush2.msra.mxu0 0.0
    %4256 = vmatprep.subr.mxu0 0.0
    %4257 = vmatpush2.msra.mxu0 0.0
    %4258 = vmatprep.subr.mxu0 0.0
    %4259 = vmatpush2.msra.mxu0 0.0
    %4260 = vmatprep.subr.mxu0 0.0
    %4261 = vmatpush2.msra.mxu0 0.0
    %4262 = vmatprep.subr.mxu0 0.0
    %4263 = vmatpush2.msra.mxu0 0.0
    %4264 = vmatprep.subr.mxu0 0.0
    %4265 = vmatpush2.msra.mxu0 0.0
    %4266 = vmatprep.subr.mxu0 0.0
    %4267 = vmatpush2.msra.mxu0 0.0
    %4268 = vmatprep.subr.mxu0 0.0
    %4269 = vmatpush2.msra.mxu0 0.0
    %4270 = vmatprep.subr.mxu0 0.0
    %4271 = vmatpush2.msra.mxu0 0.0
    %4272 = vmatprep.subr.mxu0 0.0
    %4273 = vmatpush2.msra.mxu0 0.0
    %4274 = vmatprep.subr.mxu0 0.0
    %4275 = vmatpush2.msra.mxu0 0.0
    %4276 = vmatprep.subr.mxu0 0.0
    %4277 = vmatpush2.msra.mxu0 0.0
    %4278 = vmatprep.mubr.f32.mxu0 0.0
    %4279 = vmatmul.mubr.f32.gmra.mxu0 %v4186
    %v4280 = vpop.f32.mrf.mxu0
    %v4281 = vadd.f32 %v4212, %v4280
    %v4282 = vpop.f32.mrf.mxu0
    %4283 = vdwg.mxu0
    %4284 = vst [vmem:[#allocation13] sm:$0xff] %v4281
    // Predicated region
    $region46: #{_fused_forward.1} parent=1 // pred_check
      _
    $region47: #{_fused_forward.1} parent=1 // pred_check_branch
      %4286 = sbr.rel (0) target = $region49
    $region48: #{_fused_forward.1} parent=1 // pred_region
      %s4288 = ssub.s32 128, 128
      %4289 = vsyncadd [#allocation6], %s4288
      %s4291 = sshll.u32 [#allocation13], 4
      %s4292 = int_to_ptr.vmem [resolvable:$true] %s4291
      %4294 = dma.vmem_to_hbm [thread:$0]  %s4292, 128, %s6, [#allocation6]
    $region49: #{_fused_forward.1} parent=1 // pred_fallthru
      _
    // Predicated region
    $region50: #{_fused_forward.1} parent=1 // pred_check
      _
    $region51: #{_fused_forward.1} parent=1 // pred_check_branch
      %4296 = sbr.rel (0) target = $region53
    $region52: #{_fused_forward.1} parent=1 // pred_region
      %s4298 = ssub.s32 256, 256
      %4299 = vsyncadd [#allocation15], %s4298
      %s4300 = sshll.u32 [#allocation14], 4
      %s4301 = int_to_ptr.vmem [resolvable:$true] %s4300
      %4306 = dma.vmem_to_hbm [thread:$0]  %s4301, 256, %s7, [#allocation15], 128, 128, 8
    $region53: #{_fused_forward.1} parent=1 // pred_fallthru
      _
    // Predicated region
    $region54: #{_fused_forward.1} parent=1 // pred_check
      _
    $region55: #{_fused_forward.1} parent=1 // pred_check_branch
      %4308 = sbr.rel (0) target = $region57
    $region56: #{_fused_forward.1} parent=1 // pred_region
      %s4310 = ssub.s32 256, 256
      %4311 = vsyncadd [#allocation15], %s4310
      %s4312 = sshll.u32 [#allocation16], 4
      %s4313 = int_to_ptr.vmem [resolvable:$true] %s4312
      %4318 = dma.vmem_to_hbm [thread:$0]  %s4313, 256, %s8, [#allocation15], 128, 128, 8
    $region57: #{_fused_forward.1} parent=1 // pred_fallthru
      _
    // Predicated region
    $region58: #{_fused_forward.1} parent=1 // pred_check
      _
    $region59: #{_fused_forward.1} parent=1 // pred_check_branch
      %4320 = sbr.rel (0) target = $region61
    $region60: #{_fused_forward.1} parent=1 // pred_region
      %4321 = dma.done [#allocation6], 128
    $region61: #{_fused_forward.1} parent=1 // pred_fallthru
      _
    // Predicated region
    $region62: #{_fused_forward.1} parent=1 // pred_check
      _
    $region63: #{_fused_forward.1} parent=1 // pred_check_branch
      %4323 = sbr.rel (0) target = $region65
    $region64: #{_fused_forward.1} parent=1 // pred_region
      %4324 = dma.done [#allocation15], 256
    $region65: #{_fused_forward.1} parent=1 // pred_fallthru
      _
    // Predicated region
    $region66: #{_fused_forward.1} parent=1 // pred_check
      _
    $region67: #{_fused_forward.1} parent=1 // pred_check_branch
      %4326 = sbr.rel (0) target = $region69
    $region68: #{_fused_forward.1} parent=1 // pred_region
      %4327 = dma.done [#allocation15], 256
    $region69: #{_fused_forward.1} parent=1 // pred_fallthru
      _
    %4328 = vsyncpa [#allocation5], 1
    %4329 = vsyncpa [#allocation8], 1
    %4330 = vsyncpa [#allocation11], 1
    %4331 = vsyncpa [#allocation6], 1
    %4332 = vsyncpa [#allocation15], 1

</llo_original>
